<compile_context>
chip_gen: v5e
topology: v5e:2x2
jax: 0.10.0
libtpu: 0.0.40
codegen_flags: <defaults>
</compile_context>

<pallas_src>
import functools

import jax
import jax.numpy as jnp
from jax.experimental import pallas as pl


def _generator_kernel(start_token, max_length,
                      # inputs (whole arrays resident in VMEM)
                      noise_ref, gumbel_ref, emb_ref,
                      w1_ref, b1_ref, w2_ref, b2_ref,
                      wih_ref, whh_ref, blstm_ref,
                      wo1_ref, bo1_ref, wo2_ref, bo2_ref,
                      # outputs (lane-dense, written once at the end)
                      x_out, lp_out, ent_out):
    B, L = noise_ref.shape
    V = emb_ref.shape[0]
    Vm1 = wo2_ref.shape[1]          # vocab_size - 1
    T = max_length

    # ---------------- FeedForward projection: noise -> (h0, c0) ----------------
    # Dropout layers are identity (inference semantics).
    z1 = jnp.dot(noise_ref[...], w1_ref[...],
                 preferred_element_type=jnp.float32) + b1_ref[...]
    z1 = jnp.maximum(z1, 0.0)                                       # ReLU
    z2 = jnp.dot(z1, w2_ref[...],
                 preferred_element_type=jnp.float32) + b2_ref[...]
    z2 = jnp.where(z2 > 0, z2, 0.1 * (jnp.exp(z2) - 1.0))           # ELU(alpha=0.1)
    h = z2[:, :L]
    c = z2[:, L:]

    # Start-token embedding, broadcast over the batch.
    emb = jnp.broadcast_to(emb_ref[pl.ds(start_token, 1), :], (B, L))

    # -------- hoisted loop-invariants (weights, biases, iotas) --------
    emb_tbl = emb_ref[...]                                          # (V, L)
    wih = wih_ref[...]
    whh = whh_ref[...]
    wo1 = wo1_ref[...]
    wo2 = wo2_ref[...]
    blstm_b = jnp.broadcast_to(blstm_ref[...], (B, 4 * L))          # fused bih+bhh
    bo1_b = jnp.broadcast_to(bo1_ref[...], (B, 2 * L))
    bo2_b = jnp.broadcast_to(bo2_ref[...], (B, Vm1))
    cols_v = jax.lax.broadcasted_iota(jnp.int32, (B, V), 1)
    cols_vm1 = jax.lax.broadcasted_iota(jnp.int32, (B, Vm1), 1)
    t_iota = jax.lax.broadcasted_iota(jnp.int32, (B, T), 1)

    # Lane-dense accumulators for the per-step outputs.
    x_acc = jnp.zeros((B, T), jnp.int32)
    lp_acc = jnp.zeros((B, T), jnp.float32)
    ent_acc = jnp.zeros((B, T), jnp.float32)

    # Fully unrolled static time loop; h/c/emb stay register-resident.
    for t in range(T):
        # ---------------- LSTMCell (PyTorch gate order: i, f, g, o) ------------
        gates = (jnp.dot(emb, wih, preferred_element_type=jnp.float32)
                 + jnp.dot(h, whh, preferred_element_type=jnp.float32)
                 + blstm_b)                                         # (B, 4L)
        i_g = jax.nn.sigmoid(gates[:, 0 * L:1 * L])
        f_g = jax.nn.sigmoid(gates[:, 1 * L:2 * L])
        g_g = jnp.tanh(gates[:, 2 * L:3 * L])
        o_g = jax.nn.sigmoid(gates[:, 3 * L:4 * L])
        c = f_g * c + i_g * g_g
        h = o_g * jnp.tanh(c)

        # ---------- output head: ReLU -> Linear -> ReLU -> Linear --------------
        # TODO(synk): nn.Dropout(0.1) layers treated as identity (eval mode).
        y = jnp.maximum(h, 0.0)
        y = jnp.dot(y, wo1, preferred_element_type=jnp.float32) + bo1_b
        y = jnp.maximum(y, 0.0)
        logits = jnp.dot(y, wo2, preferred_element_type=jnp.float32) + bo2_b   # (B, V-1)

        # ---------- softmax statistics (Categorical log_prob / entropy) --------
        m = jnp.max(logits, axis=-1, keepdims=True)
        ex = jnp.exp(logits - m)
        z = jnp.sum(ex, axis=-1, keepdims=True)
        logp_full = logits - (jnp.log(z) + m)                       # log-softmax
        p = ex / z
        entropy = -jnp.sum(p * logp_full, axis=-1, keepdims=True)   # (B, 1)

        # ---------- Gumbel-max categorical sampling ----------------------------
        scores = logits + gumbel_ref[t]                             # (B, V-1)
        smax = jnp.max(scores, axis=-1, keepdims=True)
        sample = jnp.min(jnp.where(scores >= smax, cols_vm1, Vm1),
                         axis=-1, keepdims=True).astype(jnp.int32)  # (B, 1) argmax

        # One one-hot reused for log-prob contraction and embedding gather.
        onehot_v = (cols_v == sample).astype(jnp.float32)           # (B, V)
        lp_sample = jnp.sum(logp_full * onehot_v[:, :Vm1],
                            axis=-1, keepdims=True)                 # (B, 1)

        # ---------- accumulate per-step outputs (lane-dense) -------------------
        sel = (t_iota == t)
        x_acc = jnp.where(sel, sample, x_acc)
        lp_acc = jnp.where(sel, lp_sample, lp_acc)
        ent_acc = jnp.where(sel, entropy, ent_acc)

        # ---------- embedding of the sampled token (one-hot matmul gather) -----
        emb = jnp.dot(onehot_v, emb_tbl, preferred_element_type=jnp.float32)

    # Single lane-dense store per output.
    x_out[...] = x_acc
    lp_out[...] = lp_acc
    ent_out[...] = ent_acc


def make_params(key, latent_dim, vocab_size):
    L, V = latent_dim, vocab_size
    ks = jax.random.split(key, 8)
    s = 0.1
    n = lambda k, shape: (jax.random.normal(k, shape, jnp.float32) * s)
    return dict(
        emb=n(ks[0], (V, L)),
        w1=n(ks[1], (L, 2 * L)),  b1=jnp.zeros((1, 2 * L), jnp.float32),
        w2=n(ks[2], (2 * L, 2 * L)), b2=jnp.zeros((1, 2 * L), jnp.float32),
        wih=n(ks[3], (L, 4 * L)), bih=jnp.zeros((1, 4 * L), jnp.float32),
        whh=n(ks[4], (L, 4 * L)), bhh=jnp.zeros((1, 4 * L), jnp.float32),
        wo1=n(ks[5], (L, 2 * L)), bo1=jnp.zeros((1, 2 * L), jnp.float32),
        wo2=n(ks[6], (2 * L, V - 1)), bo2=jnp.zeros((1, V - 1), jnp.float32),
    )


def generator_forward(noise, params, *, max_length, start_token, end_token, rng_key):
    B, L = noise.shape
    T = max_length
    V = params["emb"].shape[0]
    Vm1 = V - 1

    # Gumbel noise generated on the host (deterministic under rng_key); the
    # in-kernel hardware PRNG has no CPU/interpret lowering.
    gumbel = jax.random.gumbel(rng_key, (T, B, Vm1), jnp.float32)
    # Fuse the two LSTM biases once, outside the kernel.
    b_lstm = params["bih"] + params["bhh"]

    kernel = functools.partial(_generator_kernel, start_token, T)
    x, logp, ent = pl.pallas_call(
        kernel,
        out_shape=(jax.ShapeDtypeStruct((B, T), jnp.int32),
                   jax.ShapeDtypeStruct((B, T), jnp.float32),
                   jax.ShapeDtypeStruct((B, T), jnp.float32)),
    )(noise, gumbel, params["emb"],
      params["w1"], params["b1"], params["w2"], params["b2"],
      params["wih"], params["whh"], b_lstm,
      params["wo1"], params["bo1"], params["wo2"], params["bo2"])

    # -------- post-processing (plain JAX glue, mirrors the PyTorch epilogue) --------
    is_end = (x == end_token).astype(jnp.float32)
    end_pos = jnp.argmax(is_end, axis=1)            # first end-token position, 0 if none
    seq_len = end_pos + 1
    seq_len = jnp.where(seq_len == 1, T, seq_len)   # masked_fill_(seq_lengths == 1, max_length)
    pos = jnp.arange(T)[None, :]
    mask = pos < seq_len[:, None]
    # TODO(synk): PyTorch returns ragged per-sequence tensors (pad_sequence to max(seq_len));
    # JAX needs static shapes, so we return mask-padded [B, T] arrays plus seq_lengths.
    x_padded = jnp.where(mask, x + 1, 0)            # pad with -1 then +1  ->  0
    logp_padded = jnp.where(mask, logp, 0.0)
    ent_mean = jnp.sum(jnp.where(mask, ent, 0.0), axis=1) / seq_len.astype(jnp.float32)

    return {"x": x_padded,
            "log_probabilities": logp_padded,
            "entropies": ent_mean,
            "seq_lengths": seq_len}


if __name__ == "__main__":
    latent_dim = 32
    vocab_size = 16
    start_token = 1
    end_token = 2
    batch = 4
    max_length = 8

    key = jax.random.PRNGKey(0)
    pkey, nkey, skey = jax.random.split(key, 3)
    params = make_params(pkey, latent_dim, vocab_size)
    noise = jax.random.normal(nkey, (batch, latent_dim), jnp.float32)

    out = generator_forward(noise, params,
                            max_length=max_length,
                            start_token=start_token,
                            end_token=end_token,
                            rng_key=skey)
    out = jax.tree_util.tree_map(jax.block_until_ready, out)

    assert out["x"].shape == (batch, max_length)
    assert out["x"].dtype == jnp.int32
    assert out["log_probabilities"].shape == (batch, max_length)
    assert out["entropies"].shape == (batch,)
    assert out["seq_lengths"].shape == (batch,)
    assert bool(jnp.all(out["x"] >= 0)) and bool(jnp.all(out["x"] <= vocab_size - 1))
    assert bool(jnp.all(jnp.isfinite(out["log_probabilities"])))
    assert bool(jnp.all(out["entropies"] >= 0.0))

    print("KERNEL_OK")
</pallas_src>

<mosaic_0001>
module attributes {stable_mosaic.version = 11 : i64} {
  func.func @_generator_kernel(%arg0: memref<4x32xf32, #tpu.memory_space<vmem>>, %arg1: memref<8x4x15xf32, #tpu.memory_space<vmem>>, %arg2: memref<16x32xf32, #tpu.memory_space<vmem>>, %arg3: memref<32x64xf32, #tpu.memory_space<vmem>>, %arg4: memref<1x64xf32, #tpu.memory_space<vmem>>, %arg5: memref<64x64xf32, #tpu.memory_space<vmem>>, %arg6: memref<1x64xf32, #tpu.memory_space<vmem>>, %arg7: memref<32x128xf32, #tpu.memory_space<vmem>>, %arg8: memref<32x128xf32, #tpu.memory_space<vmem>>, %arg9: memref<1x128xf32, #tpu.memory_space<vmem>>, %arg10: memref<32x64xf32, #tpu.memory_space<vmem>>, %arg11: memref<1x64xf32, #tpu.memory_space<vmem>>, %arg12: memref<64x15xf32, #tpu.memory_space<vmem>>, %arg13: memref<1x15xf32, #tpu.memory_space<vmem>>, %arg14: memref<4x8xi32, #tpu.memory_space<vmem>>, %arg15: memref<4x8xf32, #tpu.memory_space<vmem>>, %arg16: memref<4x8xf32, #tpu.memory_space<vmem>>) attributes {dimension_semantics = [], scalar_prefetch = 0 : i64, scratch_operands = 0 : i64, tpu.core_type = #tpu.core_type<tc>} {
    %c0 = arith.constant 0 : index
    %c0_0 = arith.constant 0 : index
    %0 = vector.load %arg0[%c0, %c0_0] : memref<4x32xf32, #tpu.memory_space<vmem>>, vector<4x32xf32>
    %c0_1 = arith.constant 0 : index
    %c0_2 = arith.constant 0 : index
    %1 = vector.load %arg3[%c0_1, %c0_2] : memref<32x64xf32, #tpu.memory_space<vmem>>, vector<32x64xf32>
    %cst = arith.constant dense<0.000000e+00> : vector<4x64xf32>
    %2 = tpu.matmul %0, %1, %cst {dimension_numbers = #tpu.dot_dimension_numbers<[1], [0], [0], [1], [0, 0, 1, 1], [], []>} : vector<4x32xf32>, vector<32x64xf32>, vector<4x64xf32> -> vector<4x64xf32>
    %c0_3 = arith.constant 0 : index
    %c0_4 = arith.constant 0 : index
    %3 = vector.load %arg4[%c0_3, %c0_4] : memref<1x64xf32, #tpu.memory_space<vmem>>, vector<1x64xf32>
    %4 = vector.broadcast %3 : vector<1x64xf32> to vector<4x64xf32>
    %5 = arith.addf %2, %4 : vector<4x64xf32>
    %cst_5 = arith.constant 0.000000e+00 : f32
    %6 = vector.broadcast %cst_5 : f32 to vector<4x64xf32>
    %7 = arith.maximumf %5, %6 : vector<4x64xf32>
    %c0_6 = arith.constant 0 : index
    %c0_7 = arith.constant 0 : index
    %8 = vector.load %arg5[%c0_6, %c0_7] : memref<64x64xf32, #tpu.memory_space<vmem>>, vector<64x64xf32>
    %cst_8 = arith.constant dense<0.000000e+00> : vector<4x64xf32>
    %9 = tpu.matmul %7, %8, %cst_8 {dimension_numbers = #tpu.dot_dimension_numbers<[1], [0], [0], [1], [0, 0, 1, 1], [], []>} : vector<4x64xf32>, vector<64x64xf32>, vector<4x64xf32> -> vector<4x64xf32>
    %c0_9 = arith.constant 0 : index
    %c0_10 = arith.constant 0 : index
    %10 = vector.load %arg6[%c0_9, %c0_10] : memref<1x64xf32, #tpu.memory_space<vmem>>, vector<1x64xf32>
    %11 = vector.broadcast %10 : vector<1x64xf32> to vector<4x64xf32>
    %12 = arith.addf %9, %11 : vector<4x64xf32>
    %cst_11 = arith.constant 0.000000e+00 : f32
    %13 = vector.broadcast %cst_11 : f32 to vector<4x64xf32>
    %14 = arith.cmpf ogt, %12, %13 : vector<4x64xf32>
    %15 = math.exp %12 : vector<4x64xf32>
    %cst_12 = arith.constant 1.000000e+00 : f32
    %16 = vector.broadcast %cst_12 : f32 to vector<4x64xf32>
    %17 = arith.subf %15, %16 : vector<4x64xf32>
    %cst_13 = arith.constant 1.000000e-01 : f32
    %18 = vector.broadcast %cst_13 : f32 to vector<4x64xf32>
    %19 = arith.mulf %18, %17 : vector<4x64xf32>
    %20 = arith.select %14, %12, %19 : vector<4x64xi1>, vector<4x64xf32>
    %21 = vector.extract_strided_slice %20 {offsets = [0, 0], sizes = [4, 32], strides = [1, 1]} : vector<4x64xf32> to vector<4x32xf32>
    %22 = vector.extract_strided_slice %20 {offsets = [0, 32], sizes = [4, 32], strides = [1, 1]} : vector<4x64xf32> to vector<4x32xf32>
    %c1 = arith.constant 1 : index
    %c0_14 = arith.constant 0 : index
    %23 = vector.load %arg2[%c1, %c0_14] : memref<16x32xf32, #tpu.memory_space<vmem>>, vector<1x32xf32>
    %24 = vector.shape_cast %23 : vector<1x32xf32> to vector<1x32xf32>
    %25 = vector.broadcast %24 : vector<1x32xf32> to vector<4x32xf32>
    %c0_15 = arith.constant 0 : index
    %c0_16 = arith.constant 0 : index
    %26 = vector.load %arg2[%c0_15, %c0_16] : memref<16x32xf32, #tpu.memory_space<vmem>>, vector<16x32xf32>
    %c0_17 = arith.constant 0 : index
    %c0_18 = arith.constant 0 : index
    %27 = vector.load %arg7[%c0_17, %c0_18] : memref<32x128xf32, #tpu.memory_space<vmem>>, vector<32x128xf32>
    %c0_19 = arith.constant 0 : index
    %c0_20 = arith.constant 0 : index
    %28 = vector.load %arg8[%c0_19, %c0_20] : memref<32x128xf32, #tpu.memory_space<vmem>>, vector<32x128xf32>
    %c0_21 = arith.constant 0 : index
    %c0_22 = arith.constant 0 : index
    %29 = vector.load %arg10[%c0_21, %c0_22] : memref<32x64xf32, #tpu.memory_space<vmem>>, vector<32x64xf32>
    %c0_23 = arith.constant 0 : index
    %c0_24 = arith.constant 0 : index
    %30 = vector.load %arg12[%c0_23, %c0_24] : memref<64x15xf32, #tpu.memory_space<vmem>>, vector<64x15xf32>
    %c0_25 = arith.constant 0 : index
    %c0_26 = arith.constant 0 : index
    %31 = vector.load %arg9[%c0_25, %c0_26] : memref<1x128xf32, #tpu.memory_space<vmem>>, vector<1x128xf32>
    %32 = vector.shape_cast %31 : vector<1x128xf32> to vector<1x128xf32>
    %33 = vector.broadcast %32 : vector<1x128xf32> to vector<4x128xf32>
    %c0_27 = arith.constant 0 : index
    %c0_28 = arith.constant 0 : index
    %34 = vector.load %arg11[%c0_27, %c0_28] : memref<1x64xf32, #tpu.memory_space<vmem>>, vector<1x64xf32>
    %35 = vector.shape_cast %34 : vector<1x64xf32> to vector<1x64xf32>
    %36 = vector.broadcast %35 : vector<1x64xf32> to vector<4x64xf32>
    %c0_29 = arith.constant 0 : index
    %c0_30 = arith.constant 0 : index
    %37 = vector.load %arg13[%c0_29, %c0_30] : memref<1x15xf32, #tpu.memory_space<vmem>>, vector<1x15xf32>
    %38 = vector.shape_cast %37 : vector<1x15xf32> to vector<1x15xf32>
    %39 = vector.broadcast %38 : vector<1x15xf32> to vector<4x15xf32>
    %40 = tpu.iota {dimensions = array<i32: 1>} : vector<4x16xi32>
    %41 = tpu.iota {dimensions = array<i32: 1>} : vector<4x15xi32>
    %42 = tpu.iota {dimensions = array<i32: 1>} : vector<4x8xi32>
    %c0_i32 = arith.constant 0 : i32
    %43 = vector.broadcast %c0_i32 : i32 to vector<4x8xi32>
    %cst_31 = arith.constant 0.000000e+00 : f32
    %44 = vector.broadcast %cst_31 : f32 to vector<4x8xf32>
    %cst_32 = arith.constant 0.000000e+00 : f32
    %45 = vector.broadcast %cst_32 : f32 to vector<4x8xf32>
    %cst_33 = arith.constant dense<0.000000e+00> : vector<4x128xf32>
    %46 = tpu.matmul %25, %27, %cst_33 {dimension_numbers = #tpu.dot_dimension_numbers<[1], [0], [0], [1], [0, 0, 1, 1], [], []>} : vector<4x32xf32>, vector<32x128xf32>, vector<4x128xf32> -> vector<4x128xf32>
    %cst_34 = arith.constant dense<0.000000e+00> : vector<4x128xf32>
    %47 = tpu.matmul %21, %28, %cst_34 {dimension_numbers = #tpu.dot_dimension_numbers<[1], [0], [0], [1], [0, 0, 1, 1], [], []>} : vector<4x32xf32>, vector<32x128xf32>, vector<4x128xf32> -> vector<4x128xf32>
    %48 = arith.addf %46, %47 : vector<4x128xf32>
    %49 = arith.addf %48, %33 : vector<4x128xf32>
    %50 = vector.extract_strided_slice %49 {offsets = [0, 0], sizes = [4, 32], strides = [1, 1]} : vector<4x128xf32> to vector<4x32xf32>
    %51 = arith.negf %50 : vector<4x32xf32>
    %52 = math.exp %51 : vector<4x32xf32>
    %cst_35 = arith.constant 1.000000e+00 : f32
    %53 = vector.broadcast %cst_35 : f32 to vector<4x32xf32>
    %54 = arith.addf %53, %52 : vector<4x32xf32>
    %55 = arith.divf %53, %54 : vector<4x32xf32>
    %56 = vector.extract_strided_slice %49 {offsets = [0, 32], sizes = [4, 32], strides = [1, 1]} : vector<4x128xf32> to vector<4x32xf32>
    %57 = arith.negf %56 : vector<4x32xf32>
    %58 = math.exp %57 : vector<4x32xf32>
    %cst_36 = arith.constant 1.000000e+00 : f32
    %59 = vector.broadcast %cst_36 : f32 to vector<4x32xf32>
    %60 = arith.addf %59, %58 : vector<4x32xf32>
    %61 = arith.divf %59, %60 : vector<4x32xf32>
    %62 = vector.extract_strided_slice %49 {offsets = [0, 64], sizes = [4, 32], strides = [1, 1]} : vector<4x128xf32> to vector<4x32xf32>
    %63 = math.tanh %62 : vector<4x32xf32>
    %64 = vector.extract_strided_slice %49 {offsets = [0, 96], sizes = [4, 32], strides = [1, 1]} : vector<4x128xf32> to vector<4x32xf32>
    %65 = arith.negf %64 : vector<4x32xf32>
    %66 = math.exp %65 : vector<4x32xf32>
    %cst_37 = arith.constant 1.000000e+00 : f32
    %67 = vector.broadcast %cst_37 : f32 to vector<4x32xf32>
    %68 = arith.addf %67, %66 : vector<4x32xf32>
    %69 = arith.divf %67, %68 : vector<4x32xf32>
    %70 = arith.mulf %61, %22 : vector<4x32xf32>
    %71 = arith.mulf %55, %63 : vector<4x32xf32>
    %72 = arith.addf %70, %71 : vector<4x32xf32>
    %73 = math.tanh %72 : vector<4x32xf32>
    %74 = arith.mulf %69, %73 : vector<4x32xf32>
    %cst_38 = arith.constant 0.000000e+00 : f32
    %75 = vector.broadcast %cst_38 : f32 to vector<4x32xf32>
    %76 = arith.maximumf %74, %75 : vector<4x32xf32>
    %cst_39 = arith.constant dense<0.000000e+00> : vector<4x64xf32>
    %77 = tpu.matmul %76, %29, %cst_39 {dimension_numbers = #tpu.dot_dimension_numbers<[1], [0], [0], [1], [0, 0, 1, 1], [], []>} : vector<4x32xf32>, vector<32x64xf32>, vector<4x64xf32> -> vector<4x64xf32>
    %78 = arith.addf %77, %36 : vector<4x64xf32>
    %cst_40 = arith.constant 0.000000e+00 : f32
    %79 = vector.broadcast %cst_40 : f32 to vector<4x64xf32>
    %80 = arith.maximumf %78, %79 : vector<4x64xf32>
    %cst_41 = arith.constant dense<0.000000e+00> : vector<4x15xf32>
    %81 = tpu.matmul %80, %30, %cst_41 {dimension_numbers = #tpu.dot_dimension_numbers<[1], [0], [0], [1], [0, 0, 1, 1], [], []>} : vector<4x64xf32>, vector<64x15xf32>, vector<4x15xf32> -> vector<4x15xf32>
    %82 = arith.addf %81, %39 : vector<4x15xf32>
    %cst_42 = arith.constant dense<0xFF800000> : vector<4xf32>
    %83 = vector.multi_reduction <maximumf>, %82, %cst_42 [1] : vector<4x15xf32> to vector<4xf32>
    %84 = vector.shape_cast %83 : vector<4xf32> to vector<4x1xf32>
    %85 = vector.broadcast %84 : vector<4x1xf32> to vector<4x15xf32>
    %86 = arith.subf %82, %85 : vector<4x15xf32>
    %87 = math.exp %86 : vector<4x15xf32>
    %cst_43 = arith.constant dense<0.000000e+00> : vector<4xf32>
    %88 = vector.multi_reduction <add>, %87, %cst_43 [1] : vector<4x15xf32> to vector<4xf32>
    %89 = vector.shape_cast %88 : vector<4xf32> to vector<4x1xf32>
    %90 = math.log %89 : vector<4x1xf32>
    %91 = arith.addf %90, %84 : vector<4x1xf32>
    %92 = vector.broadcast %91 : vector<4x1xf32> to vector<4x15xf32>
    %93 = arith.subf %82, %92 : vector<4x15xf32>
    %94 = vector.broadcast %89 : vector<4x1xf32> to vector<4x15xf32>
    %95 = arith.divf %87, %94 : vector<4x15xf32>
    %96 = arith.mulf %95, %93 : vector<4x15xf32>
    %cst_44 = arith.constant dense<0.000000e+00> : vector<4xf32>
    %97 = vector.multi_reduction <add>, %96, %cst_44 [1] : vector<4x15xf32> to vector<4xf32>
    %98 = vector.shape_cast %97 : vector<4xf32> to vector<4x1xf32>
    %cst_45 = arith.constant 0.000000e+00 : f32
    %99 = vector.broadcast %cst_45 : f32 to vector<4x1xf32>
    %100 = arith.subf %99, %98 : vector<4x1xf32>
    %c0_46 = arith.constant 0 : index
    %c0_47 = arith.constant 0 : index
    %c0_48 = arith.constant 0 : index
    %101 = vector.load %arg1[%c0_46, %c0_47, %c0_48] : memref<8x4x15xf32, #tpu.memory_space<vmem>>, vector<1x4x15xf32>
    %102 = vector.shape_cast %101 : vector<1x4x15xf32> to vector<4x15xf32>
    %103 = arith.addf %82, %102 : vector<4x15xf32>
    %cst_49 = arith.constant dense<0xFF800000> : vector<4xf32>
    %104 = vector.multi_reduction <maximumf>, %103, %cst_49 [1] : vector<4x15xf32> to vector<4xf32>
    %105 = vector.shape_cast %104 : vector<4xf32> to vector<4x1xf32>
    %106 = vector.broadcast %105 : vector<4x1xf32> to vector<4x15xf32>
    %107 = arith.cmpf oge, %103, %106 : vector<4x15xf32>
    %c15_i32 = arith.constant 15 : i32
    %108 = vector.broadcast %c15_i32 : i32 to vector<4x15xi32>
    %109 = arith.select %107, %41, %108 : vector<4x15xi1>, vector<4x15xi32>
    %cst_50 = arith.constant dense<2147483647> : vector<4xi32>
    %110 = vector.multi_reduction <minsi>, %109, %cst_50 [1] : vector<4x15xi32> to vector<4xi32>
    %111 = vector.shape_cast %110 : vector<4xi32> to vector<4x1xi32>
    %112 = vector.broadcast %111 : vector<4x1xi32> to vector<4x16xi32>
    %113 = arith.cmpi eq, %40, %112 : vector<4x16xi32>
    %114 = arith.extui %113 : vector<4x16xi1> to vector<4x16xi32>
    %115 = arith.sitofp %114 : vector<4x16xi32> to vector<4x16xf32>
    %116 = vector.extract_strided_slice %115 {offsets = [0, 0], sizes = [4, 15], strides = [1, 1]} : vector<4x16xf32> to vector<4x15xf32>
    %117 = arith.mulf %93, %116 : vector<4x15xf32>
    %cst_51 = arith.constant dense<0.000000e+00> : vector<4xf32>
    %118 = vector.multi_reduction <add>, %117, %cst_51 [1] : vector<4x15xf32> to vector<4xf32>
    %119 = vector.shape_cast %118 : vector<4xf32> to vector<4x1xf32>
    %c0_i32_52 = arith.constant 0 : i32
    %120 = vector.broadcast %c0_i32_52 : i32 to vector<4x8xi32>
    %121 = arith.cmpi eq, %42, %120 : vector<4x8xi32>
    %122 = vector.shape_cast %111 : vector<4x1xi32> to vector<4x1xi32>
    %123 = vector.broadcast %122 : vector<4x1xi32> to vector<4x8xi32>
    %124 = arith.select %121, %123, %43 : vector<4x8xi1>, vector<4x8xi32>
    %125 = vector.shape_cast %119 : vector<4x1xf32> to vector<4x1xf32>
    %126 = vector.broadcast %125 : vector<4x1xf32> to vector<4x8xf32>
    %127 = arith.select %121, %126, %44 : vector<4x8xi1>, vector<4x8xf32>
    %128 = vector.shape_cast %100 : vector<4x1xf32> to vector<4x1xf32>
    %129 = vector.broadcast %128 : vector<4x1xf32> to vector<4x8xf32>
    %130 = arith.select %121, %129, %45 : vector<4x8xi1>, vector<4x8xf32>
    %cst_53 = arith.constant dense<0.000000e+00> : vector<4x32xf32>
    %131 = tpu.matmul %115, %26, %cst_53 {dimension_numbers = #tpu.dot_dimension_numbers<[1], [0], [0], [1], [0, 0, 1, 1], [], []>} : vector<4x16xf32>, vector<16x32xf32>, vector<4x32xf32> -> vector<4x32xf32>
    %cst_54 = arith.constant dense<0.000000e+00> : vector<4x128xf32>
    %132 = tpu.matmul %131, %27, %cst_54 {dimension_numbers = #tpu.dot_dimension_numbers<[1], [0], [0], [1], [0, 0, 1, 1], [], []>} : vector<4x32xf32>, vector<32x128xf32>, vector<4x128xf32> -> vector<4x128xf32>
    %cst_55 = arith.constant dense<0.000000e+00> : vector<4x128xf32>
    %133 = tpu.matmul %74, %28, %cst_55 {dimension_numbers = #tpu.dot_dimension_numbers<[1], [0], [0], [1], [0, 0, 1, 1], [], []>} : vector<4x32xf32>, vector<32x128xf32>, vector<4x128xf32> -> vector<4x128xf32>
    %134 = arith.addf %132, %133 : vector<4x128xf32>
    %135 = arith.addf %134, %33 : vector<4x128xf32>
    %136 = vector.extract_strided_slice %135 {offsets = [0, 0], sizes = [4, 32], strides = [1, 1]} : vector<4x128xf32> to vector<4x32xf32>
    %137 = arith.negf %136 : vector<4x32xf32>
    %138 = math.exp %137 : vector<4x32xf32>
    %cst_56 = arith.constant 1.000000e+00 : f32
    %139 = vector.broadcast %cst_56 : f32 to vector<4x32xf32>
    %140 = arith.addf %139, %138 : vector<4x32xf32>
    %141 = arith.divf %139, %140 : vector<4x32xf32>
    %142 = vector.extract_strided_slice %135 {offsets = [0, 32], sizes = [4, 32], strides = [1, 1]} : vector<4x128xf32> to vector<4x32xf32>
    %143 = arith.negf %142 : vector<4x32xf32>
    %144 = math.exp %143 : vector<4x32xf32>
    %cst_57 = arith.constant 1.000000e+00 : f32
    %145 = vector.broadcast %cst_57 : f32 to vector<4x32xf32>
    %146 = arith.addf %145, %144 : vector<4x32xf32>
    %147 = arith.divf %145, %146 : vector<4x32xf32>
    %148 = vector.extract_strided_slice %135 {offsets = [0, 64], sizes = [4, 32], strides = [1, 1]} : vector<4x128xf32> to vector<4x32xf32>
    %149 = math.tanh %148 : vector<4x32xf32>
    %150 = vector.extract_strided_slice %135 {offsets = [0, 96], sizes = [4, 32], strides = [1, 1]} : vector<4x128xf32> to vector<4x32xf32>
    %151 = arith.negf %150 : vector<4x32xf32>
    %152 = math.exp %151 : vector<4x32xf32>
    %cst_58 = arith.constant 1.000000e+00 : f32
    %153 = vector.broadcast %cst_58 : f32 to vector<4x32xf32>
    %154 = arith.addf %153, %152 : vector<4x32xf32>
    %155 = arith.divf %153, %154 : vector<4x32xf32>
    %156 = arith.mulf %147, %72 : vector<4x32xf32>
    %157 = arith.mulf %141, %149 : vector<4x32xf32>
    %158 = arith.addf %156, %157 : vector<4x32xf32>
    %159 = math.tanh %158 : vector<4x32xf32>
    %160 = arith.mulf %155, %159 : vector<4x32xf32>
    %cst_59 = arith.constant 0.000000e+00 : f32
    %161 = vector.broadcast %cst_59 : f32 to vector<4x32xf32>
    %162 = arith.maximumf %160, %161 : vector<4x32xf32>
    %cst_60 = arith.constant dense<0.000000e+00> : vector<4x64xf32>
    %163 = tpu.matmul %162, %29, %cst_60 {dimension_numbers = #tpu.dot_dimension_numbers<[1], [0], [0], [1], [0, 0, 1, 1], [], []>} : vector<4x32xf32>, vector<32x64xf32>, vector<4x64xf32> -> vector<4x64xf32>
    %164 = arith.addf %163, %36 : vector<4x64xf32>
    %cst_61 = arith.constant 0.000000e+00 : f32
    %165 = vector.broadcast %cst_61 : f32 to vector<4x64xf32>
    %166 = arith.maximumf %164, %165 : vector<4x64xf32>
    %cst_62 = arith.constant dense<0.000000e+00> : vector<4x15xf32>
    %167 = tpu.matmul %166, %30, %cst_62 {dimension_numbers = #tpu.dot_dimension_numbers<[1], [0], [0], [1], [0, 0, 1, 1], [], []>} : vector<4x64xf32>, vector<64x15xf32>, vector<4x15xf32> -> vector<4x15xf32>
    %168 = arith.addf %167, %39 : vector<4x15xf32>
    %cst_63 = arith.constant dense<0xFF800000> : vector<4xf32>
    %169 = vector.multi_reduction <maximumf>, %168, %cst_63 [1] : vector<4x15xf32> to vector<4xf32>
    %170 = vector.shape_cast %169 : vector<4xf32> to vector<4x1xf32>
    %171 = vector.broadcast %170 : vector<4x1xf32> to vector<4x15xf32>
    %172 = arith.subf %168, %171 : vector<4x15xf32>
    %173 = math.exp %172 : vector<4x15xf32>
    %cst_64 = arith.constant dense<0.000000e+00> : vector<4xf32>
    %174 = vector.multi_reduction <add>, %173, %cst_64 [1] : vector<4x15xf32> to vector<4xf32>
    %175 = vector.shape_cast %174 : vector<4xf32> to vector<4x1xf32>
    %176 = math.log %175 : vector<4x1xf32>
    %177 = arith.addf %176, %170 : vector<4x1xf32>
    %178 = vector.broadcast %177 : vector<4x1xf32> to vector<4x15xf32>
    %179 = arith.subf %168, %178 : vector<4x15xf32>
    %180 = vector.broadcast %175 : vector<4x1xf32> to vector<4x15xf32>
    %181 = arith.divf %173, %180 : vector<4x15xf32>
    %182 = arith.mulf %181, %179 : vector<4x15xf32>
    %cst_65 = arith.constant dense<0.000000e+00> : vector<4xf32>
    %183 = vector.multi_reduction <add>, %182, %cst_65 [1] : vector<4x15xf32> to vector<4xf32>
    %184 = vector.shape_cast %183 : vector<4xf32> to vector<4x1xf32>
    %cst_66 = arith.constant 0.000000e+00 : f32
    %185 = vector.broadcast %cst_66 : f32 to vector<4x1xf32>
    %186 = arith.subf %185, %184 : vector<4x1xf32>
    %c1_67 = arith.constant 1 : index
    %c0_68 = arith.constant 0 : index
    %c0_69 = arith.constant 0 : index
    %187 = vector.load %arg1[%c1_67, %c0_68, %c0_69] : memref<8x4x15xf32, #tpu.memory_space<vmem>>, vector<1x4x15xf32>
    %188 = vector.shape_cast %187 : vector<1x4x15xf32> to vector<4x15xf32>
    %189 = arith.addf %168, %188 : vector<4x15xf32>
    %cst_70 = arith.constant dense<0xFF800000> : vector<4xf32>
    %190 = vector.multi_reduction <maximumf>, %189, %cst_70 [1] : vector<4x15xf32> to vector<4xf32>
    %191 = vector.shape_cast %190 : vector<4xf32> to vector<4x1xf32>
    %192 = vector.broadcast %191 : vector<4x1xf32> to vector<4x15xf32>
    %193 = arith.cmpf oge, %189, %192 : vector<4x15xf32>
    %c15_i32_71 = arith.constant 15 : i32
    %194 = vector.broadcast %c15_i32_71 : i32 to vector<4x15xi32>
    %195 = arith.select %193, %41, %194 : vector<4x15xi1>, vector<4x15xi32>
    %cst_72 = arith.constant dense<2147483647> : vector<4xi32>
    %196 = vector.multi_reduction <minsi>, %195, %cst_72 [1] : vector<4x15xi32> to vector<4xi32>
    %197 = vector.shape_cast %196 : vector<4xi32> to vector<4x1xi32>
    %198 = vector.broadcast %197 : vector<4x1xi32> to vector<4x16xi32>
    %199 = arith.cmpi eq, %40, %198 : vector<4x16xi32>
    %200 = arith.extui %199 : vector<4x16xi1> to vector<4x16xi32>
    %201 = arith.sitofp %200 : vector<4x16xi32> to vector<4x16xf32>
    %202 = vector.extract_strided_slice %201 {offsets = [0, 0], sizes = [4, 15], strides = [1, 1]} : vector<4x16xf32> to vector<4x15xf32>
    %203 = arith.mulf %179, %202 : vector<4x15xf32>
    %cst_73 = arith.constant dense<0.000000e+00> : vector<4xf32>
    %204 = vector.multi_reduction <add>, %203, %cst_73 [1] : vector<4x15xf32> to vector<4xf32>
    %205 = vector.shape_cast %204 : vector<4xf32> to vector<4x1xf32>
    %c1_i32 = arith.constant 1 : i32
    %206 = vector.broadcast %c1_i32 : i32 to vector<4x8xi32>
    %207 = arith.cmpi eq, %42, %206 : vector<4x8xi32>
    %208 = vector.shape_cast %197 : vector<4x1xi32> to vector<4x1xi32>
    %209 = vector.broadcast %208 : vector<4x1xi32> to vector<4x8xi32>
    %210 = arith.select %207, %209, %124 : vector<4x8xi1>, vector<4x8xi32>
    %211 = vector.shape_cast %205 : vector<4x1xf32> to vector<4x1xf32>
    %212 = vector.broadcast %211 : vector<4x1xf32> to vector<4x8xf32>
    %213 = arith.select %207, %212, %127 : vector<4x8xi1>, vector<4x8xf32>
    %214 = vector.shape_cast %186 : vector<4x1xf32> to vector<4x1xf32>
    %215 = vector.broadcast %214 : vector<4x1xf32> to vector<4x8xf32>
    %216 = arith.select %207, %215, %130 : vector<4x8xi1>, vector<4x8xf32>
    %cst_74 = arith.constant dense<0.000000e+00> : vector<4x32xf32>
    %217 = tpu.matmul %201, %26, %cst_74 {dimension_numbers = #tpu.dot_dimension_numbers<[1], [0], [0], [1], [0, 0, 1, 1], [], []>} : vector<4x16xf32>, vector<16x32xf32>, vector<4x32xf32> -> vector<4x32xf32>
    %cst_75 = arith.constant dense<0.000000e+00> : vector<4x128xf32>
    %218 = tpu.matmul %217, %27, %cst_75 {dimension_numbers = #tpu.dot_dimension_numbers<[1], [0], [0], [1], [0, 0, 1, 1], [], []>} : vector<4x32xf32>, vector<32x128xf32>, vector<4x128xf32> -> vector<4x128xf32>
    %cst_76 = arith.constant dense<0.000000e+00> : vector<4x128xf32>
    %219 = tpu.matmul %160, %28, %cst_76 {dimension_numbers = #tpu.dot_dimension_numbers<[1], [0], [0], [1], [0, 0, 1, 1], [], []>} : vector<4x32xf32>, vector<32x128xf32>, vector<4x128xf32> -> vector<4x128xf32>
    %220 = arith.addf %218, %219 : vector<4x128xf32>
    %221 = arith.addf %220, %33 : vector<4x128xf32>
    %222 = vector.extract_strided_slice %221 {offsets = [0, 0], sizes = [4, 32], strides = [1, 1]} : vector<4x128xf32> to vector<4x32xf32>
    %223 = arith.negf %222 : vector<4x32xf32>
    %224 = math.exp %223 : vector<4x32xf32>
    %cst_77 = arith.constant 1.000000e+00 : f32
    %225 = vector.broadcast %cst_77 : f32 to vector<4x32xf32>
    %226 = arith.addf %225, %224 : vector<4x32xf32>
    %227 = arith.divf %225, %226 : vector<4x32xf32>
    %228 = vector.extract_strided_slice %221 {offsets = [0, 32], sizes = [4, 32], strides = [1, 1]} : vector<4x128xf32> to vector<4x32xf32>
    %229 = arith.negf %228 : vector<4x32xf32>
    %230 = math.exp %229 : vector<4x32xf32>
    %cst_78 = arith.constant 1.000000e+00 : f32
    %231 = vector.broadcast %cst_78 : f32 to vector<4x32xf32>
    %232 = arith.addf %231, %230 : vector<4x32xf32>
    %233 = arith.divf %231, %232 : vector<4x32xf32>
    %234 = vector.extract_strided_slice %221 {offsets = [0, 64], sizes = [4, 32], strides = [1, 1]} : vector<4x128xf32> to vector<4x32xf32>
    %235 = math.tanh %234 : vector<4x32xf32>
    %236 = vector.extract_strided_slice %221 {offsets = [0, 96], sizes = [4, 32], strides = [1, 1]} : vector<4x128xf32> to vector<4x32xf32>
    %237 = arith.negf %236 : vector<4x32xf32>
    %238 = math.exp %237 : vector<4x32xf32>
    %cst_79 = arith.constant 1.000000e+00 : f32
    %239 = vector.broadcast %cst_79 : f32 to vector<4x32xf32>
    %240 = arith.addf %239, %238 : vector<4x32xf32>
    %241 = arith.divf %239, %240 : vector<4x32xf32>
    %242 = arith.mulf %233, %158 : vector<4x32xf32>
    %243 = arith.mulf %227, %235 : vector<4x32xf32>
    %244 = arith.addf %242, %243 : vector<4x32xf32>
    %245 = math.tanh %244 : vector<4x32xf32>
    %246 = arith.mulf %241, %245 : vector<4x32xf32>
    %cst_80 = arith.constant 0.000000e+00 : f32
    %247 = vector.broadcast %cst_80 : f32 to vector<4x32xf32>
    %248 = arith.maximumf %246, %247 : vector<4x32xf32>
    %cst_81 = arith.constant dense<0.000000e+00> : vector<4x64xf32>
    %249 = tpu.matmul %248, %29, %cst_81 {dimension_numbers = #tpu.dot_dimension_numbers<[1], [0], [0], [1], [0, 0, 1, 1], [], []>} : vector<4x32xf32>, vector<32x64xf32>, vector<4x64xf32> -> vector<4x64xf32>
    %250 = arith.addf %249, %36 : vector<4x64xf32>
    %cst_82 = arith.constant 0.000000e+00 : f32
    %251 = vector.broadcast %cst_82 : f32 to vector<4x64xf32>
    %252 = arith.maximumf %250, %251 : vector<4x64xf32>
    %cst_83 = arith.constant dense<0.000000e+00> : vector<4x15xf32>
    %253 = tpu.matmul %252, %30, %cst_83 {dimension_numbers = #tpu.dot_dimension_numbers<[1], [0], [0], [1], [0, 0, 1, 1], [], []>} : vector<4x64xf32>, vector<64x15xf32>, vector<4x15xf32> -> vector<4x15xf32>
    %254 = arith.addf %253, %39 : vector<4x15xf32>
    %cst_84 = arith.constant dense<0xFF800000> : vector<4xf32>
    %255 = vector.multi_reduction <maximumf>, %254, %cst_84 [1] : vector<4x15xf32> to vector<4xf32>
    %256 = vector.shape_cast %255 : vector<4xf32> to vector<4x1xf32>
    %257 = vector.broadcast %256 : vector<4x1xf32> to vector<4x15xf32>
    %258 = arith.subf %254, %257 : vector<4x15xf32>
    %259 = math.exp %258 : vector<4x15xf32>
    %cst_85 = arith.constant dense<0.000000e+00> : vector<4xf32>
    %260 = vector.multi_reduction <add>, %259, %cst_85 [1] : vector<4x15xf32> to vector<4xf32>
    %261 = vector.shape_cast %260 : vector<4xf32> to vector<4x1xf32>
    %262 = math.log %261 : vector<4x1xf32>
    %263 = arith.addf %262, %256 : vector<4x1xf32>
    %264 = vector.broadcast %263 : vector<4x1xf32> to vector<4x15xf32>
    %265 = arith.subf %254, %264 : vector<4x15xf32>
    %266 = vector.broadcast %261 : vector<4x1xf32> to vector<4x15xf32>
    %267 = arith.divf %259, %266 : vector<4x15xf32>
    %268 = arith.mulf %267, %265 : vector<4x15xf32>
    %cst_86 = arith.constant dense<0.000000e+00> : vector<4xf32>
    %269 = vector.multi_reduction <add>, %268, %cst_86 [1] : vector<4x15xf32> to vector<4xf32>
    %270 = vector.shape_cast %269 : vector<4xf32> to vector<4x1xf32>
    %cst_87 = arith.constant 0.000000e+00 : f32
    %271 = vector.broadcast %cst_87 : f32 to vector<4x1xf32>
    %272 = arith.subf %271, %270 : vector<4x1xf32>
    %c2 = arith.constant 2 : index
    %c0_88 = arith.constant 0 : index
    %c0_89 = arith.constant 0 : index
    %273 = vector.load %arg1[%c2, %c0_88, %c0_89] : memref<8x4x15xf32, #tpu.memory_space<vmem>>, vector<1x4x15xf32>
    %274 = vector.shape_cast %273 : vector<1x4x15xf32> to vector<4x15xf32>
    %275 = arith.addf %254, %274 : vector<4x15xf32>
    %cst_90 = arith.constant dense<0xFF800000> : vector<4xf32>
    %276 = vector.multi_reduction <maximumf>, %275, %cst_90 [1] : vector<4x15xf32> to vector<4xf32>
    %277 = vector.shape_cast %276 : vector<4xf32> to vector<4x1xf32>
    %278 = vector.broadcast %277 : vector<4x1xf32> to vector<4x15xf32>
    %279 = arith.cmpf oge, %275, %278 : vector<4x15xf32>
    %c15_i32_91 = arith.constant 15 : i32
    %280 = vector.broadcast %c15_i32_91 : i32 to vector<4x15xi32>
    %281 = arith.select %279, %41, %280 : vector<4x15xi1>, vector<4x15xi32>
    %cst_92 = arith.constant dense<2147483647> : vector<4xi32>
    %282 = vector.multi_reduction <minsi>, %281, %cst_92 [1] : vector<4x15xi32> to vector<4xi32>
    %283 = vector.shape_cast %282 : vector<4xi32> to vector<4x1xi32>
    %284 = vector.broadcast %283 : vector<4x1xi32> to vector<4x16xi32>
    %285 = arith.cmpi eq, %40, %284 : vector<4x16xi32>
    %286 = arith.extui %285 : vector<4x16xi1> to vector<4x16xi32>
    %287 = arith.sitofp %286 : vector<4x16xi32> to vector<4x16xf32>
    %288 = vector.extract_strided_slice %287 {offsets = [0, 0], sizes = [4, 15], strides = [1, 1]} : vector<4x16xf32> to vector<4x15xf32>
    %289 = arith.mulf %265, %288 : vector<4x15xf32>
    %cst_93 = arith.constant dense<0.000000e+00> : vector<4xf32>
    %290 = vector.multi_reduction <add>, %289, %cst_93 [1] : vector<4x15xf32> to vector<4xf32>
    %291 = vector.shape_cast %290 : vector<4xf32> to vector<4x1xf32>
    %c2_i32 = arith.constant 2 : i32
    %292 = vector.broadcast %c2_i32 : i32 to vector<4x8xi32>
    %293 = arith.cmpi eq, %42, %292 : vector<4x8xi32>
    %294 = vector.shape_cast %283 : vector<4x1xi32> to vector<4x1xi32>
    %295 = vector.broadcast %294 : vector<4x1xi32> to vector<4x8xi32>
    %296 = arith.select %293, %295, %210 : vector<4x8xi1>, vector<4x8xi32>
    %297 = vector.shape_cast %291 : vector<4x1xf32> to vector<4x1xf32>
    %298 = vector.broadcast %297 : vector<4x1xf32> to vector<4x8xf32>
    %299 = arith.select %293, %298, %213 : vector<4x8xi1>, vector<4x8xf32>
    %300 = vector.shape_cast %272 : vector<4x1xf32> to vector<4x1xf32>
    %301 = vector.broadcast %300 : vector<4x1xf32> to vector<4x8xf32>
    %302 = arith.select %293, %301, %216 : vector<4x8xi1>, vector<4x8xf32>
    %cst_94 = arith.constant dense<0.000000e+00> : vector<4x32xf32>
    %303 = tpu.matmul %287, %26, %cst_94 {dimension_numbers = #tpu.dot_dimension_numbers<[1], [0], [0], [1], [0, 0, 1, 1], [], []>} : vector<4x16xf32>, vector<16x32xf32>, vector<4x32xf32> -> vector<4x32xf32>
    %cst_95 = arith.constant dense<0.000000e+00> : vector<4x128xf32>
    %304 = tpu.matmul %303, %27, %cst_95 {dimension_numbers = #tpu.dot_dimension_numbers<[1], [0], [0], [1], [0, 0, 1, 1], [], []>} : vector<4x32xf32>, vector<32x128xf32>, vector<4x128xf32> -> vector<4x128xf32>
    %cst_96 = arith.constant dense<0.000000e+00> : vector<4x128xf32>
    %305 = tpu.matmul %246, %28, %cst_96 {dimension_numbers = #tpu.dot_dimension_numbers<[1], [0], [0], [1], [0, 0, 1, 1], [], []>} : vector<4x32xf32>, vector<32x128xf32>, vector<4x128xf32> -> vector<4x128xf32>
    %306 = arith.addf %304, %305 : vector<4x128xf32>
    %307 = arith.addf %306, %33 : vector<4x128xf32>
    %308 = vector.extract_strided_slice %307 {offsets = [0, 0], sizes = [4, 32], strides = [1, 1]} : vector<4x128xf32> to vector<4x32xf32>
    %309 = arith.negf %308 : vector<4x32xf32>
    %310 = math.exp %309 : vector<4x32xf32>
    %cst_97 = arith.constant 1.000000e+00 : f32
    %311 = vector.broadcast %cst_97 : f32 to vector<4x32xf32>
    %312 = arith.addf %311, %310 : vector<4x32xf32>
    %313 = arith.divf %311, %312 : vector<4x32xf32>
    %314 = vector.extract_strided_slice %307 {offsets = [0, 32], sizes = [4, 32], strides = [1, 1]} : vector<4x128xf32> to vector<4x32xf32>
    %315 = arith.negf %314 : vector<4x32xf32>
    %316 = math.exp %315 : vector<4x32xf32>
    %cst_98 = arith.constant 1.000000e+00 : f32
    %317 = vector.broadcast %cst_98 : f32 to vector<4x32xf32>
    %318 = arith.addf %317, %316 : vector<4x32xf32>
    %319 = arith.divf %317, %318 : vector<4x32xf32>
    %320 = vector.extract_strided_slice %307 {offsets = [0, 64], sizes = [4, 32], strides = [1, 1]} : vector<4x128xf32> to vector<4x32xf32>
    %321 = math.tanh %320 : vector<4x32xf32>
    %322 = vector.extract_strided_slice %307 {offsets = [0, 96], sizes = [4, 32], strides = [1, 1]} : vector<4x128xf32> to vector<4x32xf32>
    %323 = arith.negf %322 : vector<4x32xf32>
    %324 = math.exp %323 : vector<4x32xf32>
    %cst_99 = arith.constant 1.000000e+00 : f32
    %325 = vector.broadcast %cst_99 : f32 to vector<4x32xf32>
    %326 = arith.addf %325, %324 : vector<4x32xf32>
    %327 = arith.divf %325, %326 : vector<4x32xf32>
    %328 = arith.mulf %319, %244 : vector<4x32xf32>
    %329 = arith.mulf %313, %321 : vector<4x32xf32>
    %330 = arith.addf %328, %329 : vector<4x32xf32>
    %331 = math.tanh %330 : vector<4x32xf32>
    %332 = arith.mulf %327, %331 : vector<4x32xf32>
    %cst_100 = arith.constant 0.000000e+00 : f32
    %333 = vector.broadcast %cst_100 : f32 to vector<4x32xf32>
    %334 = arith.maximumf %332, %333 : vector<4x32xf32>
    %cst_101 = arith.constant dense<0.000000e+00> : vector<4x64xf32>
    %335 = tpu.matmul %334, %29, %cst_101 {dimension_numbers = #tpu.dot_dimension_numbers<[1], [0], [0], [1], [0, 0, 1, 1], [], []>} : vector<4x32xf32>, vector<32x64xf32>, vector<4x64xf32> -> vector<4x64xf32>
    %336 = arith.addf %335, %36 : vector<4x64xf32>
    %cst_102 = arith.constant 0.000000e+00 : f32
    %337 = vector.broadcast %cst_102 : f32 to vector<4x64xf32>
    %338 = arith.maximumf %336, %337 : vector<4x64xf32>
    %cst_103 = arith.constant dense<0.000000e+00> : vector<4x15xf32>
    %339 = tpu.matmul %338, %30, %cst_103 {dimension_numbers = #tpu.dot_dimension_numbers<[1], [0], [0], [1], [0, 0, 1, 1], [], []>} : vector<4x64xf32>, vector<64x15xf32>, vector<4x15xf32> -> vector<4x15xf32>
    %340 = arith.addf %339, %39 : vector<4x15xf32>
    %cst_104 = arith.constant dense<0xFF800000> : vector<4xf32>
    %341 = vector.multi_reduction <maximumf>, %340, %cst_104 [1] : vector<4x15xf32> to vector<4xf32>
    %342 = vector.shape_cast %341 : vector<4xf32> to vector<4x1xf32>
    %343 = vector.broadcast %342 : vector<4x1xf32> to vector<4x15xf32>
    %344 = arith.subf %340, %343 : vector<4x15xf32>
    %345 = math.exp %344 : vector<4x15xf32>
    %cst_105 = arith.constant dense<0.000000e+00> : vector<4xf32>
    %346 = vector.multi_reduction <add>, %345, %cst_105 [1] : vector<4x15xf32> to vector<4xf32>
    %347 = vector.shape_cast %346 : vector<4xf32> to vector<4x1xf32>
    %348 = math.log %347 : vector<4x1xf32>
    %349 = arith.addf %348, %342 : vector<4x1xf32>
    %350 = vector.broadcast %349 : vector<4x1xf32> to vector<4x15xf32>
    %351 = arith.subf %340, %350 : vector<4x15xf32>
    %352 = vector.broadcast %347 : vector<4x1xf32> to vector<4x15xf32>
    %353 = arith.divf %345, %352 : vector<4x15xf32>
    %354 = arith.mulf %353, %351 : vector<4x15xf32>
    %cst_106 = arith.constant dense<0.000000e+00> : vector<4xf32>
    %355 = vector.multi_reduction <add>, %354, %cst_106 [1] : vector<4x15xf32> to vector<4xf32>
    %356 = vector.shape_cast %355 : vector<4xf32> to vector<4x1xf32>
    %cst_107 = arith.constant 0.000000e+00 : f32
    %357 = vector.broadcast %cst_107 : f32 to vector<4x1xf32>
    %358 = arith.subf %357, %356 : vector<4x1xf32>
    %c3 = arith.constant 3 : index
    %c0_108 = arith.constant 0 : index
    %c0_109 = arith.constant 0 : index
    %359 = vector.load %arg1[%c3, %c0_108, %c0_109] : memref<8x4x15xf32, #tpu.memory_space<vmem>>, vector<1x4x15xf32>
    %360 = vector.shape_cast %359 : vector<1x4x15xf32> to vector<4x15xf32>
    %361 = arith.addf %340, %360 : vector<4x15xf32>
    %cst_110 = arith.constant dense<0xFF800000> : vector<4xf32>
    %362 = vector.multi_reduction <maximumf>, %361, %cst_110 [1] : vector<4x15xf32> to vector<4xf32>
    %363 = vector.shape_cast %362 : vector<4xf32> to vector<4x1xf32>
    %364 = vector.broadcast %363 : vector<4x1xf32> to vector<4x15xf32>
    %365 = arith.cmpf oge, %361, %364 : vector<4x15xf32>
    %c15_i32_111 = arith.constant 15 : i32
    %366 = vector.broadcast %c15_i32_111 : i32 to vector<4x15xi32>
    %367 = arith.select %365, %41, %366 : vector<4x15xi1>, vector<4x15xi32>
    %cst_112 = arith.constant dense<2147483647> : vector<4xi32>
    %368 = vector.multi_reduction <minsi>, %367, %cst_112 [1] : vector<4x15xi32> to vector<4xi32>
    %369 = vector.shape_cast %368 : vector<4xi32> to vector<4x1xi32>
    %370 = vector.broadcast %369 : vector<4x1xi32> to vector<4x16xi32>
    %371 = arith.cmpi eq, %40, %370 : vector<4x16xi32>
    %372 = arith.extui %371 : vector<4x16xi1> to vector<4x16xi32>
    %373 = arith.sitofp %372 : vector<4x16xi32> to vector<4x16xf32>
    %374 = vector.extract_strided_slice %373 {offsets = [0, 0], sizes = [4, 15], strides = [1, 1]} : vector<4x16xf32> to vector<4x15xf32>
    %375 = arith.mulf %351, %374 : vector<4x15xf32>
    %cst_113 = arith.constant dense<0.000000e+00> : vector<4xf32>
    %376 = vector.multi_reduction <add>, %375, %cst_113 [1] : vector<4x15xf32> to vector<4xf32>
    %377 = vector.shape_cast %376 : vector<4xf32> to vector<4x1xf32>
    %c3_i32 = arith.constant 3 : i32
    %378 = vector.broadcast %c3_i32 : i32 to vector<4x8xi32>
    %379 = arith.cmpi eq, %42, %378 : vector<4x8xi32>
    %380 = vector.shape_cast %369 : vector<4x1xi32> to vector<4x1xi32>
    %381 = vector.broadcast %380 : vector<4x1xi32> to vector<4x8xi32>
    %382 = arith.select %379, %381, %296 : vector<4x8xi1>, vector<4x8xi32>
    %383 = vector.shape_cast %377 : vector<4x1xf32> to vector<4x1xf32>
    %384 = vector.broadcast %383 : vector<4x1xf32> to vector<4x8xf32>
    %385 = arith.select %379, %384, %299 : vector<4x8xi1>, vector<4x8xf32>
    %386 = vector.shape_cast %358 : vector<4x1xf32> to vector<4x1xf32>
    %387 = vector.broadcast %386 : vector<4x1xf32> to vector<4x8xf32>
    %388 = arith.select %379, %387, %302 : vector<4x8xi1>, vector<4x8xf32>
    %cst_114 = arith.constant dense<0.000000e+00> : vector<4x32xf32>
    %389 = tpu.matmul %373, %26, %cst_114 {dimension_numbers = #tpu.dot_dimension_numbers<[1], [0], [0], [1], [0, 0, 1, 1], [], []>} : vector<4x16xf32>, vector<16x32xf32>, vector<4x32xf32> -> vector<4x32xf32>
    %cst_115 = arith.constant dense<0.000000e+00> : vector<4x128xf32>
    %390 = tpu.matmul %389, %27, %cst_115 {dimension_numbers = #tpu.dot_dimension_numbers<[1], [0], [0], [1], [0, 0, 1, 1], [], []>} : vector<4x32xf32>, vector<32x128xf32>, vector<4x128xf32> -> vector<4x128xf32>
    %cst_116 = arith.constant dense<0.000000e+00> : vector<4x128xf32>
    %391 = tpu.matmul %332, %28, %cst_116 {dimension_numbers = #tpu.dot_dimension_numbers<[1], [0], [0], [1], [0, 0, 1, 1], [], []>} : vector<4x32xf32>, vector<32x128xf32>, vector<4x128xf32> -> vector<4x128xf32>
    %392 = arith.addf %390, %391 : vector<4x128xf32>
    %393 = arith.addf %392, %33 : vector<4x128xf32>
    %394 = vector.extract_strided_slice %393 {offsets = [0, 0], sizes = [4, 32], strides = [1, 1]} : vector<4x128xf32> to vector<4x32xf32>
    %395 = arith.negf %394 : vector<4x32xf32>
    %396 = math.exp %395 : vector<4x32xf32>
    %cst_117 = arith.constant 1.000000e+00 : f32
    %397 = vector.broadcast %cst_117 : f32 to vector<4x32xf32>
    %398 = arith.addf %397, %396 : vector<4x32xf32>
    %399 = arith.divf %397, %398 : vector<4x32xf32>
    %400 = vector.extract_strided_slice %393 {offsets = [0, 32], sizes = [4, 32], strides = [1, 1]} : vector<4x128xf32> to vector<4x32xf32>
    %401 = arith.negf %400 : vector<4x32xf32>
    %402 = math.exp %401 : vector<4x32xf32>
    %cst_118 = arith.constant 1.000000e+00 : f32
    %403 = vector.broadcast %cst_118 : f32 to vector<4x32xf32>
    %404 = arith.addf %403, %402 : vector<4x32xf32>
    %405 = arith.divf %403, %404 : vector<4x32xf32>
    %406 = vector.extract_strided_slice %393 {offsets = [0, 64], sizes = [4, 32], strides = [1, 1]} : vector<4x128xf32> to vector<4x32xf32>
    %407 = math.tanh %406 : vector<4x32xf32>
    %408 = vector.extract_strided_slice %393 {offsets = [0, 96], sizes = [4, 32], strides = [1, 1]} : vector<4x128xf32> to vector<4x32xf32>
    %409 = arith.negf %408 : vector<4x32xf32>
    %410 = math.exp %409 : vector<4x32xf32>
    %cst_119 = arith.constant 1.000000e+00 : f32
    %411 = vector.broadcast %cst_119 : f32 to vector<4x32xf32>
    %412 = arith.addf %411, %410 : vector<4x32xf32>
    %413 = arith.divf %411, %412 : vector<4x32xf32>
    %414 = arith.mulf %405, %330 : vector<4x32xf32>
    %415 = arith.mulf %399, %407 : vector<4x32xf32>
    %416 = arith.addf %414, %415 : vector<4x32xf32>
    %417 = math.tanh %416 : vector<4x32xf32>
    %418 = arith.mulf %413, %417 : vector<4x32xf32>
    %cst_120 = arith.constant 0.000000e+00 : f32
    %419 = vector.broadcast %cst_120 : f32 to vector<4x32xf32>
    %420 = arith.maximumf %418, %419 : vector<4x32xf32>
    %cst_121 = arith.constant dense<0.000000e+00> : vector<4x64xf32>
    %421 = tpu.matmul %420, %29, %cst_121 {dimension_numbers = #tpu.dot_dimension_numbers<[1], [0], [0], [1], [0, 0, 1, 1], [], []>} : vector<4x32xf32>, vector<32x64xf32>, vector<4x64xf32> -> vector<4x64xf32>
    %422 = arith.addf %421, %36 : vector<4x64xf32>
    %cst_122 = arith.constant 0.000000e+00 : f32
    %423 = vector.broadcast %cst_122 : f32 to vector<4x64xf32>
    %424 = arith.maximumf %422, %423 : vector<4x64xf32>
    %cst_123 = arith.constant dense<0.000000e+00> : vector<4x15xf32>
    %425 = tpu.matmul %424, %30, %cst_123 {dimension_numbers = #tpu.dot_dimension_numbers<[1], [0], [0], [1], [0, 0, 1, 1], [], []>} : vector<4x64xf32>, vector<64x15xf32>, vector<4x15xf32> -> vector<4x15xf32>
    %426 = arith.addf %425, %39 : vector<4x15xf32>
    %cst_124 = arith.constant dense<0xFF800000> : vector<4xf32>
    %427 = vector.multi_reduction <maximumf>, %426, %cst_124 [1] : vector<4x15xf32> to vector<4xf32>
    %428 = vector.shape_cast %427 : vector<4xf32> to vector<4x1xf32>
    %429 = vector.broadcast %428 : vector<4x1xf32> to vector<4x15xf32>
    %430 = arith.subf %426, %429 : vector<4x15xf32>
    %431 = math.exp %430 : vector<4x15xf32>
    %cst_125 = arith.constant dense<0.000000e+00> : vector<4xf32>
    %432 = vector.multi_reduction <add>, %431, %cst_125 [1] : vector<4x15xf32> to vector<4xf32>
    %433 = vector.shape_cast %432 : vector<4xf32> to vector<4x1xf32>
    %434 = math.log %433 : vector<4x1xf32>
    %435 = arith.addf %434, %428 : vector<4x1xf32>
    %436 = vector.broadcast %435 : vector<4x1xf32> to vector<4x15xf32>
    %437 = arith.subf %426, %436 : vector<4x15xf32>
    %438 = vector.broadcast %433 : vector<4x1xf32> to vector<4x15xf32>
    %439 = arith.divf %431, %438 : vector<4x15xf32>
    %440 = arith.mulf %439, %437 : vector<4x15xf32>
    %cst_126 = arith.constant dense<0.000000e+00> : vector<4xf32>
    %441 = vector.multi_reduction <add>, %440, %cst_126 [1] : vector<4x15xf32> to vector<4xf32>
    %442 = vector.shape_cast %441 : vector<4xf32> to vector<4x1xf32>
    %cst_127 = arith.constant 0.000000e+00 : f32
    %443 = vector.broadcast %cst_127 : f32 to vector<4x1xf32>
    %444 = arith.subf %443, %442 : vector<4x1xf32>
    %c4 = arith.constant 4 : index
    %c0_128 = arith.constant 0 : index
    %c0_129 = arith.constant 0 : index
    %445 = vector.load %arg1[%c4, %c0_128, %c0_129] : memref<8x4x15xf32, #tpu.memory_space<vmem>>, vector<1x4x15xf32>
    %446 = vector.shape_cast %445 : vector<1x4x15xf32> to vector<4x15xf32>
    %447 = arith.addf %426, %446 : vector<4x15xf32>
    %cst_130 = arith.constant dense<0xFF800000> : vector<4xf32>
    %448 = vector.multi_reduction <maximumf>, %447, %cst_130 [1] : vector<4x15xf32> to vector<4xf32>
    %449 = vector.shape_cast %448 : vector<4xf32> to vector<4x1xf32>
    %450 = vector.broadcast %449 : vector<4x1xf32> to vector<4x15xf32>
    %451 = arith.cmpf oge, %447, %450 : vector<4x15xf32>
    %c15_i32_131 = arith.constant 15 : i32
    %452 = vector.broadcast %c15_i32_131 : i32 to vector<4x15xi32>
    %453 = arith.select %451, %41, %452 : vector<4x15xi1>, vector<4x15xi32>
    %cst_132 = arith.constant dense<2147483647> : vector<4xi32>
    %454 = vector.multi_reduction <minsi>, %453, %cst_132 [1] : vector<4x15xi32> to vector<4xi32>
    %455 = vector.shape_cast %454 : vector<4xi32> to vector<4x1xi32>
    %456 = vector.broadcast %455 : vector<4x1xi32> to vector<4x16xi32>
    %457 = arith.cmpi eq, %40, %456 : vector<4x16xi32>
    %458 = arith.extui %457 : vector<4x16xi1> to vector<4x16xi32>
    %459 = arith.sitofp %458 : vector<4x16xi32> to vector<4x16xf32>
    %460 = vector.extract_strided_slice %459 {offsets = [0, 0], sizes = [4, 15], strides = [1, 1]} : vector<4x16xf32> to vector<4x15xf32>
    %461 = arith.mulf %437, %460 : vector<4x15xf32>
    %cst_133 = arith.constant dense<0.000000e+00> : vector<4xf32>
    %462 = vector.multi_reduction <add>, %461, %cst_133 [1] : vector<4x15xf32> to vector<4xf32>
    %463 = vector.shape_cast %462 : vector<4xf32> to vector<4x1xf32>
    %c4_i32 = arith.constant 4 : i32
    %464 = vector.broadcast %c4_i32 : i32 to vector<4x8xi32>
    %465 = arith.cmpi eq, %42, %464 : vector<4x8xi32>
    %466 = vector.shape_cast %455 : vector<4x1xi32> to vector<4x1xi32>
    %467 = vector.broadcast %466 : vector<4x1xi32> to vector<4x8xi32>
    %468 = arith.select %465, %467, %382 : vector<4x8xi1>, vector<4x8xi32>
    %469 = vector.shape_cast %463 : vector<4x1xf32> to vector<4x1xf32>
    %470 = vector.broadcast %469 : vector<4x1xf32> to vector<4x8xf32>
    %471 = arith.select %465, %470, %385 : vector<4x8xi1>, vector<4x8xf32>
    %472 = vector.shape_cast %444 : vector<4x1xf32> to vector<4x1xf32>
    %473 = vector.broadcast %472 : vector<4x1xf32> to vector<4x8xf32>
    %474 = arith.select %465, %473, %388 : vector<4x8xi1>, vector<4x8xf32>
    %cst_134 = arith.constant dense<0.000000e+00> : vector<4x32xf32>
    %475 = tpu.matmul %459, %26, %cst_134 {dimension_numbers = #tpu.dot_dimension_numbers<[1], [0], [0], [1], [0, 0, 1, 1], [], []>} : vector<4x16xf32>, vector<16x32xf32>, vector<4x32xf32> -> vector<4x32xf32>
    %cst_135 = arith.constant dense<0.000000e+00> : vector<4x128xf32>
    %476 = tpu.matmul %475, %27, %cst_135 {dimension_numbers = #tpu.dot_dimension_numbers<[1], [0], [0], [1], [0, 0, 1, 1], [], []>} : vector<4x32xf32>, vector<32x128xf32>, vector<4x128xf32> -> vector<4x128xf32>
    %cst_136 = arith.constant dense<0.000000e+00> : vector<4x128xf32>
    %477 = tpu.matmul %418, %28, %cst_136 {dimension_numbers = #tpu.dot_dimension_numbers<[1], [0], [0], [1], [0, 0, 1, 1], [], []>} : vector<4x32xf32>, vector<32x128xf32>, vector<4x128xf32> -> vector<4x128xf32>
    %478 = arith.addf %476, %477 : vector<4x128xf32>
    %479 = arith.addf %478, %33 : vector<4x128xf32>
    %480 = vector.extract_strided_slice %479 {offsets = [0, 0], sizes = [4, 32], strides = [1, 1]} : vector<4x128xf32> to vector<4x32xf32>
    %481 = arith.negf %480 : vector<4x32xf32>
    %482 = math.exp %481 : vector<4x32xf32>
    %cst_137 = arith.constant 1.000000e+00 : f32
    %483 = vector.broadcast %cst_137 : f32 to vector<4x32xf32>
    %484 = arith.addf %483, %482 : vector<4x32xf32>
    %485 = arith.divf %483, %484 : vector<4x32xf32>
    %486 = vector.extract_strided_slice %479 {offsets = [0, 32], sizes = [4, 32], strides = [1, 1]} : vector<4x128xf32> to vector<4x32xf32>
    %487 = arith.negf %486 : vector<4x32xf32>
    %488 = math.exp %487 : vector<4x32xf32>
    %cst_138 = arith.constant 1.000000e+00 : f32
    %489 = vector.broadcast %cst_138 : f32 to vector<4x32xf32>
    %490 = arith.addf %489, %488 : vector<4x32xf32>
    %491 = arith.divf %489, %490 : vector<4x32xf32>
    %492 = vector.extract_strided_slice %479 {offsets = [0, 64], sizes = [4, 32], strides = [1, 1]} : vector<4x128xf32> to vector<4x32xf32>
    %493 = math.tanh %492 : vector<4x32xf32>
    %494 = vector.extract_strided_slice %479 {offsets = [0, 96], sizes = [4, 32], strides = [1, 1]} : vector<4x128xf32> to vector<4x32xf32>
    %495 = arith.negf %494 : vector<4x32xf32>
    %496 = math.exp %495 : vector<4x32xf32>
    %cst_139 = arith.constant 1.000000e+00 : f32
    %497 = vector.broadcast %cst_139 : f32 to vector<4x32xf32>
    %498 = arith.addf %497, %496 : vector<4x32xf32>
    %499 = arith.divf %497, %498 : vector<4x32xf32>
    %500 = arith.mulf %491, %416 : vector<4x32xf32>
    %501 = arith.mulf %485, %493 : vector<4x32xf32>
    %502 = arith.addf %500, %501 : vector<4x32xf32>
    %503 = math.tanh %502 : vector<4x32xf32>
    %504 = arith.mulf %499, %503 : vector<4x32xf32>
    %cst_140 = arith.constant 0.000000e+00 : f32
    %505 = vector.broadcast %cst_140 : f32 to vector<4x32xf32>
    %506 = arith.maximumf %504, %505 : vector<4x32xf32>
    %cst_141 = arith.constant dense<0.000000e+00> : vector<4x64xf32>
    %507 = tpu.matmul %506, %29, %cst_141 {dimension_numbers = #tpu.dot_dimension_numbers<[1], [0], [0], [1], [0, 0, 1, 1], [], []>} : vector<4x32xf32>, vector<32x64xf32>, vector<4x64xf32> -> vector<4x64xf32>
    %508 = arith.addf %507, %36 : vector<4x64xf32>
    %cst_142 = arith.constant 0.000000e+00 : f32
    %509 = vector.broadcast %cst_142 : f32 to vector<4x64xf32>
    %510 = arith.maximumf %508, %509 : vector<4x64xf32>
    %cst_143 = arith.constant dense<0.000000e+00> : vector<4x15xf32>
    %511 = tpu.matmul %510, %30, %cst_143 {dimension_numbers = #tpu.dot_dimension_numbers<[1], [0], [0], [1], [0, 0, 1, 1], [], []>} : vector<4x64xf32>, vector<64x15xf32>, vector<4x15xf32> -> vector<4x15xf32>
    %512 = arith.addf %511, %39 : vector<4x15xf32>
    %cst_144 = arith.constant dense<0xFF800000> : vector<4xf32>
    %513 = vector.multi_reduction <maximumf>, %512, %cst_144 [1] : vector<4x15xf32> to vector<4xf32>
    %514 = vector.shape_cast %513 : vector<4xf32> to vector<4x1xf32>
    %515 = vector.broadcast %514 : vector<4x1xf32> to vector<4x15xf32>
    %516 = arith.subf %512, %515 : vector<4x15xf32>
    %517 = math.exp %516 : vector<4x15xf32>
    %cst_145 = arith.constant dense<0.000000e+00> : vector<4xf32>
    %518 = vector.multi_reduction <add>, %517, %cst_145 [1] : vector<4x15xf32> to vector<4xf32>
    %519 = vector.shape_cast %518 : vector<4xf32> to vector<4x1xf32>
    %520 = math.log %519 : vector<4x1xf32>
    %521 = arith.addf %520, %514 : vector<4x1xf32>
    %522 = vector.broadcast %521 : vector<4x1xf32> to vector<4x15xf32>
    %523 = arith.subf %512, %522 : vector<4x15xf32>
    %524 = vector.broadcast %519 : vector<4x1xf32> to vector<4x15xf32>
    %525 = arith.divf %517, %524 : vector<4x15xf32>
    %526 = arith.mulf %525, %523 : vector<4x15xf32>
    %cst_146 = arith.constant dense<0.000000e+00> : vector<4xf32>
    %527 = vector.multi_reduction <add>, %526, %cst_146 [1] : vector<4x15xf32> to vector<4xf32>
    %528 = vector.shape_cast %527 : vector<4xf32> to vector<4x1xf32>
    %cst_147 = arith.constant 0.000000e+00 : f32
    %529 = vector.broadcast %cst_147 : f32 to vector<4x1xf32>
    %530 = arith.subf %529, %528 : vector<4x1xf32>
    %c5 = arith.constant 5 : index
    %c0_148 = arith.constant 0 : index
    %c0_149 = arith.constant 0 : index
    %531 = vector.load %arg1[%c5, %c0_148, %c0_149] : memref<8x4x15xf32, #tpu.memory_space<vmem>>, vector<1x4x15xf32>
    %532 = vector.shape_cast %531 : vector<1x4x15xf32> to vector<4x15xf32>
    %533 = arith.addf %512, %532 : vector<4x15xf32>
    %cst_150 = arith.constant dense<0xFF800000> : vector<4xf32>
    %534 = vector.multi_reduction <maximumf>, %533, %cst_150 [1] : vector<4x15xf32> to vector<4xf32>
    %535 = vector.shape_cast %534 : vector<4xf32> to vector<4x1xf32>
    %536 = vector.broadcast %535 : vector<4x1xf32> to vector<4x15xf32>
    %537 = arith.cmpf oge, %533, %536 : vector<4x15xf32>
    %c15_i32_151 = arith.constant 15 : i32
    %538 = vector.broadcast %c15_i32_151 : i32 to vector<4x15xi32>
    %539 = arith.select %537, %41, %538 : vector<4x15xi1>, vector<4x15xi32>
    %cst_152 = arith.constant dense<2147483647> : vector<4xi32>
    %540 = vector.multi_reduction <minsi>, %539, %cst_152 [1] : vector<4x15xi32> to vector<4xi32>
    %541 = vector.shape_cast %540 : vector<4xi32> to vector<4x1xi32>
    %542 = vector.broadcast %541 : vector<4x1xi32> to vector<4x16xi32>
    %543 = arith.cmpi eq, %40, %542 : vector<4x16xi32>
    %544 = arith.extui %543 : vector<4x16xi1> to vector<4x16xi32>
    %545 = arith.sitofp %544 : vector<4x16xi32> to vector<4x16xf32>
    %546 = vector.extract_strided_slice %545 {offsets = [0, 0], sizes = [4, 15], strides = [1, 1]} : vector<4x16xf32> to vector<4x15xf32>
    %547 = arith.mulf %523, %546 : vector<4x15xf32>
    %cst_153 = arith.constant dense<0.000000e+00> : vector<4xf32>
    %548 = vector.multi_reduction <add>, %547, %cst_153 [1] : vector<4x15xf32> to vector<4xf32>
    %549 = vector.shape_cast %548 : vector<4xf32> to vector<4x1xf32>
    %c5_i32 = arith.constant 5 : i32
    %550 = vector.broadcast %c5_i32 : i32 to vector<4x8xi32>
    %551 = arith.cmpi eq, %42, %550 : vector<4x8xi32>
    %552 = vector.shape_cast %541 : vector<4x1xi32> to vector<4x1xi32>
    %553 = vector.broadcast %552 : vector<4x1xi32> to vector<4x8xi32>
    %554 = arith.select %551, %553, %468 : vector<4x8xi1>, vector<4x8xi32>
    %555 = vector.shape_cast %549 : vector<4x1xf32> to vector<4x1xf32>
    %556 = vector.broadcast %555 : vector<4x1xf32> to vector<4x8xf32>
    %557 = arith.select %551, %556, %471 : vector<4x8xi1>, vector<4x8xf32>
    %558 = vector.shape_cast %530 : vector<4x1xf32> to vector<4x1xf32>
    %559 = vector.broadcast %558 : vector<4x1xf32> to vector<4x8xf32>
    %560 = arith.select %551, %559, %474 : vector<4x8xi1>, vector<4x8xf32>
    %cst_154 = arith.constant dense<0.000000e+00> : vector<4x32xf32>
    %561 = tpu.matmul %545, %26, %cst_154 {dimension_numbers = #tpu.dot_dimension_numbers<[1], [0], [0], [1], [0, 0, 1, 1], [], []>} : vector<4x16xf32>, vector<16x32xf32>, vector<4x32xf32> -> vector<4x32xf32>
    %cst_155 = arith.constant dense<0.000000e+00> : vector<4x128xf32>
    %562 = tpu.matmul %561, %27, %cst_155 {dimension_numbers = #tpu.dot_dimension_numbers<[1], [0], [0], [1], [0, 0, 1, 1], [], []>} : vector<4x32xf32>, vector<32x128xf32>, vector<4x128xf32> -> vector<4x128xf32>
    %cst_156 = arith.constant dense<0.000000e+00> : vector<4x128xf32>
    %563 = tpu.matmul %504, %28, %cst_156 {dimension_numbers = #tpu.dot_dimension_numbers<[1], [0], [0], [1], [0, 0, 1, 1], [], []>} : vector<4x32xf32>, vector<32x128xf32>, vector<4x128xf32> -> vector<4x128xf32>
    %564 = arith.addf %562, %563 : vector<4x128xf32>
    %565 = arith.addf %564, %33 : vector<4x128xf32>
    %566 = vector.extract_strided_slice %565 {offsets = [0, 0], sizes = [4, 32], strides = [1, 1]} : vector<4x128xf32> to vector<4x32xf32>
    %567 = arith.negf %566 : vector<4x32xf32>
    %568 = math.exp %567 : vector<4x32xf32>
    %cst_157 = arith.constant 1.000000e+00 : f32
    %569 = vector.broadcast %cst_157 : f32 to vector<4x32xf32>
    %570 = arith.addf %569, %568 : vector<4x32xf32>
    %571 = arith.divf %569, %570 : vector<4x32xf32>
    %572 = vector.extract_strided_slice %565 {offsets = [0, 32], sizes = [4, 32], strides = [1, 1]} : vector<4x128xf32> to vector<4x32xf32>
    %573 = arith.negf %572 : vector<4x32xf32>
    %574 = math.exp %573 : vector<4x32xf32>
    %cst_158 = arith.constant 1.000000e+00 : f32
    %575 = vector.broadcast %cst_158 : f32 to vector<4x32xf32>
    %576 = arith.addf %575, %574 : vector<4x32xf32>
    %577 = arith.divf %575, %576 : vector<4x32xf32>
    %578 = vector.extract_strided_slice %565 {offsets = [0, 64], sizes = [4, 32], strides = [1, 1]} : vector<4x128xf32> to vector<4x32xf32>
    %579 = math.tanh %578 : vector<4x32xf32>
    %580 = vector.extract_strided_slice %565 {offsets = [0, 96], sizes = [4, 32], strides = [1, 1]} : vector<4x128xf32> to vector<4x32xf32>
    %581 = arith.negf %580 : vector<4x32xf32>
    %582 = math.exp %581 : vector<4x32xf32>
    %cst_159 = arith.constant 1.000000e+00 : f32
    %583 = vector.broadcast %cst_159 : f32 to vector<4x32xf32>
    %584 = arith.addf %583, %582 : vector<4x32xf32>
    %585 = arith.divf %583, %584 : vector<4x32xf32>
    %586 = arith.mulf %577, %502 : vector<4x32xf32>
    %587 = arith.mulf %571, %579 : vector<4x32xf32>
    %588 = arith.addf %586, %587 : vector<4x32xf32>
    %589 = math.tanh %588 : vector<4x32xf32>
    %590 = arith.mulf %585, %589 : vector<4x32xf32>
    %cst_160 = arith.constant 0.000000e+00 : f32
    %591 = vector.broadcast %cst_160 : f32 to vector<4x32xf32>
    %592 = arith.maximumf %590, %591 : vector<4x32xf32>
    %cst_161 = arith.constant dense<0.000000e+00> : vector<4x64xf32>
    %593 = tpu.matmul %592, %29, %cst_161 {dimension_numbers = #tpu.dot_dimension_numbers<[1], [0], [0], [1], [0, 0, 1, 1], [], []>} : vector<4x32xf32>, vector<32x64xf32>, vector<4x64xf32> -> vector<4x64xf32>
    %594 = arith.addf %593, %36 : vector<4x64xf32>
    %cst_162 = arith.constant 0.000000e+00 : f32
    %595 = vector.broadcast %cst_162 : f32 to vector<4x64xf32>
    %596 = arith.maximumf %594, %595 : vector<4x64xf32>
    %cst_163 = arith.constant dense<0.000000e+00> : vector<4x15xf32>
    %597 = tpu.matmul %596, %30, %cst_163 {dimension_numbers = #tpu.dot_dimension_numbers<[1], [0], [0], [1], [0, 0, 1, 1], [], []>} : vector<4x64xf32>, vector<64x15xf32>, vector<4x15xf32> -> vector<4x15xf32>
    %598 = arith.addf %597, %39 : vector<4x15xf32>
    %cst_164 = arith.constant dense<0xFF800000> : vector<4xf32>
    %599 = vector.multi_reduction <maximumf>, %598, %cst_164 [1] : vector<4x15xf32> to vector<4xf32>
    %600 = vector.shape_cast %599 : vector<4xf32> to vector<4x1xf32>
    %601 = vector.broadcast %600 : vector<4x1xf32> to vector<4x15xf32>
    %602 = arith.subf %598, %601 : vector<4x15xf32>
    %603 = math.exp %602 : vector<4x15xf32>
    %cst_165 = arith.constant dense<0.000000e+00> : vector<4xf32>
    %604 = vector.multi_reduction <add>, %603, %cst_165 [1] : vector<4x15xf32> to vector<4xf32>
    %605 = vector.shape_cast %604 : vector<4xf32> to vector<4x1xf32>
    %606 = math.log %605 : vector<4x1xf32>
    %607 = arith.addf %606, %600 : vector<4x1xf32>
    %608 = vector.broadcast %607 : vector<4x1xf32> to vector<4x15xf32>
    %609 = arith.subf %598, %608 : vector<4x15xf32>
    %610 = vector.broadcast %605 : vector<4x1xf32> to vector<4x15xf32>
    %611 = arith.divf %603, %610 : vector<4x15xf32>
    %612 = arith.mulf %611, %609 : vector<4x15xf32>
    %cst_166 = arith.constant dense<0.000000e+00> : vector<4xf32>
    %613 = vector.multi_reduction <add>, %612, %cst_166 [1] : vector<4x15xf32> to vector<4xf32>
    %614 = vector.shape_cast %613 : vector<4xf32> to vector<4x1xf32>
    %cst_167 = arith.constant 0.000000e+00 : f32
    %615 = vector.broadcast %cst_167 : f32 to vector<4x1xf32>
    %616 = arith.subf %615, %614 : vector<4x1xf32>
    %c6 = arith.constant 6 : index
    %c0_168 = arith.constant 0 : index
    %c0_169 = arith.constant 0 : index
    %617 = vector.load %arg1[%c6, %c0_168, %c0_169] : memref<8x4x15xf32, #tpu.memory_space<vmem>>, vector<1x4x15xf32>
    %618 = vector.shape_cast %617 : vector<1x4x15xf32> to vector<4x15xf32>
    %619 = arith.addf %598, %618 : vector<4x15xf32>
    %cst_170 = arith.constant dense<0xFF800000> : vector<4xf32>
    %620 = vector.multi_reduction <maximumf>, %619, %cst_170 [1] : vector<4x15xf32> to vector<4xf32>
    %621 = vector.shape_cast %620 : vector<4xf32> to vector<4x1xf32>
    %622 = vector.broadcast %621 : vector<4x1xf32> to vector<4x15xf32>
    %623 = arith.cmpf oge, %619, %622 : vector<4x15xf32>
    %c15_i32_171 = arith.constant 15 : i32
    %624 = vector.broadcast %c15_i32_171 : i32 to vector<4x15xi32>
    %625 = arith.select %623, %41, %624 : vector<4x15xi1>, vector<4x15xi32>
    %cst_172 = arith.constant dense<2147483647> : vector<4xi32>
    %626 = vector.multi_reduction <minsi>, %625, %cst_172 [1] : vector<4x15xi32> to vector<4xi32>
    %627 = vector.shape_cast %626 : vector<4xi32> to vector<4x1xi32>
    %628 = vector.broadcast %627 : vector<4x1xi32> to vector<4x16xi32>
    %629 = arith.cmpi eq, %40, %628 : vector<4x16xi32>
    %630 = arith.extui %629 : vector<4x16xi1> to vector<4x16xi32>
    %631 = arith.sitofp %630 : vector<4x16xi32> to vector<4x16xf32>
    %632 = vector.extract_strided_slice %631 {offsets = [0, 0], sizes = [4, 15], strides = [1, 1]} : vector<4x16xf32> to vector<4x15xf32>
    %633 = arith.mulf %609, %632 : vector<4x15xf32>
    %cst_173 = arith.constant dense<0.000000e+00> : vector<4xf32>
    %634 = vector.multi_reduction <add>, %633, %cst_173 [1] : vector<4x15xf32> to vector<4xf32>
    %635 = vector.shape_cast %634 : vector<4xf32> to vector<4x1xf32>
    %c6_i32 = arith.constant 6 : i32
    %636 = vector.broadcast %c6_i32 : i32 to vector<4x8xi32>
    %637 = arith.cmpi eq, %42, %636 : vector<4x8xi32>
    %638 = vector.shape_cast %627 : vector<4x1xi32> to vector<4x1xi32>
    %639 = vector.broadcast %638 : vector<4x1xi32> to vector<4x8xi32>
    %640 = arith.select %637, %639, %554 : vector<4x8xi1>, vector<4x8xi32>
    %641 = vector.shape_cast %635 : vector<4x1xf32> to vector<4x1xf32>
    %642 = vector.broadcast %641 : vector<4x1xf32> to vector<4x8xf32>
    %643 = arith.select %637, %642, %557 : vector<4x8xi1>, vector<4x8xf32>
    %644 = vector.shape_cast %616 : vector<4x1xf32> to vector<4x1xf32>
    %645 = vector.broadcast %644 : vector<4x1xf32> to vector<4x8xf32>
    %646 = arith.select %637, %645, %560 : vector<4x8xi1>, vector<4x8xf32>
    %cst_174 = arith.constant dense<0.000000e+00> : vector<4x32xf32>
    %647 = tpu.matmul %631, %26, %cst_174 {dimension_numbers = #tpu.dot_dimension_numbers<[1], [0], [0], [1], [0, 0, 1, 1], [], []>} : vector<4x16xf32>, vector<16x32xf32>, vector<4x32xf32> -> vector<4x32xf32>
    %cst_175 = arith.constant dense<0.000000e+00> : vector<4x128xf32>
    %648 = tpu.matmul %647, %27, %cst_175 {dimension_numbers = #tpu.dot_dimension_numbers<[1], [0], [0], [1], [0, 0, 1, 1], [], []>} : vector<4x32xf32>, vector<32x128xf32>, vector<4x128xf32> -> vector<4x128xf32>
    %cst_176 = arith.constant dense<0.000000e+00> : vector<4x128xf32>
    %649 = tpu.matmul %590, %28, %cst_176 {dimension_numbers = #tpu.dot_dimension_numbers<[1], [0], [0], [1], [0, 0, 1, 1], [], []>} : vector<4x32xf32>, vector<32x128xf32>, vector<4x128xf32> -> vector<4x128xf32>
    %650 = arith.addf %648, %649 : vector<4x128xf32>
    %651 = arith.addf %650, %33 : vector<4x128xf32>
    %652 = vector.extract_strided_slice %651 {offsets = [0, 0], sizes = [4, 32], strides = [1, 1]} : vector<4x128xf32> to vector<4x32xf32>
    %653 = arith.negf %652 : vector<4x32xf32>
    %654 = math.exp %653 : vector<4x32xf32>
    %cst_177 = arith.constant 1.000000e+00 : f32
    %655 = vector.broadcast %cst_177 : f32 to vector<4x32xf32>
    %656 = arith.addf %655, %654 : vector<4x32xf32>
    %657 = arith.divf %655, %656 : vector<4x32xf32>
    %658 = vector.extract_strided_slice %651 {offsets = [0, 32], sizes = [4, 32], strides = [1, 1]} : vector<4x128xf32> to vector<4x32xf32>
    %659 = arith.negf %658 : vector<4x32xf32>
    %660 = math.exp %659 : vector<4x32xf32>
    %cst_178 = arith.constant 1.000000e+00 : f32
    %661 = vector.broadcast %cst_178 : f32 to vector<4x32xf32>
    %662 = arith.addf %661, %660 : vector<4x32xf32>
    %663 = arith.divf %661, %662 : vector<4x32xf32>
    %664 = vector.extract_strided_slice %651 {offsets = [0, 64], sizes = [4, 32], strides = [1, 1]} : vector<4x128xf32> to vector<4x32xf32>
    %665 = math.tanh %664 : vector<4x32xf32>
    %666 = vector.extract_strided_slice %651 {offsets = [0, 96], sizes = [4, 32], strides = [1, 1]} : vector<4x128xf32> to vector<4x32xf32>
    %667 = arith.negf %666 : vector<4x32xf32>
    %668 = math.exp %667 : vector<4x32xf32>
    %cst_179 = arith.constant 1.000000e+00 : f32
    %669 = vector.broadcast %cst_179 : f32 to vector<4x32xf32>
    %670 = arith.addf %669, %668 : vector<4x32xf32>
    %671 = arith.divf %669, %670 : vector<4x32xf32>
    %672 = arith.mulf %663, %588 : vector<4x32xf32>
    %673 = arith.mulf %657, %665 : vector<4x32xf32>
    %674 = arith.addf %672, %673 : vector<4x32xf32>
    %675 = math.tanh %674 : vector<4x32xf32>
    %676 = arith.mulf %671, %675 : vector<4x32xf32>
    %cst_180 = arith.constant 0.000000e+00 : f32
    %677 = vector.broadcast %cst_180 : f32 to vector<4x32xf32>
    %678 = arith.maximumf %676, %677 : vector<4x32xf32>
    %cst_181 = arith.constant dense<0.000000e+00> : vector<4x64xf32>
    %679 = tpu.matmul %678, %29, %cst_181 {dimension_numbers = #tpu.dot_dimension_numbers<[1], [0], [0], [1], [0, 0, 1, 1], [], []>} : vector<4x32xf32>, vector<32x64xf32>, vector<4x64xf32> -> vector<4x64xf32>
    %680 = arith.addf %679, %36 : vector<4x64xf32>
    %cst_182 = arith.constant 0.000000e+00 : f32
    %681 = vector.broadcast %cst_182 : f32 to vector<4x64xf32>
    %682 = arith.maximumf %680, %681 : vector<4x64xf32>
    %cst_183 = arith.constant dense<0.000000e+00> : vector<4x15xf32>
    %683 = tpu.matmul %682, %30, %cst_183 {dimension_numbers = #tpu.dot_dimension_numbers<[1], [0], [0], [1], [0, 0, 1, 1], [], []>} : vector<4x64xf32>, vector<64x15xf32>, vector<4x15xf32> -> vector<4x15xf32>
    %684 = arith.addf %683, %39 : vector<4x15xf32>
    %cst_184 = arith.constant dense<0xFF800000> : vector<4xf32>
    %685 = vector.multi_reduction <maximumf>, %684, %cst_184 [1] : vector<4x15xf32> to vector<4xf32>
    %686 = vector.shape_cast %685 : vector<4xf32> to vector<4x1xf32>
    %687 = vector.broadcast %686 : vector<4x1xf32> to vector<4x15xf32>
    %688 = arith.subf %684, %687 : vector<4x15xf32>
    %689 = math.exp %688 : vector<4x15xf32>
    %cst_185 = arith.constant dense<0.000000e+00> : vector<4xf32>
    %690 = vector.multi_reduction <add>, %689, %cst_185 [1] : vector<4x15xf32> to vector<4xf32>
    %691 = vector.shape_cast %690 : vector<4xf32> to vector<4x1xf32>
    %692 = math.log %691 : vector<4x1xf32>
    %693 = arith.addf %692, %686 : vector<4x1xf32>
    %694 = vector.broadcast %693 : vector<4x1xf32> to vector<4x15xf32>
    %695 = arith.subf %684, %694 : vector<4x15xf32>
    %696 = vector.broadcast %691 : vector<4x1xf32> to vector<4x15xf32>
    %697 = arith.divf %689, %696 : vector<4x15xf32>
    %698 = arith.mulf %697, %695 : vector<4x15xf32>
    %cst_186 = arith.constant dense<0.000000e+00> : vector<4xf32>
    %699 = vector.multi_reduction <add>, %698, %cst_186 [1] : vector<4x15xf32> to vector<4xf32>
    %700 = vector.shape_cast %699 : vector<4xf32> to vector<4x1xf32>
    %cst_187 = arith.constant 0.000000e+00 : f32
    %701 = vector.broadcast %cst_187 : f32 to vector<4x1xf32>
    %702 = arith.subf %701, %700 : vector<4x1xf32>
    %c7 = arith.constant 7 : index
    %c0_188 = arith.constant 0 : index
    %c0_189 = arith.constant 0 : index
    %703 = vector.load %arg1[%c7, %c0_188, %c0_189] : memref<8x4x15xf32, #tpu.memory_space<vmem>>, vector<1x4x15xf32>
    %704 = vector.shape_cast %703 : vector<1x4x15xf32> to vector<4x15xf32>
    %705 = arith.addf %684, %704 : vector<4x15xf32>
    %cst_190 = arith.constant dense<0xFF800000> : vector<4xf32>
    %706 = vector.multi_reduction <maximumf>, %705, %cst_190 [1] : vector<4x15xf32> to vector<4xf32>
    %707 = vector.shape_cast %706 : vector<4xf32> to vector<4x1xf32>
    %708 = vector.broadcast %707 : vector<4x1xf32> to vector<4x15xf32>
    %709 = arith.cmpf oge, %705, %708 : vector<4x15xf32>
    %c15_i32_191 = arith.constant 15 : i32
    %710 = vector.broadcast %c15_i32_191 : i32 to vector<4x15xi32>
    %711 = arith.select %709, %41, %710 : vector<4x15xi1>, vector<4x15xi32>
    %cst_192 = arith.constant dense<2147483647> : vector<4xi32>
    %712 = vector.multi_reduction <minsi>, %711, %cst_192 [1] : vector<4x15xi32> to vector<4xi32>
    %713 = vector.shape_cast %712 : vector<4xi32> to vector<4x1xi32>
    %714 = vector.broadcast %713 : vector<4x1xi32> to vector<4x16xi32>
    %715 = arith.cmpi eq, %40, %714 : vector<4x16xi32>
    %716 = arith.extui %715 : vector<4x16xi1> to vector<4x16xi32>
    %717 = arith.sitofp %716 : vector<4x16xi32> to vector<4x16xf32>
    %718 = vector.extract_strided_slice %717 {offsets = [0, 0], sizes = [4, 15], strides = [1, 1]} : vector<4x16xf32> to vector<4x15xf32>
    %719 = arith.mulf %695, %718 : vector<4x15xf32>
    %cst_193 = arith.constant dense<0.000000e+00> : vector<4xf32>
    %720 = vector.multi_reduction <add>, %719, %cst_193 [1] : vector<4x15xf32> to vector<4xf32>
    %721 = vector.shape_cast %720 : vector<4xf32> to vector<4x1xf32>
    %c7_i32 = arith.constant 7 : i32
    %722 = vector.broadcast %c7_i32 : i32 to vector<4x8xi32>
    %723 = arith.cmpi eq, %42, %722 : vector<4x8xi32>
    %724 = vector.shape_cast %713 : vector<4x1xi32> to vector<4x1xi32>
    %725 = vector.broadcast %724 : vector<4x1xi32> to vector<4x8xi32>
    %726 = arith.select %723, %725, %640 : vector<4x8xi1>, vector<4x8xi32>
    %727 = vector.shape_cast %721 : vector<4x1xf32> to vector<4x1xf32>
    %728 = vector.broadcast %727 : vector<4x1xf32> to vector<4x8xf32>
    %729 = arith.select %723, %728, %643 : vector<4x8xi1>, vector<4x8xf32>
    %730 = vector.shape_cast %702 : vector<4x1xf32> to vector<4x1xf32>
    %731 = vector.broadcast %730 : vector<4x1xf32> to vector<4x8xf32>
    %732 = arith.select %723, %731, %646 : vector<4x8xi1>, vector<4x8xf32>
    %c0_194 = arith.constant 0 : index
    %c0_195 = arith.constant 0 : index
    %733 = vector.load %arg14[%c0_194, %c0_195] : memref<4x8xi32, #tpu.memory_space<vmem>>, vector<4x8xi32>
    tpu.vector_store %arg14[%c0_194, %c0_195], %726 {strides = array<i32>} : memref<4x8xi32, #tpu.memory_space<vmem>>, vector<4x8xi32>,
    %c0_196 = arith.constant 0 : index
    %c0_197 = arith.constant 0 : index
    %734 = vector.load %arg15[%c0_196, %c0_197] : memref<4x8xf32, #tpu.memory_space<vmem>>, vector<4x8xf32>
    tpu.vector_store %arg15[%c0_196, %c0_197], %729 {strides = array<i32>} : memref<4x8xf32, #tpu.memory_space<vmem>>, vector<4x8xf32>,
    %c0_198 = arith.constant 0 : index
    %c0_199 = arith.constant 0 : index
    %735 = vector.load %arg16[%c0_198, %c0_199] : memref<4x8xf32, #tpu.memory_space<vmem>>, vector<4x8xf32>
    tpu.vector_store %arg16[%c0_198, %c0_199], %732 {strides = array<i32>} : memref<4x8xf32, #tpu.memory_space<vmem>>, vector<4x8xf32>,
    return
  }
}

</mosaic_0001>

<llo_original>
// kernel: tpu_custom_call.1
$region0: #{tpu_custom_call.1}
  #allocation0 [shape = 'u32[]', space=smem, size = 0x4, offset = 0x4, fixed_abs, tag = 'smem constant byte address 0x4 - core index']
  #allocation1 [shape = 'u32[72,128]{1,0:T(1,128)}', space=vmem, size = 0x9000, scoped, tag = 'internal scratch']
  %s0 = inlined_call_operand.vmem [shape: f32[4,32], index: 0, kind: input, shape index: {}]
  %s1 = inlined_call_operand.hbm [shape: f32[8,4,15], index: 1, kind: input, shape index: {}]
  %s2 = inlined_call_operand.vmem [shape: f32[16,32], index: 2, kind: input, shape index: {}]
  %s3 = inlined_call_operand.hbm [shape: f32[32,64], index: 3, kind: input, shape index: {}]
  %s4 = inlined_call_operand.hbm [shape: f32[1,64], index: 4, kind: input, shape index: {}]
  %s5 = inlined_call_operand.vmem [shape: f32[64,64], index: 5, kind: input, shape index: {}]
  %s6 = inlined_call_operand.vmem [shape: f32[1,64], index: 6, kind: input, shape index: {}]
  %s7 = inlined_call_operand.hbm [shape: f32[32,128], index: 7, kind: input, shape index: {}]
  %s8 = inlined_call_operand.hbm [shape: f32[32,128], index: 8, kind: input, shape index: {}]
  %s9 = inlined_call_operand.vmem [shape: f32[1,128], index: 9, kind: input, shape index: {}]
  %s10 = inlined_call_operand.hbm [shape: f32[32,64], index: 10, kind: input, shape index: {}]
  %s11 = inlined_call_operand.vmem [shape: f32[1,64], index: 11, kind: input, shape index: {}]
  %s12 = inlined_call_operand.vmem [shape: f32[64,15], index: 12, kind: input, shape index: {}]
  %s13 = inlined_call_operand.vmem [shape: f32[1,15], index: 13, kind: input, shape index: {}]
  %s14 = inlined_call_operand.hbm [shape: s32[4,8], index: 14, kind: output, shape index: {0}]
  %s15 = inlined_call_operand.hbm [shape: f32[4,8], index: 15, kind: output, shape index: {1}]
  %s16 = inlined_call_operand.hbm [shape: f32[4,8], index: 16, kind: output, shape index: {2}]
  %17 = xla_tuple %s14, %s15, %s16
  %s18 = sld [smem:[#allocation0]]
  $region106: #{tpu_custom_call.1} parent=0
    _
  %s20 = ssub.s32 1, %s18
  %s21 = scalar_select 0, %s20, %s18
  $region1: #{tpu_custom_call.1} parent=0
    #allocation2 [shape = 'u8[16384]{0}', space=vmem, size = 0x4000, scoped, tag = 'input window, operand 1, single buffered']
    #allocation3 [shape = 's32[1]{0}', space=sflag, size = 0x4, scoped, tag = 'scoped memory for tpu_custom_call.1']
    #allocation4 [shape = 's32[1]{0}', space=sflag, size = 0x4, scoped, tag = 'scoped memory for tpu_custom_call.1']
    #allocation5 [shape = 'u8[16384]{0}', space=vmem, size = 0x4000, scoped, tag = 'input window, operand 3, single buffered']
    #allocation6 [shape = 's32[1]{0}', space=sflag, size = 0x4, scoped, tag = 'scoped memory for tpu_custom_call.1']
    #allocation7 [shape = 'u8[512]{0}', space=vmem, size = 0x400, scoped, tag = 'input window, operand 4, single buffered']
    #allocation8 [shape = 'u8[16384]{0}', space=vmem, size = 0x4000, scoped, tag = 'input window, operand 7, single buffered']
    #allocation9 [shape = 's32[1]{0}', space=sflag, size = 0x4, scoped, tag = 'scoped memory for tpu_custom_call.1']
    #allocation10 [shape = 'u8[16384]{0}', space=vmem, size = 0x4000, scoped, tag = 'input window, operand 8, single buffered']
    #allocation11 [shape = 'u8[16384]{0}', space=vmem, size = 0x4000, scoped, tag = 'input window, operand 10, single buffered']
    #allocation12 [shape = 's32[1]{0}', space=sflag, size = 0x4, scoped, tag = 'scoped memory for tpu_custom_call.1']
    #allocation13 [shape = 'u8[2048]{0}', space=vmem, size = 0x800, scoped, tag = 'output window, operand 0, single buffered']
    #allocation14 [shape = 'u8[2048]{0}', space=vmem, size = 0x800, scoped, tag = 'output window, operand 1, single buffered']
    #allocation15 [shape = 's32[1]{0}', space=sflag, size = 0x4, scoped, tag = 'scoped memory for tpu_custom_call.1']
    #allocation16 [shape = 'u8[2048]{0}', space=vmem, size = 0x800, scoped, tag = 'output window, operand 2, single buffered']
    %22 = vsyncpa [#allocation3], 0
    %23 = vsyncpa [#allocation6], 0
    %24 = vsyncpa [#allocation9], 0
    %25 = vsyncpa [#allocation12], 0
    %26 = vsyncpa [#allocation4], 0
    %27 = vsyncpa [#allocation15], 0
    // Predicated region
    $region2: #{tpu_custom_call.1} parent=1 // pred_check
      _
    $region3: #{tpu_custom_call.1} parent=1 // pred_check_branch
      %29 = sbr.rel (0) target = $region5
    $region4: #{tpu_custom_call.1} parent=1 // pred_region
      _
    $region5: #{tpu_custom_call.1} parent=1 // pred_fallthru
      _
    // Predicated region
    $region6: #{tpu_custom_call.1} parent=1 // pred_check
      _
    $region7: #{tpu_custom_call.1} parent=1 // pred_check_branch
      %31 = sbr.rel (0) target = $region9
    $region8: #{tpu_custom_call.1} parent=1 // pred_region
      %33 = vsyncadd [#allocation3], 0
      %s34 = sshll.u32 %s1, 4
      %s35 = int_to_ptr.hbm [resolvable:$true] %s34
      %s36 = sshll.u32 [#allocation2], 4
      %s37 = int_to_ptr.vmem [resolvable:$true] %s36
      %42 = dma.hbm_to_vmem [thread:$0]  %s35, 512, %s37, [#allocation3], 64, 64, 4
    $region9: #{tpu_custom_call.1} parent=1 // pred_fallthru
      _
    // Predicated region
    $region10: #{tpu_custom_call.1} parent=1 // pred_check
      _
    $region11: #{tpu_custom_call.1} parent=1 // pred_check_branch
      %44 = sbr.rel (0) target = $region13
    $region12: #{tpu_custom_call.1} parent=1 // pred_region
      _
    $region13: #{tpu_custom_call.1} parent=1 // pred_fallthru
      _
    // Predicated region
    $region14: #{tpu_custom_call.1} parent=1 // pred_check
      _
    $region15: #{tpu_custom_call.1} parent=1 // pred_check_branch
      %46 = sbr.rel (0) target = $region17
    $region16: #{tpu_custom_call.1} parent=1 // pred_region
      %48 = vsyncadd [#allocation6], 0
      %s49 = sshll.u32 %s3, 4
      %s50 = int_to_ptr.hbm [resolvable:$true] %s49
      %s51 = sshll.u32 [#allocation5], 4
      %s52 = int_to_ptr.vmem [resolvable:$true] %s51
      %57 = dma.hbm_to_vmem [thread:$0]  %s50, 512, %s52, [#allocation6], 128, 128, 8
    $region17: #{tpu_custom_call.1} parent=1 // pred_fallthru
      _
    // Predicated region
    $region18: #{tpu_custom_call.1} parent=1 // pred_check
      _
    $region19: #{tpu_custom_call.1} parent=1 // pred_check_branch
      %59 = sbr.rel (0) target = $region21
    $region20: #{tpu_custom_call.1} parent=1 // pred_region
      %61 = vsyncadd [#allocation6], 0
      %s63 = sshll.u32 %s4, 4
      %s64 = int_to_ptr.hbm [resolvable:$true] %s63
      %s65 = sshll.u32 [#allocation7], 4
      %s66 = int_to_ptr.vmem [resolvable:$true] %s65
      %68 = dma.hbm_to_vmem [thread:$0]  %s64, 16, %s66, [#allocation6]
    $region21: #{tpu_custom_call.1} parent=1 // pred_fallthru
      _
    // Predicated region
    $region22: #{tpu_custom_call.1} parent=1 // pred_check
      _
    $region23: #{tpu_custom_call.1} parent=1 // pred_check_branch
      %70 = sbr.rel (0) target = $region25
    $region24: #{tpu_custom_call.1} parent=1 // pred_region
      _
    $region25: #{tpu_custom_call.1} parent=1 // pred_fallthru
      _
    // Predicated region
    $region26: #{tpu_custom_call.1} parent=1 // pred_check
      _
    $region27: #{tpu_custom_call.1} parent=1 // pred_check_branch
      %72 = sbr.rel (0) target = $region29
    $region28: #{tpu_custom_call.1} parent=1 // pred_region
      _
    $region29: #{tpu_custom_call.1} parent=1 // pred_fallthru
      _
    // Predicated region
    $region30: #{tpu_custom_call.1} parent=1 // pred_check
      _
    $region31: #{tpu_custom_call.1} parent=1 // pred_check_branch
      %74 = sbr.rel (0) target = $region33
    $region32: #{tpu_custom_call.1} parent=1 // pred_region
      %76 = vsyncadd [#allocation9], 0
      %s77 = sshll.u32 %s7, 4
      %s78 = int_to_ptr.hbm [resolvable:$true] %s77
      %s79 = sshll.u32 [#allocation8], 4
      %s80 = int_to_ptr.vmem [resolvable:$true] %s79
      %85 = dma.hbm_to_vmem [thread:$0]  %s78, 512, %s80, [#allocation9], 128, 128, 8
    $region33: #{tpu_custom_call.1} parent=1 // pred_fallthru
      _
    // Predicated region
    $region34: #{tpu_custom_call.1} parent=1 // pred_check
      _
    $region35: #{tpu_custom_call.1} parent=1 // pred_check_branch
      %87 = sbr.rel (0) target = $region37
    $region36: #{tpu_custom_call.1} parent=1 // pred_region
      %89 = vsyncadd [#allocation9], 0
      %s90 = sshll.u32 %s8, 4
      %s91 = int_to_ptr.hbm [resolvable:$true] %s90
      %s92 = sshll.u32 [#allocation10], 4
      %s93 = int_to_ptr.vmem [resolvable:$true] %s92
      %98 = dma.hbm_to_vmem [thread:$0]  %s91, 512, %s93, [#allocation9], 128, 128, 8
    $region37: #{tpu_custom_call.1} parent=1 // pred_fallthru
      _
    // Predicated region
    $region38: #{tpu_custom_call.1} parent=1 // pred_check
      _
    $region39: #{tpu_custom_call.1} parent=1 // pred_check_branch
      %100 = sbr.rel (0) target = $region41
    $region40: #{tpu_custom_call.1} parent=1 // pred_region
      _
    $region41: #{tpu_custom_call.1} parent=1 // pred_fallthru
      _
    // Predicated region
    $region42: #{tpu_custom_call.1} parent=1 // pred_check
      _
    $region43: #{tpu_custom_call.1} parent=1 // pred_check_branch
      %102 = sbr.rel (0) target = $region45
    $region44: #{tpu_custom_call.1} parent=1 // pred_region
      %104 = vsyncadd [#allocation12], 0
      %s105 = sshll.u32 %s10, 4
      %s106 = int_to_ptr.hbm [resolvable:$true] %s105
      %s107 = sshll.u32 [#allocation11], 4
      %s108 = int_to_ptr.vmem [resolvable:$true] %s107
      %113 = dma.hbm_to_vmem [thread:$0]  %s106, 512, %s108, [#allocation12], 128, 128, 8
    $region45: #{tpu_custom_call.1} parent=1 // pred_fallthru
      _
    // Predicated region
    $region46: #{tpu_custom_call.1} parent=1 // pred_check
      _
    $region47: #{tpu_custom_call.1} parent=1 // pred_check_branch
      %115 = sbr.rel (0) target = $region49
    $region48: #{tpu_custom_call.1} parent=1 // pred_region
      _
    $region49: #{tpu_custom_call.1} parent=1 // pred_fallthru
      _
    // Predicated region
    $region50: #{tpu_custom_call.1} parent=1 // pred_check
      _
    $region51: #{tpu_custom_call.1} parent=1 // pred_check_branch
      %117 = sbr.rel (0) target = $region53
    $region52: #{tpu_custom_call.1} parent=1 // pred_region
      _
    $region53: #{tpu_custom_call.1} parent=1 // pred_fallthru
      _
    // Predicated region
    $region54: #{tpu_custom_call.1} parent=1 // pred_check
      _
    $region55: #{tpu_custom_call.1} parent=1 // pred_check_branch
      %119 = sbr.rel (0) target = $region57
    $region56: #{tpu_custom_call.1} parent=1 // pred_region
      _
    $region57: #{tpu_custom_call.1} parent=1 // pred_fallthru
      _
    // Predicated region
    $region58: #{tpu_custom_call.1} parent=1 // pred_check
      _
    $region59: #{tpu_custom_call.1} parent=1 // pred_check_branch
      %121 = sbr.rel (0) target = $region61
    $region60: #{tpu_custom_call.1} parent=1 // pred_region
      %123 = dma.done [#allocation3], 512
    $region61: #{tpu_custom_call.1} parent=1 // pred_fallthru
      _
    // Predicated region
    $region62: #{tpu_custom_call.1} parent=1 // pred_check
      _
    $region63: #{tpu_custom_call.1} parent=1 // pred_check_branch
      %125 = sbr.rel (0) target = $region65
    $region64: #{tpu_custom_call.1} parent=1 // pred_region
      %127 = dma.done [#allocation6], 512
    $region65: #{tpu_custom_call.1} parent=1 // pred_fallthru
      _
    // Predicated region
    $region66: #{tpu_custom_call.1} parent=1 // pred_check
      _
    $region67: #{tpu_custom_call.1} parent=1 // pred_check_branch
      %129 = sbr.rel (0) target = $region69
    $region68: #{tpu_custom_call.1} parent=1 // pred_region
      %131 = dma.done [#allocation6], 16
    $region69: #{tpu_custom_call.1} parent=1 // pred_fallthru
      _
    // Predicated region
    $region70: #{tpu_custom_call.1} parent=1 // pred_check
      _
    $region71: #{tpu_custom_call.1} parent=1 // pred_check_branch
      %133 = sbr.rel (0) target = $region73
    $region72: #{tpu_custom_call.1} parent=1 // pred_region
      %135 = dma.done [#allocation9], 512
    $region73: #{tpu_custom_call.1} parent=1 // pred_fallthru
      _
    // Predicated region
    $region74: #{tpu_custom_call.1} parent=1 // pred_check
      _
    $region75: #{tpu_custom_call.1} parent=1 // pred_check_branch
      %137 = sbr.rel (0) target = $region77
    $region76: #{tpu_custom_call.1} parent=1 // pred_region
      %139 = dma.done [#allocation9], 512
    $region77: #{tpu_custom_call.1} parent=1 // pred_fallthru
      _
    // Predicated region
    $region78: #{tpu_custom_call.1} parent=1 // pred_check
      _
    $region79: #{tpu_custom_call.1} parent=1 // pred_check_branch
      %141 = sbr.rel (0) target = $region81
    $region80: #{tpu_custom_call.1} parent=1 // pred_region
      %143 = dma.done [#allocation12], 512
    $region81: #{tpu_custom_call.1} parent=1 // pred_fallthru
      _
    %v144 = vld [vmem:[%s0] sm:$0xf]
    %v145 = vld [vmem:[#allocation5] sm:$0xff]
    %v146 = vld [vmem:[#allocation5 + $0x8] sm:$0xff]
    %v147 = vld [vmem:[#allocation5 + $0x10] sm:$0xff]
    %v148 = vld [vmem:[#allocation5 + $0x18] sm:$0xff]
    %v149 = vld [vmem:[#allocation7] sm:$0x1]
    %v151 = vperm.slane %v149, 0
    %vm153 = vcmask 261120
    %v155 = vsel %vm153, %v144, 0
    %157 = vmatpush.msra.mxu0 0.0
    %158 = vmatpush.msra.mxu0 0.0
    %159 = vmatpush.msra.mxu0 0.0
    %160 = vmatpush.msra.mxu0 0.0
    %161 = vmatpush.msra.mxu0 0.0
    %162 = vmatpush.msra.mxu0 0.0
    %163 = vmatpush.msra.mxu0 0.0
    %164 = vmatpush.msra.mxu0 0.0
    %165 = vmatpush.msra.mxu0 0.0
    %166 = vmatpush.msra.mxu0 0.0
    %167 = vmatpush.msra.mxu0 0.0
    %168 = vmatpush.msra.mxu0 0.0
    %169 = vmatpush.msra.mxu0 %v148
    %170 = vmatpush.msra.mxu0 %v147
    %171 = vmatpush.msra.mxu0 %v146
    %172 = vmatpush.msra.mxu0 %v145
    %173 = vmatmul.f32.gmra.mxu0 %v155
    %v174 = vpop.f32.mrf.mxu0
    %v175 = vadd.f32 %v151, %v174
    %176 = vdwg.mxu0
    %v177 = vmax.f32 %v175, 0.0
    %v178 = vld [vmem:[%s5] sm:$0xff]
    %v179 = vld [vmem:[%s5 + $0x8] sm:$0xff]
    %v180 = vld [vmem:[%s5 + $0x10] sm:$0xff]
    %v181 = vld [vmem:[%s5 + $0x18] sm:$0xff]
    %v182 = vld [vmem:[%s5 + $0x20] sm:$0xff]
    %v183 = vld [vmem:[%s5 + $0x28] sm:$0xff]
    %v184 = vld [vmem:[%s5 + $0x30] sm:$0xff]
    %v185 = vld [vmem:[%s5 + $0x38] sm:$0xff]
    %v186 = vld [vmem:[%s6] sm:$0x1]
    %v188 = vperm.slane %v186, 0
    %vm190 = vcmask 523264
    %v192 = vsel %vm190, %v177, 0
    %194 = vmatpush.msra.mxu0 0.0
    %195 = vmatpush.msra.mxu0 0.0
    %196 = vmatpush.msra.mxu0 0.0
    %197 = vmatpush.msra.mxu0 0.0
    %198 = vmatpush.msra.mxu0 0.0
    %199 = vmatpush.msra.mxu0 0.0
    %200 = vmatpush.msra.mxu0 0.0
    %201 = vmatpush.msra.mxu0 0.0
    %202 = vmatpush.msra.mxu0 %v185
    %203 = vmatpush.msra.mxu0 %v184
    %204 = vmatpush.msra.mxu0 %v183
    %205 = vmatpush.msra.mxu0 %v182
    %206 = vmatpush.msra.mxu0 %v181
    %207 = vmatpush.msra.mxu0 %v180
    %208 = vmatpush.msra.mxu0 %v179
    %209 = vmatpush.msra.mxu0 %v178
    %210 = vmatmul.f32.gmra.mxu0 %v192
    %v211 = vpop.f32.mrf.mxu0
    %v212 = vadd.f32 %v188, %v211
    %213 = vdwg.mxu0
    %vm214 = vcmp.gt.f32.partialorder %v212, 0.0
    %v215 = vmul.f32 %v212, 1.442695
    %v216 = vpow.pop %v215
    %v217 = vsub.f32 %v216, 1.0
    %v218 = vmul.f32 %v217, 0.1
    %v219 = vsel %vm214, %v212, %v218
    %v220 = vld [vmem:[%s2 + $0x1] sm:$0x1]
    %v221 = vperm.slane %v220, 0
    %v222 = vld [vmem:[%s2] sm:$0xff]
    %v223 = vld [vmem:[%s2 + $0x8] sm:$0xff]
    %v224 = vld [vmem:[#allocation8] sm:$0xff]
    %v225 = vld [vmem:[#allocation8 + $0x8] sm:$0xff]
    %v226 = vld [vmem:[#allocation8 + $0x10] sm:$0xff]
    %v227 = vld [vmem:[#allocation8 + $0x18] sm:$0xff]
    %v228 = vld [vmem:[#allocation10] sm:$0xff]
    %v229 = vld [vmem:[#allocation10 + $0x8] sm:$0xff]
    %v230 = vld [vmem:[#allocation10 + $0x10] sm:$0xff]
    %v231 = vld [vmem:[#allocation10 + $0x18] sm:$0xff]
    %v232 = vld [vmem:[#allocation11] sm:$0xff]
    %v233 = vld [vmem:[#allocation11 + $0x8] sm:$0xff]
    %v234 = vld [vmem:[#allocation11 + $0x10] sm:$0xff]
    %v235 = vld [vmem:[#allocation11 + $0x18] sm:$0xff]
    %v236 = vld [vmem:[%s12] sm:$0xff]
    %v237 = vld [vmem:[%s12 + $0x8] sm:$0xff]
    %v238 = vld [vmem:[%s12 + $0x10] sm:$0xff]
    %v239 = vld [vmem:[%s12 + $0x18] sm:$0xff]
    %v240 = vld [vmem:[%s12 + $0x20] sm:$0xff]
    %v241 = vld [vmem:[%s12 + $0x28] sm:$0xff]
    %v242 = vld [vmem:[%s12 + $0x30] sm:$0xff]
    %v243 = vld [vmem:[%s12 + $0x38] sm:$0xff]
    %v244 = vld [vmem:[%s9] sm:$0x1]
    %v246 = vperm.slane %v244, 0
    %v248 = vld [vmem:[%s11] sm:$0x1]
    %v250 = vperm.slane %v248, 0
    %v252 = vld [vmem:[%s13] sm:$0x1]
    %v254 = vperm.slane %v252, 0
    %v256 = vlaneseq
    %v257 = vand.u32 %v256, 127
    %v259 = vsel %vm153, %v219, 0
    %261 = vmatpush.msra.mxu0 0.0
    %262 = vmatpush.msra.mxu0 0.0
    %263 = vmatpush.msra.mxu0 0.0
    %264 = vmatpush.msra.mxu0 0.0
    %265 = vmatpush.msra.mxu0 0.0
    %266 = vmatpush.msra.mxu0 0.0
    %267 = vmatpush.msra.mxu0 0.0
    %268 = vmatpush.msra.mxu0 0.0
    %269 = vmatpush.msra.mxu0 0.0
    %270 = vmatpush.msra.mxu0 0.0
    %271 = vmatpush.msra.mxu0 0.0
    %272 = vmatpush.msra.mxu0 0.0
    %273 = vmatpush.msra.mxu0 %v231
    %274 = vmatpush.msra.mxu0 %v230
    %275 = vmatpush.msra.mxu0 %v229
    %276 = vmatpush.msra.mxu0 %v228
    %277 = vmatmul.f32.gmra.mxu0 %v259
    %v278 = vpop.f32.mrf.mxu0
    %v279 = vadd.f32 0.0, %v278
    %280 = vdwg.mxu0
    %v282 = vsel %vm153, %v221, 0
    %284 = vmatpush.msra.mxu0 0.0
    %285 = vmatpush.msra.mxu0 0.0
    %286 = vmatpush.msra.mxu0 0.0
    %287 = vmatpush.msra.mxu0 0.0
    %288 = vmatpush.msra.mxu0 0.0
    %289 = vmatpush.msra.mxu0 0.0
    %290 = vmatpush.msra.mxu0 0.0
    %291 = vmatpush.msra.mxu0 0.0
    %292 = vmatpush.msra.mxu0 0.0
    %293 = vmatpush.msra.mxu0 0.0
    %294 = vmatpush.msra.mxu0 0.0
    %295 = vmatpush.msra.mxu0 0.0
    %296 = vmatpush.msra.mxu0 %v227
    %297 = vmatpush.msra.mxu0 %v226
    %298 = vmatpush.msra.mxu0 %v225
    %299 = vmatpush.msra.mxu0 %v224
    %300 = vmatmul.f32.gmra.mxu0 %v282
    %v301 = vpop.f32.mrf.mxu0
    %v302 = vadd.f32 %v279, %v301
    %303 = vdwg.mxu0
    %v304 = vadd.f32 %v302, %v246
    %v305 = vxor.u32 %v304, 2147483648
    %v306 = vmul.f32 %v305, 1.442695
    %v307 = vpow.pop %v306
    %v308 = vadd.f32 %v307, 1.0
    %v309 = vrcp.pop %v308
    %v310 = vmul.f32 %v308, %v309
    %v311 = vsub.f32 1.0, %v310
    %v312 = vmul.f32 %v309, %v311
    %v313 = vadd.f32 %v309, %v312
    %vm314 = vweird.f32 %v308
    %vm315 = vweird.f32 %v309
    %vm316 = vmor %vm314, %vm315
    %v317 = vsel %vm316, %v309, %v313
    %v318 = vand.u32 2147483647, %v308
    %vm319 = vcmp.eq.f32.partialorder %v318, 8.507059e+37
    %v320 = vand.u32 %v308, 2147483648
    %v321 = vor.u32 1.1754944e-38, %v320
    %v322 = vsel %vm319, %v321, %v317
    %v323 = vmul.f32 1.0, %v322
    %v324 = vtanh.pop %v304
    %v325 = vmul.f32 %v323, %v219
    %327 = vrot.lane.b32.xlu0 %v324, 64
    %v328 = vpop.permute.xlu0 %327
    %v330 = vmul.f32 %v323, %v328
    %332 = vrot.lane.b32.xlu0 %v330, 32
    %v333 = vpop.permute.xlu0 %332
    %v335 = vadd.f32 %v325, %v333
    %v336 = vtanh.pop %v335
    %338 = vrot.lane.b32.xlu0 %v336, 64
    %v339 = vpop.permute.xlu0 %338
    %v341 = vmul.f32 %v323, %v339
    %v342 = vmax.f32 %v341, 0.0
    %344 = vrot.lane.b32.xlu0 %v342, 32
    %v345 = vpop.permute.xlu0 %344
    %v346 = vsel %vm153, %v345, 0
    %348 = vmatpush.msra.mxu0 0.0
    %349 = vmatpush.msra.mxu0 0.0
    %350 = vmatpush.msra.mxu0 0.0
    %351 = vmatpush.msra.mxu0 0.0
    %352 = vmatpush.msra.mxu0 0.0
    %353 = vmatpush.msra.mxu0 0.0
    %354 = vmatpush.msra.mxu0 0.0
    %355 = vmatpush.msra.mxu0 0.0
    %356 = vmatpush.msra.mxu0 0.0
    %357 = vmatpush.msra.mxu0 0.0
    %358 = vmatpush.msra.mxu0 0.0
    %359 = vmatpush.msra.mxu0 0.0
    %360 = vmatpush.msra.mxu0 %v235
    %361 = vmatpush.msra.mxu0 %v234
    %362 = vmatpush.msra.mxu0 %v233
    %363 = vmatpush.msra.mxu0 %v232
    %364 = vmatmul.f32.gmra.mxu0 %v346
    %v365 = vpop.f32.mrf.mxu0
    %v366 = vadd.f32 %v250, %v365
    %367 = vdwg.mxu0
    %v368 = vmax.f32 %v366, 0.0
    %v370 = vsel %vm190, %v368, 0
    %372 = vmatpush.msra.mxu0 0.0
    %373 = vmatpush.msra.mxu0 0.0
    %374 = vmatpush.msra.mxu0 0.0
    %375 = vmatpush.msra.mxu0 0.0
    %376 = vmatpush.msra.mxu0 0.0
    %377 = vmatpush.msra.mxu0 0.0
    %378 = vmatpush.msra.mxu0 0.0
    %379 = vmatpush.msra.mxu0 0.0
    %380 = vmatpush.msra.mxu0 %v243
    %381 = vmatpush.msra.mxu0 %v242
    %382 = vmatpush.msra.mxu0 %v241
    %383 = vmatpush.msra.mxu0 %v240
    %384 = vmatpush.msra.mxu0 %v239
    %385 = vmatpush.msra.mxu0 %v238
    %386 = vmatpush.msra.mxu0 %v237
    %387 = vmatpush.msra.mxu0 %v236
    %388 = vmatmul.f32.gmra.mxu0 %v370
    %v389 = vpop.f32.mrf.mxu0
    %v390 = vadd.f32 %v254, %v389
    %391 = vdwg.mxu0
    %vm392 = vcmask 117760
    %v393 = vsel %vm392, %v390, -inf
    %394 = vmax.xlane.f32.xlu0 %v393
    %v395 = vpop.xlane.xlu0 %394
    %v396 = vsub.f32 %v390, %v395
    %v397 = vmul.f32 %v396, 1.442695
    %v398 = vpow.pop %v397
    %v399 = vsel %vm392, %v398, 0.0
    %400 = vadd.xlane.f32.xlu0 %v399
    %v401 = vpop.xlane.xlu0 %400
    %v402 = vlog2.pop %v401
    %v403 = vmul.f32 %v402, 0.6931472
    %v404 = vadd.f32 %v403, %v395
    %v405 = vsub.f32 %v390, %v404
    %v406 = vrcp.pop %v401
    %v407 = vmul.f32 %v401, %v406
    %v408 = vsub.f32 1.0, %v407
    %v409 = vmul.f32 %v406, %v408
    %v410 = vadd.f32 %v406, %v409
    %vm411 = vweird.f32 %v401
    %vm412 = vweird.f32 %v406
    %vm413 = vmor %vm411, %vm412
    %v414 = vsel %vm413, %v406, %v410
    %v415 = vand.u32 2147483647, %v401
    %vm416 = vcmp.eq.f32.partialorder %v415, 8.507059e+37
    %v417 = vand.u32 %v401, 2147483648
    %v418 = vor.u32 1.1754944e-38, %v417
    %v419 = vsel %vm416, %v418, %v414
    %v420 = vmul.f32 %v398, %v419
    %v421 = vmul.f32 %v420, %v405
    %v422 = vsel %vm392, %v421, 0.0
    %423 = vadd.xlane.f32.xlu0 %v422
    %v424 = vpop.xlane.xlu0 %423
    %v425 = vsub.f32 0.0, %v424
    %v426 = vld [vmem:[#allocation2] sm:$0xf]
    %v427 = vadd.f32 %v390, %v426
    %v428 = vsel %vm392, %v427, -inf
    %429 = vmax.xlane.f32.xlu0 %v428
    %v430 = vpop.xlane.xlu0 %429
    %vm431 = vcmp.ge.f32.partialorder %v427, %v430
    %v432 = vsel %vm431, %v257, 15
    %v433 = vsel %vm392, %v432, 2147483647
    %v434 = vand.u32 %v433, 65535
    %v435 = vshra.s32 %v433, 16
    %v436 = vcvt.s32.f32 %v434
    %v437 = vcvt.s32.f32 %v435
    %438 = vmin.xlane.f32.xlu0 %v437
    %v439 = vpop.xlane.xlu0 %438
    %vm440 = vcmp.eq.f32.partialorder %v437, %v439
    %v441 = vsel %vm440, %v436, inf
    %442 = vmin.xlane.f32.xlu0 %v441
    %v443 = vpop.xlane.xlu0 %442
    %v444 = vcvt.f32.s32 %v443
    %v445 = vcvt.f32.s32 %v439
    %v446 = vshll.u32 %v445, 16
    %v447 = vadd.s32 %v446, %v444
    %vm448 = vcmp.eq.s32.totalorder %v257, %v447
    %v449 = vsel %vm448, 1, 0
    %v450 = vcvt.s32.f32 %v449
    %v451 = vmul.f32 %v405, %v450
    %v452 = vsel %vm392, %v451, 0.0
    %453 = vadd.xlane.f32.xlu0 %v452
    %v454 = vpop.xlane.xlu0 %453
    %vm455 = vcmp.eq.s32.totalorder %v257, 0
    %v456 = vsel %vm455, %v447, 0
    %v457 = vsel %vm455, %v454, 0.0
    %v458 = vsel %vm455, %v425, 0.0
    %vm459 = vcmask 130048
    %v461 = vsel %vm459, %v450, 0
    %463 = vmatpush.msra.mxu0 0.0
    %464 = vmatpush.msra.mxu0 0.0
    %465 = vmatpush.msra.mxu0 0.0
    %466 = vmatpush.msra.mxu0 0.0
    %467 = vmatpush.msra.mxu0 0.0
    %468 = vmatpush.msra.mxu0 0.0
    %469 = vmatpush.msra.mxu0 0.0
    %470 = vmatpush.msra.mxu0 0.0
    %471 = vmatpush.msra.mxu0 0.0
    %472 = vmatpush.msra.mxu0 0.0
    %473 = vmatpush.msra.mxu0 0.0
    %474 = vmatpush.msra.mxu0 0.0
    %475 = vmatpush.msra.mxu0 0.0
    %476 = vmatpush.msra.mxu0 0.0
    %477 = vmatpush.msra.mxu0 %v223
    %478 = vmatpush.msra.mxu0 %v222
    %479 = vmatmul.f32.gmra.mxu0 %v461
    %v480 = vpop.f32.mrf.mxu0
    %v481 = vadd.f32 0.0, %v480
    %482 = vdwg.mxu0
    %484 = vrot.lane.b32.xlu0 %v341, 32
    %v485 = vpop.permute.xlu0 %484
    %v486 = vsel %vm153, %v485, 0
    %488 = vmatpush.msra.mxu0 0.0
    %489 = vmatpush.msra.mxu0 0.0
    %490 = vmatpush.msra.mxu0 0.0
    %491 = vmatpush.msra.mxu0 0.0
    %492 = vmatpush.msra.mxu0 0.0
    %493 = vmatpush.msra.mxu0 0.0
    %494 = vmatpush.msra.mxu0 0.0
    %495 = vmatpush.msra.mxu0 0.0
    %496 = vmatpush.msra.mxu0 0.0
    %497 = vmatpush.msra.mxu0 0.0
    %498 = vmatpush.msra.mxu0 0.0
    %499 = vmatpush.msra.mxu0 0.0
    %500 = vmatpush.msra.mxu0 %v231
    %501 = vmatpush.msra.mxu0 %v230
    %502 = vmatpush.msra.mxu0 %v229
    %503 = vmatpush.msra.mxu0 %v228
    %504 = vmatmul.f32.gmra.mxu0 %v486
    %v505 = vpop.f32.mrf.mxu0
    %v506 = vadd.f32 0.0, %v505
    %507 = vdwg.mxu0
    %v509 = vsel %vm153, %v481, 0
    %511 = vmatpush.msra.mxu0 0.0
    %512 = vmatpush.msra.mxu0 0.0
    %513 = vmatpush.msra.mxu0 0.0
    %514 = vmatpush.msra.mxu0 0.0
    %515 = vmatpush.msra.mxu0 0.0
    %516 = vmatpush.msra.mxu0 0.0
    %517 = vmatpush.msra.mxu0 0.0
    %518 = vmatpush.msra.mxu0 0.0
    %519 = vmatpush.msra.mxu0 0.0
    %520 = vmatpush.msra.mxu0 0.0
    %521 = vmatpush.msra.mxu0 0.0
    %522 = vmatpush.msra.mxu0 0.0
    %523 = vmatpush.msra.mxu0 %v227
    %524 = vmatpush.msra.mxu0 %v226
    %525 = vmatpush.msra.mxu0 %v225
    %526 = vmatpush.msra.mxu0 %v224
    %527 = vmatmul.f32.gmra.mxu0 %v509
    %v528 = vpop.f32.mrf.mxu0
    %v529 = vadd.f32 %v506, %v528
    %530 = vdwg.mxu0
    %v531 = vadd.f32 %v529, %v246
    %v532 = vxor.u32 %v531, 2147483648
    %v533 = vmul.f32 %v532, 1.442695
    %v534 = vpow.pop %v533
    %v535 = vadd.f32 %v534, 1.0
    %v536 = vrcp.pop %v535
    %v537 = vmul.f32 %v535, %v536
    %v538 = vsub.f32 1.0, %v537
    %v539 = vmul.f32 %v536, %v538
    %v540 = vadd.f32 %v536, %v539
    %vm541 = vweird.f32 %v535
    %vm542 = vweird.f32 %v536
    %vm543 = vmor %vm541, %vm542
    %v544 = vsel %vm543, %v536, %v540
    %v545 = vand.u32 2147483647, %v535
    %vm546 = vcmp.eq.f32.partialorder %v545, 8.507059e+37
    %v547 = vand.u32 %v535, 2147483648
    %v548 = vor.u32 1.1754944e-38, %v547
    %v549 = vsel %vm546, %v548, %v544
    %v550 = vmul.f32 1.0, %v549
    %v551 = vtanh.pop %v531
    %v552 = vmul.f32 %v550, %v335
    %554 = vrot.lane.b32.xlu0 %v551, 64
    %v555 = vpop.permute.xlu0 %554
    %v557 = vmul.f32 %v550, %v555
    %559 = vrot.lane.b32.xlu0 %v557, 32
    %v560 = vpop.permute.xlu0 %559
    %v562 = vadd.f32 %v552, %v560
    %v563 = vtanh.pop %v562
    %565 = vrot.lane.b32.xlu0 %v563, 64
    %v566 = vpop.permute.xlu0 %565
    %v568 = vmul.f32 %v550, %v566
    %v569 = vmax.f32 %v568, 0.0
    %571 = vrot.lane.b32.xlu0 %v569, 32
    %v572 = vpop.permute.xlu0 %571
    %v573 = vsel %vm153, %v572, 0
    %575 = vmatpush.msra.mxu0 0.0
    %576 = vmatpush.msra.mxu0 0.0
    %577 = vmatpush.msra.mxu0 0.0
    %578 = vmatpush.msra.mxu0 0.0
    %579 = vmatpush.msra.mxu0 0.0
    %580 = vmatpush.msra.mxu0 0.0
    %581 = vmatpush.msra.mxu0 0.0
    %582 = vmatpush.msra.mxu0 0.0
    %583 = vmatpush.msra.mxu0 0.0
    %584 = vmatpush.msra.mxu0 0.0
    %585 = vmatpush.msra.mxu0 0.0
    %586 = vmatpush.msra.mxu0 0.0
    %587 = vmatpush.msra.mxu0 %v235
    %588 = vmatpush.msra.mxu0 %v234
    %589 = vmatpush.msra.mxu0 %v233
    %590 = vmatpush.msra.mxu0 %v232
    %591 = vmatmul.f32.gmra.mxu0 %v573
    %v592 = vpop.f32.mrf.mxu0
    %v593 = vadd.f32 %v250, %v592
    %594 = vdwg.mxu0
    %v595 = vmax.f32 %v593, 0.0
    %v597 = vsel %vm190, %v595, 0
    %599 = vmatpush.msra.mxu0 0.0
    %600 = vmatpush.msra.mxu0 0.0
    %601 = vmatpush.msra.mxu0 0.0
    %602 = vmatpush.msra.mxu0 0.0
    %603 = vmatpush.msra.mxu0 0.0
    %604 = vmatpush.msra.mxu0 0.0
    %605 = vmatpush.msra.mxu0 0.0
    %606 = vmatpush.msra.mxu0 0.0
    %607 = vmatpush.msra.mxu0 %v243
    %608 = vmatpush.msra.mxu0 %v242
    %609 = vmatpush.msra.mxu0 %v241
    %610 = vmatpush.msra.mxu0 %v240
    %611 = vmatpush.msra.mxu0 %v239
    %612 = vmatpush.msra.mxu0 %v238
    %613 = vmatpush.msra.mxu0 %v237
    %614 = vmatpush.msra.mxu0 %v236
    %615 = vmatmul.f32.gmra.mxu0 %v597
    %v616 = vpop.f32.mrf.mxu0
    %v617 = vadd.f32 %v254, %v616
    %618 = vdwg.mxu0
    %v619 = vsel %vm392, %v617, -inf
    %620 = vmax.xlane.f32.xlu0 %v619
    %v621 = vpop.xlane.xlu0 %620
    %v622 = vsub.f32 %v617, %v621
    %v623 = vmul.f32 %v622, 1.442695
    %v624 = vpow.pop %v623
    %v625 = vsel %vm392, %v624, 0.0
    %626 = vadd.xlane.f32.xlu0 %v625
    %v627 = vpop.xlane.xlu0 %626
    %v628 = vlog2.pop %v627
    %v629 = vmul.f32 %v628, 0.6931472
    %v630 = vadd.f32 %v629, %v621
    %v631 = vsub.f32 %v617, %v630
    %v632 = vrcp.pop %v627
    %v633 = vmul.f32 %v627, %v632
    %v634 = vsub.f32 1.0, %v633
    %v635 = vmul.f32 %v632, %v634
    %v636 = vadd.f32 %v632, %v635
    %vm637 = vweird.f32 %v627
    %vm638 = vweird.f32 %v632
    %vm639 = vmor %vm637, %vm638
    %v640 = vsel %vm639, %v632, %v636
    %v641 = vand.u32 2147483647, %v627
    %vm642 = vcmp.eq.f32.partialorder %v641, 8.507059e+37
    %v643 = vand.u32 %v627, 2147483648
    %v644 = vor.u32 1.1754944e-38, %v643
    %v645 = vsel %vm642, %v644, %v640
    %v646 = vmul.f32 %v624, %v645
    %v647 = vmul.f32 %v646, %v631
    %v648 = vsel %vm392, %v647, 0.0
    %649 = vadd.xlane.f32.xlu0 %v648
    %v650 = vpop.xlane.xlu0 %649
    %v651 = vsub.f32 0.0, %v650
    %s652 = scalar_lea.vmem [#allocation2], 4
    %v653 = vld [vmem:[%s652] sm:$0xf]
    %v654 = vadd.f32 %v617, %v653
    %v655 = vsel %vm392, %v654, -inf
    %656 = vmax.xlane.f32.xlu0 %v655
    %v657 = vpop.xlane.xlu0 %656
    %vm658 = vcmp.ge.f32.partialorder %v654, %v657
    %v659 = vsel %vm658, %v257, 15
    %v660 = vsel %vm392, %v659, 2147483647
    %v661 = vand.u32 %v660, 65535
    %v662 = vshra.s32 %v660, 16
    %v663 = vcvt.s32.f32 %v661
    %v664 = vcvt.s32.f32 %v662
    %665 = vmin.xlane.f32.xlu0 %v664
    %v666 = vpop.xlane.xlu0 %665
    %vm667 = vcmp.eq.f32.partialorder %v664, %v666
    %v668 = vsel %vm667, %v663, inf
    %669 = vmin.xlane.f32.xlu0 %v668
    %v670 = vpop.xlane.xlu0 %669
    %v671 = vcvt.f32.s32 %v670
    %v672 = vcvt.f32.s32 %v666
    %v673 = vshll.u32 %v672, 16
    %v674 = vadd.s32 %v673, %v671
    %vm675 = vcmp.eq.s32.totalorder %v257, %v674
    %v676 = vsel %vm675, 1, 0
    %v677 = vcvt.s32.f32 %v676
    %v678 = vmul.f32 %v631, %v677
    %v679 = vsel %vm392, %v678, 0.0
    %680 = vadd.xlane.f32.xlu0 %v679
    %v681 = vpop.xlane.xlu0 %680
    %vm682 = vcmp.eq.s32.totalorder %v257, 1
    %v683 = vsel %vm682, %v674, %v456
    %v684 = vsel %vm682, %v681, %v457
    %v685 = vsel %vm682, %v651, %v458
    %v687 = vsel %vm459, %v677, 0
    %689 = vmatpush.msra.mxu0 0.0
    %690 = vmatpush.msra.mxu0 0.0
    %691 = vmatpush.msra.mxu0 0.0
    %692 = vmatpush.msra.mxu0 0.0
    %693 = vmatpush.msra.mxu0 0.0
    %694 = vmatpush.msra.mxu0 0.0
    %695 = vmatpush.msra.mxu0 0.0
    %696 = vmatpush.msra.mxu0 0.0
    %697 = vmatpush.msra.mxu0 0.0
    %698 = vmatpush.msra.mxu0 0.0
    %699 = vmatpush.msra.mxu0 0.0
    %700 = vmatpush.msra.mxu0 0.0
    %701 = vmatpush.msra.mxu0 0.0
    %702 = vmatpush.msra.mxu0 0.0
    %703 = vmatpush.msra.mxu0 %v223
    %704 = vmatpush.msra.mxu0 %v222
    %705 = vmatmul.f32.gmra.mxu0 %v687
    %v706 = vpop.f32.mrf.mxu0
    %v707 = vadd.f32 0.0, %v706
    %708 = vdwg.mxu0
    %710 = vrot.lane.b32.xlu0 %v568, 32
    %v711 = vpop.permute.xlu0 %710
    %v712 = vsel %vm153, %v711, 0
    %714 = vmatpush.msra.mxu0 0.0
    %715 = vmatpush.msra.mxu0 0.0
    %716 = vmatpush.msra.mxu0 0.0
    %717 = vmatpush.msra.mxu0 0.0
    %718 = vmatpush.msra.mxu0 0.0
    %719 = vmatpush.msra.mxu0 0.0
    %720 = vmatpush.msra.mxu0 0.0
    %721 = vmatpush.msra.mxu0 0.0
    %722 = vmatpush.msra.mxu0 0.0
    %723 = vmatpush.msra.mxu0 0.0
    %724 = vmatpush.msra.mxu0 0.0
    %725 = vmatpush.msra.mxu0 0.0
    %726 = vmatpush.msra.mxu0 %v231
    %727 = vmatpush.msra.mxu0 %v230
    %728 = vmatpush.msra.mxu0 %v229
    %729 = vmatpush.msra.mxu0 %v228
    %730 = vmatmul.f32.gmra.mxu0 %v712
    %v731 = vpop.f32.mrf.mxu0
    %v732 = vadd.f32 0.0, %v731
    %733 = vdwg.mxu0
    %v735 = vsel %vm153, %v707, 0
    %737 = vmatpush.msra.mxu0 0.0
    %738 = vmatpush.msra.mxu0 0.0
    %739 = vmatpush.msra.mxu0 0.0
    %740 = vmatpush.msra.mxu0 0.0
    %741 = vmatpush.msra.mxu0 0.0
    %742 = vmatpush.msra.mxu0 0.0
    %743 = vmatpush.msra.mxu0 0.0
    %744 = vmatpush.msra.mxu0 0.0
    %745 = vmatpush.msra.mxu0 0.0
    %746 = vmatpush.msra.mxu0 0.0
    %747 = vmatpush.msra.mxu0 0.0
    %748 = vmatpush.msra.mxu0 0.0
    %749 = vmatpush.msra.mxu0 %v227
    %750 = vmatpush.msra.mxu0 %v226
    %751 = vmatpush.msra.mxu0 %v225
    %752 = vmatpush.msra.mxu0 %v224
    %753 = vmatmul.f32.gmra.mxu0 %v735
    %v754 = vpop.f32.mrf.mxu0
    %v755 = vadd.f32 %v732, %v754
    %756 = vdwg.mxu0
    %v757 = vadd.f32 %v755, %v246
    %v758 = vxor.u32 %v757, 2147483648
    %v759 = vmul.f32 %v758, 1.442695
    %v760 = vpow.pop %v759
    %v761 = vadd.f32 %v760, 1.0
    %v762 = vrcp.pop %v761
    %v763 = vmul.f32 %v761, %v762
    %v764 = vsub.f32 1.0, %v763
    %v765 = vmul.f32 %v762, %v764
    %v766 = vadd.f32 %v762, %v765
    %vm767 = vweird.f32 %v761
    %vm768 = vweird.f32 %v762
    %vm769 = vmor %vm767, %vm768
    %v770 = vsel %vm769, %v762, %v766
    %v771 = vand.u32 2147483647, %v761
    %vm772 = vcmp.eq.f32.partialorder %v771, 8.507059e+37
    %v773 = vand.u32 %v761, 2147483648
    %v774 = vor.u32 1.1754944e-38, %v773
    %v775 = vsel %vm772, %v774, %v770
    %v776 = vmul.f32 1.0, %v775
    %v777 = vtanh.pop %v757
    %v778 = vmul.f32 %v776, %v562
    %780 = vrot.lane.b32.xlu0 %v777, 64
    %v781 = vpop.permute.xlu0 %780
    %v783 = vmul.f32 %v776, %v781
    %785 = vrot.lane.b32.xlu0 %v783, 32
    %v786 = vpop.permute.xlu0 %785
    %v788 = vadd.f32 %v778, %v786
    %v789 = vtanh.pop %v788
    %791 = vrot.lane.b32.xlu0 %v789, 64
    %v792 = vpop.permute.xlu0 %791
    %v794 = vmul.f32 %v776, %v792
    %v795 = vmax.f32 %v794, 0.0
    %797 = vrot.lane.b32.xlu0 %v795, 32
    %v798 = vpop.permute.xlu0 %797
    %v799 = vsel %vm153, %v798, 0
    %801 = vmatpush.msra.mxu0 0.0
    %802 = vmatpush.msra.mxu0 0.0
    %803 = vmatpush.msra.mxu0 0.0
    %804 = vmatpush.msra.mxu0 0.0
    %805 = vmatpush.msra.mxu0 0.0
    %806 = vmatpush.msra.mxu0 0.0
    %807 = vmatpush.msra.mxu0 0.0
    %808 = vmatpush.msra.mxu0 0.0
    %809 = vmatpush.msra.mxu0 0.0
    %810 = vmatpush.msra.mxu0 0.0
    %811 = vmatpush.msra.mxu0 0.0
    %812 = vmatpush.msra.mxu0 0.0
    %813 = vmatpush.msra.mxu0 %v235
    %814 = vmatpush.msra.mxu0 %v234
    %815 = vmatpush.msra.mxu0 %v233
    %816 = vmatpush.msra.mxu0 %v232
    %817 = vmatmul.f32.gmra.mxu0 %v799
    %v818 = vpop.f32.mrf.mxu0
    %v819 = vadd.f32 %v250, %v818
    %820 = vdwg.mxu0
    %v821 = vmax.f32 %v819, 0.0
    %v823 = vsel %vm190, %v821, 0
    %825 = vmatpush.msra.mxu0 0.0
    %826 = vmatpush.msra.mxu0 0.0
    %827 = vmatpush.msra.mxu0 0.0
    %828 = vmatpush.msra.mxu0 0.0
    %829 = vmatpush.msra.mxu0 0.0
    %830 = vmatpush.msra.mxu0 0.0
    %831 = vmatpush.msra.mxu0 0.0
    %832 = vmatpush.msra.mxu0 0.0
    %833 = vmatpush.msra.mxu0 %v243
    %834 = vmatpush.msra.mxu0 %v242
    %835 = vmatpush.msra.mxu0 %v241
    %836 = vmatpush.msra.mxu0 %v240
    %837 = vmatpush.msra.mxu0 %v239
    %838 = vmatpush.msra.mxu0 %v238
    %839 = vmatpush.msra.mxu0 %v237
    %840 = vmatpush.msra.mxu0 %v236
    %841 = vmatmul.f32.gmra.mxu0 %v823
    %v842 = vpop.f32.mrf.mxu0
    %v843 = vadd.f32 %v254, %v842
    %844 = vdwg.mxu0
    %v845 = vsel %vm392, %v843, -inf
    %846 = vmax.xlane.f32.xlu0 %v845
    %v847 = vpop.xlane.xlu0 %846
    %v848 = vsub.f32 %v843, %v847
    %v849 = vmul.f32 %v848, 1.442695
    %v850 = vpow.pop %v849
    %v851 = vsel %vm392, %v850, 0.0
    %852 = vadd.xlane.f32.xlu0 %v851
    %v853 = vpop.xlane.xlu0 %852
    %v854 = vlog2.pop %v853
    %v855 = vmul.f32 %v854, 0.6931472
    %v856 = vadd.f32 %v855, %v847
    %v857 = vsub.f32 %v843, %v856
    %v858 = vrcp.pop %v853
    %v859 = vmul.f32 %v853, %v858
    %v860 = vsub.f32 1.0, %v859
    %v861 = vmul.f32 %v858, %v860
    %v862 = vadd.f32 %v858, %v861
    %vm863 = vweird.f32 %v853
    %vm864 = vweird.f32 %v858
    %vm865 = vmor %vm863, %vm864
    %v866 = vsel %vm865, %v858, %v862
    %v867 = vand.u32 2147483647, %v853
    %vm868 = vcmp.eq.f32.partialorder %v867, 8.507059e+37
    %v869 = vand.u32 %v853, 2147483648
    %v870 = vor.u32 1.1754944e-38, %v869
    %v871 = vsel %vm868, %v870, %v866
    %v872 = vmul.f32 %v850, %v871
    %v873 = vmul.f32 %v872, %v857
    %v874 = vsel %vm392, %v873, 0.0
    %875 = vadd.xlane.f32.xlu0 %v874
    %v876 = vpop.xlane.xlu0 %875
    %v877 = vsub.f32 0.0, %v876
    %s878 = scalar_lea.vmem [#allocation2], 8
    %v879 = vld [vmem:[%s878] sm:$0xf]
    %v880 = vadd.f32 %v843, %v879
    %v881 = vsel %vm392, %v880, -inf
    %882 = vmax.xlane.f32.xlu0 %v881
    %v883 = vpop.xlane.xlu0 %882
    %vm884 = vcmp.ge.f32.partialorder %v880, %v883
    %v885 = vsel %vm884, %v257, 15
    %v886 = vsel %vm392, %v885, 2147483647
    %v887 = vand.u32 %v886, 65535
    %v888 = vshra.s32 %v886, 16
    %v889 = vcvt.s32.f32 %v887
    %v890 = vcvt.s32.f32 %v888
    %891 = vmin.xlane.f32.xlu0 %v890
    %v892 = vpop.xlane.xlu0 %891
    %vm893 = vcmp.eq.f32.partialorder %v890, %v892
    %v894 = vsel %vm893, %v889, inf
    %895 = vmin.xlane.f32.xlu0 %v894
    %v896 = vpop.xlane.xlu0 %895
    %v897 = vcvt.f32.s32 %v896
    %v898 = vcvt.f32.s32 %v892
    %v899 = vshll.u32 %v898, 16
    %v900 = vadd.s32 %v899, %v897
    %vm901 = vcmp.eq.s32.totalorder %v257, %v900
    %v902 = vsel %vm901, 1, 0
    %v903 = vcvt.s32.f32 %v902
    %v904 = vmul.f32 %v857, %v903
    %v905 = vsel %vm392, %v904, 0.0
    %906 = vadd.xlane.f32.xlu0 %v905
    %v907 = vpop.xlane.xlu0 %906
    %vm908 = vcmp.eq.s32.totalorder %v257, 2
    %v909 = vsel %vm908, %v900, %v683
    %v910 = vsel %vm908, %v907, %v684
    %v911 = vsel %vm908, %v877, %v685
    %v913 = vsel %vm459, %v903, 0
    %915 = vmatpush.msra.mxu0 0.0
    %916 = vmatpush.msra.mxu0 0.0
    %917 = vmatpush.msra.mxu0 0.0
    %918 = vmatpush.msra.mxu0 0.0
    %919 = vmatpush.msra.mxu0 0.0
    %920 = vmatpush.msra.mxu0 0.0
    %921 = vmatpush.msra.mxu0 0.0
    %922 = vmatpush.msra.mxu0 0.0
    %923 = vmatpush.msra.mxu0 0.0
    %924 = vmatpush.msra.mxu0 0.0
    %925 = vmatpush.msra.mxu0 0.0
    %926 = vmatpush.msra.mxu0 0.0
    %927 = vmatpush.msra.mxu0 0.0
    %928 = vmatpush.msra.mxu0 0.0
    %929 = vmatpush.msra.mxu0 %v223
    %930 = vmatpush.msra.mxu0 %v222
    %931 = vmatmul.f32.gmra.mxu0 %v913
    %v932 = vpop.f32.mrf.mxu0
    %v933 = vadd.f32 0.0, %v932
    %934 = vdwg.mxu0
    %936 = vrot.lane.b32.xlu0 %v794, 32
    %v937 = vpop.permute.xlu0 %936
    %v938 = vsel %vm153, %v937, 0
    %940 = vmatpush.msra.mxu0 0.0
    %941 = vmatpush.msra.mxu0 0.0
    %942 = vmatpush.msra.mxu0 0.0
    %943 = vmatpush.msra.mxu0 0.0
    %944 = vmatpush.msra.mxu0 0.0
    %945 = vmatpush.msra.mxu0 0.0
    %946 = vmatpush.msra.mxu0 0.0
    %947 = vmatpush.msra.mxu0 0.0
    %948 = vmatpush.msra.mxu0 0.0
    %949 = vmatpush.msra.mxu0 0.0
    %950 = vmatpush.msra.mxu0 0.0
    %951 = vmatpush.msra.mxu0 0.0
    %952 = vmatpush.msra.mxu0 %v231
    %953 = vmatpush.msra.mxu0 %v230
    %954 = vmatpush.msra.mxu0 %v229
    %955 = vmatpush.msra.mxu0 %v228
    %956 = vmatmul.f32.gmra.mxu0 %v938
    %v957 = vpop.f32.mrf.mxu0
    %v958 = vadd.f32 0.0, %v957
    %959 = vdwg.mxu0
    %v961 = vsel %vm153, %v933, 0
    %963 = vmatpush.msra.mxu0 0.0
    %964 = vmatpush.msra.mxu0 0.0
    %965 = vmatpush.msra.mxu0 0.0
    %966 = vmatpush.msra.mxu0 0.0
    %967 = vmatpush.msra.mxu0 0.0
    %968 = vmatpush.msra.mxu0 0.0
    %969 = vmatpush.msra.mxu0 0.0
    %970 = vmatpush.msra.mxu0 0.0
    %971 = vmatpush.msra.mxu0 0.0
    %972 = vmatpush.msra.mxu0 0.0
    %973 = vmatpush.msra.mxu0 0.0
    %974 = vmatpush.msra.mxu0 0.0
    %975 = vmatpush.msra.mxu0 %v227
    %976 = vmatpush.msra.mxu0 %v226
    %977 = vmatpush.msra.mxu0 %v225
    %978 = vmatpush.msra.mxu0 %v224
    %979 = vmatmul.f32.gmra.mxu0 %v961
    %v980 = vpop.f32.mrf.mxu0
    %v981 = vadd.f32 %v958, %v980
    %982 = vdwg.mxu0
    %v983 = vadd.f32 %v981, %v246
    %v984 = vxor.u32 %v983, 2147483648
    %v985 = vmul.f32 %v984, 1.442695
    %v986 = vpow.pop %v985
    %v987 = vadd.f32 %v986, 1.0
    %v988 = vrcp.pop %v987
    %v989 = vmul.f32 %v987, %v988
    %v990 = vsub.f32 1.0, %v989
    %v991 = vmul.f32 %v988, %v990
    %v992 = vadd.f32 %v988, %v991
    %vm993 = vweird.f32 %v987
    %vm994 = vweird.f32 %v988
    %vm995 = vmor %vm993, %vm994
    %v996 = vsel %vm995, %v988, %v992
    %v997 = vand.u32 2147483647, %v987
    %vm998 = vcmp.eq.f32.partialorder %v997, 8.507059e+37
    %v999 = vand.u32 %v987, 2147483648
    %v1000 = vor.u32 1.1754944e-38, %v999
    %v1001 = vsel %vm998, %v1000, %v996
    %v1002 = vmul.f32 1.0, %v1001
    %v1003 = vtanh.pop %v983
    %v1004 = vmul.f32 %v1002, %v788
    %1006 = vrot.lane.b32.xlu0 %v1003, 64
    %v1007 = vpop.permute.xlu0 %1006
    %v1009 = vmul.f32 %v1002, %v1007
    %1011 = vrot.lane.b32.xlu0 %v1009, 32
    %v1012 = vpop.permute.xlu0 %1011
    %v1014 = vadd.f32 %v1004, %v1012
    %v1015 = vtanh.pop %v1014
    %1017 = vrot.lane.b32.xlu0 %v1015, 64
    %v1018 = vpop.permute.xlu0 %1017
    %v1020 = vmul.f32 %v1002, %v1018
    %v1021 = vmax.f32 %v1020, 0.0
    %1023 = vrot.lane.b32.xlu0 %v1021, 32
    %v1024 = vpop.permute.xlu0 %1023
    %v1025 = vsel %vm153, %v1024, 0
    %1027 = vmatpush.msra.mxu0 0.0
    %1028 = vmatpush.msra.mxu0 0.0
    %1029 = vmatpush.msra.mxu0 0.0
    %1030 = vmatpush.msra.mxu0 0.0
    %1031 = vmatpush.msra.mxu0 0.0
    %1032 = vmatpush.msra.mxu0 0.0
    %1033 = vmatpush.msra.mxu0 0.0
    %1034 = vmatpush.msra.mxu0 0.0
    %1035 = vmatpush.msra.mxu0 0.0
    %1036 = vmatpush.msra.mxu0 0.0
    %1037 = vmatpush.msra.mxu0 0.0
    %1038 = vmatpush.msra.mxu0 0.0
    %1039 = vmatpush.msra.mxu0 %v235
    %1040 = vmatpush.msra.mxu0 %v234
    %1041 = vmatpush.msra.mxu0 %v233
    %1042 = vmatpush.msra.mxu0 %v232
    %1043 = vmatmul.f32.gmra.mxu0 %v1025
    %v1044 = vpop.f32.mrf.mxu0
    %v1045 = vadd.f32 %v250, %v1044
    %1046 = vdwg.mxu0
    %v1047 = vmax.f32 %v1045, 0.0
    %v1049 = vsel %vm190, %v1047, 0
    %1051 = vmatpush.msra.mxu0 0.0
    %1052 = vmatpush.msra.mxu0 0.0
    %1053 = vmatpush.msra.mxu0 0.0
    %1054 = vmatpush.msra.mxu0 0.0
    %1055 = vmatpush.msra.mxu0 0.0
    %1056 = vmatpush.msra.mxu0 0.0
    %1057 = vmatpush.msra.mxu0 0.0
    %1058 = vmatpush.msra.mxu0 0.0
    %1059 = vmatpush.msra.mxu0 %v243
    %1060 = vmatpush.msra.mxu0 %v242
    %1061 = vmatpush.msra.mxu0 %v241
    %1062 = vmatpush.msra.mxu0 %v240
    %1063 = vmatpush.msra.mxu0 %v239
    %1064 = vmatpush.msra.mxu0 %v238
    %1065 = vmatpush.msra.mxu0 %v237
    %1066 = vmatpush.msra.mxu0 %v236
    %1067 = vmatmul.f32.gmra.mxu0 %v1049
    %v1068 = vpop.f32.mrf.mxu0
    %v1069 = vadd.f32 %v254, %v1068
    %1070 = vdwg.mxu0
    %v1071 = vsel %vm392, %v1069, -inf
    %1072 = vmax.xlane.f32.xlu0 %v1071
    %v1073 = vpop.xlane.xlu0 %1072
    %v1074 = vsub.f32 %v1069, %v1073
    %v1075 = vmul.f32 %v1074, 1.442695
    %v1076 = vpow.pop %v1075
    %v1077 = vsel %vm392, %v1076, 0.0
    %1078 = vadd.xlane.f32.xlu0 %v1077
    %v1079 = vpop.xlane.xlu0 %1078
    %v1080 = vlog2.pop %v1079
    %v1081 = vmul.f32 %v1080, 0.6931472
    %v1082 = vadd.f32 %v1081, %v1073
    %v1083 = vsub.f32 %v1069, %v1082
    %v1084 = vrcp.pop %v1079
    %v1085 = vmul.f32 %v1079, %v1084
    %v1086 = vsub.f32 1.0, %v1085
    %v1087 = vmul.f32 %v1084, %v1086
    %v1088 = vadd.f32 %v1084, %v1087
    %vm1089 = vweird.f32 %v1079
    %vm1090 = vweird.f32 %v1084
    %vm1091 = vmor %vm1089, %vm1090
    %v1092 = vsel %vm1091, %v1084, %v1088
    %v1093 = vand.u32 2147483647, %v1079
    %vm1094 = vcmp.eq.f32.partialorder %v1093, 8.507059e+37
    %v1095 = vand.u32 %v1079, 2147483648
    %v1096 = vor.u32 1.1754944e-38, %v1095
    %v1097 = vsel %vm1094, %v1096, %v1092
    %v1098 = vmul.f32 %v1076, %v1097
    %v1099 = vmul.f32 %v1098, %v1083
    %v1100 = vsel %vm392, %v1099, 0.0
    %1101 = vadd.xlane.f32.xlu0 %v1100
    %v1102 = vpop.xlane.xlu0 %1101
    %v1103 = vsub.f32 0.0, %v1102
    %s1104 = scalar_lea.vmem [#allocation2], 12
    %v1105 = vld [vmem:[%s1104] sm:$0xf]
    %v1106 = vadd.f32 %v1069, %v1105
    %v1107 = vsel %vm392, %v1106, -inf
    %1108 = vmax.xlane.f32.xlu0 %v1107
    %v1109 = vpop.xlane.xlu0 %1108
    %vm1110 = vcmp.ge.f32.partialorder %v1106, %v1109
    %v1111 = vsel %vm1110, %v257, 15
    %v1112 = vsel %vm392, %v1111, 2147483647
    %v1113 = vand.u32 %v1112, 65535
    %v1114 = vshra.s32 %v1112, 16
    %v1115 = vcvt.s32.f32 %v1113
    %v1116 = vcvt.s32.f32 %v1114
    %1117 = vmin.xlane.f32.xlu0 %v1116
    %v1118 = vpop.xlane.xlu0 %1117
    %vm1119 = vcmp.eq.f32.partialorder %v1116, %v1118
    %v1120 = vsel %vm1119, %v1115, inf
    %1121 = vmin.xlane.f32.xlu0 %v1120
    %v1122 = vpop.xlane.xlu0 %1121
    %v1123 = vcvt.f32.s32 %v1122
    %v1124 = vcvt.f32.s32 %v1118
    %v1125 = vshll.u32 %v1124, 16
    %v1126 = vadd.s32 %v1125, %v1123
    %vm1127 = vcmp.eq.s32.totalorder %v257, %v1126
    %v1128 = vsel %vm1127, 1, 0
    %v1129 = vcvt.s32.f32 %v1128
    %v1130 = vmul.f32 %v1083, %v1129
    %v1131 = vsel %vm392, %v1130, 0.0
    %1132 = vadd.xlane.f32.xlu0 %v1131
    %v1133 = vpop.xlane.xlu0 %1132
    %vm1134 = vcmp.eq.s32.totalorder %v257, 3
    %v1135 = vsel %vm1134, %v1126, %v909
    %v1136 = vsel %vm1134, %v1133, %v910
    %v1137 = vsel %vm1134, %v1103, %v911
    %v1139 = vsel %vm459, %v1129, 0
    %1141 = vmatpush.msra.mxu0 0.0
    %1142 = vmatpush.msra.mxu0 0.0
    %1143 = vmatpush.msra.mxu0 0.0
    %1144 = vmatpush.msra.mxu0 0.0
    %1145 = vmatpush.msra.mxu0 0.0
    %1146 = vmatpush.msra.mxu0 0.0
    %1147 = vmatpush.msra.mxu0 0.0
    %1148 = vmatpush.msra.mxu0 0.0
    %1149 = vmatpush.msra.mxu0 0.0
    %1150 = vmatpush.msra.mxu0 0.0
    %1151 = vmatpush.msra.mxu0 0.0
    %1152 = vmatpush.msra.mxu0 0.0
    %1153 = vmatpush.msra.mxu0 0.0
    %1154 = vmatpush.msra.mxu0 0.0
    %1155 = vmatpush.msra.mxu0 %v223
    %1156 = vmatpush.msra.mxu0 %v222
    %1157 = vmatmul.f32.gmra.mxu0 %v1139
    %v1158 = vpop.f32.mrf.mxu0
    %v1159 = vadd.f32 0.0, %v1158
    %1160 = vdwg.mxu0
    %1162 = vrot.lane.b32.xlu0 %v1020, 32
    %v1163 = vpop.permute.xlu0 %1162
    %v1164 = vsel %vm153, %v1163, 0
    %1166 = vmatpush.msra.mxu0 0.0
    %1167 = vmatpush.msra.mxu0 0.0
    %1168 = vmatpush.msra.mxu0 0.0
    %1169 = vmatpush.msra.mxu0 0.0
    %1170 = vmatpush.msra.mxu0 0.0
    %1171 = vmatpush.msra.mxu0 0.0
    %1172 = vmatpush.msra.mxu0 0.0
    %1173 = vmatpush.msra.mxu0 0.0
    %1174 = vmatpush.msra.mxu0 0.0
    %1175 = vmatpush.msra.mxu0 0.0
    %1176 = vmatpush.msra.mxu0 0.0
    %1177 = vmatpush.msra.mxu0 0.0
    %1178 = vmatpush.msra.mxu0 %v231
    %1179 = vmatpush.msra.mxu0 %v230
    %1180 = vmatpush.msra.mxu0 %v229
    %1181 = vmatpush.msra.mxu0 %v228
    %1182 = vmatmul.f32.gmra.mxu0 %v1164
    %v1183 = vpop.f32.mrf.mxu0
    %v1184 = vadd.f32 0.0, %v1183
    %1185 = vdwg.mxu0
    %v1187 = vsel %vm153, %v1159, 0
    %1189 = vmatpush.msra.mxu0 0.0
    %1190 = vmatpush.msra.mxu0 0.0
    %1191 = vmatpush.msra.mxu0 0.0
    %1192 = vmatpush.msra.mxu0 0.0
    %1193 = vmatpush.msra.mxu0 0.0
    %1194 = vmatpush.msra.mxu0 0.0
    %1195 = vmatpush.msra.mxu0 0.0
    %1196 = vmatpush.msra.mxu0 0.0
    %1197 = vmatpush.msra.mxu0 0.0
    %1198 = vmatpush.msra.mxu0 0.0
    %1199 = vmatpush.msra.mxu0 0.0
    %1200 = vmatpush.msra.mxu0 0.0
    %1201 = vmatpush.msra.mxu0 %v227
    %1202 = vmatpush.msra.mxu0 %v226
    %1203 = vmatpush.msra.mxu0 %v225
    %1204 = vmatpush.msra.mxu0 %v224
    %1205 = vmatmul.f32.gmra.mxu0 %v1187
    %v1206 = vpop.f32.mrf.mxu0
    %v1207 = vadd.f32 %v1184, %v1206
    %1208 = vdwg.mxu0
    %v1209 = vadd.f32 %v1207, %v246
    %v1210 = vxor.u32 %v1209, 2147483648
    %v1211 = vmul.f32 %v1210, 1.442695
    %v1212 = vpow.pop %v1211
    %v1213 = vadd.f32 %v1212, 1.0
    %v1214 = vrcp.pop %v1213
    %v1215 = vmul.f32 %v1213, %v1214
    %v1216 = vsub.f32 1.0, %v1215
    %v1217 = vmul.f32 %v1214, %v1216
    %v1218 = vadd.f32 %v1214, %v1217
    %vm1219 = vweird.f32 %v1213
    %vm1220 = vweird.f32 %v1214
    %vm1221 = vmor %vm1219, %vm1220
    %v1222 = vsel %vm1221, %v1214, %v1218
    %v1223 = vand.u32 2147483647, %v1213
    %vm1224 = vcmp.eq.f32.partialorder %v1223, 8.507059e+37
    %v1225 = vand.u32 %v1213, 2147483648
    %v1226 = vor.u32 1.1754944e-38, %v1225
    %v1227 = vsel %vm1224, %v1226, %v1222
    %v1228 = vmul.f32 1.0, %v1227
    %v1229 = vtanh.pop %v1209
    %v1230 = vmul.f32 %v1228, %v1014
    %1232 = vrot.lane.b32.xlu0 %v1229, 64
    %v1233 = vpop.permute.xlu0 %1232
    %v1235 = vmul.f32 %v1228, %v1233
    %1237 = vrot.lane.b32.xlu0 %v1235, 32
    %v1238 = vpop.permute.xlu0 %1237
    %v1240 = vadd.f32 %v1230, %v1238
    %v1241 = vtanh.pop %v1240
    %1243 = vrot.lane.b32.xlu0 %v1241, 64
    %v1244 = vpop.permute.xlu0 %1243
    %v1246 = vmul.f32 %v1228, %v1244
    %v1247 = vmax.f32 %v1246, 0.0
    %1249 = vrot.lane.b32.xlu0 %v1247, 32
    %v1250 = vpop.permute.xlu0 %1249
    %v1251 = vsel %vm153, %v1250, 0
    %1253 = vmatpush.msra.mxu0 0.0
    %1254 = vmatpush.msra.mxu0 0.0
    %1255 = vmatpush.msra.mxu0 0.0
    %1256 = vmatpush.msra.mxu0 0.0
    %1257 = vmatpush.msra.mxu0 0.0
    %1258 = vmatpush.msra.mxu0 0.0
    %1259 = vmatpush.msra.mxu0 0.0
    %1260 = vmatpush.msra.mxu0 0.0
    %1261 = vmatpush.msra.mxu0 0.0
    %1262 = vmatpush.msra.mxu0 0.0
    %1263 = vmatpush.msra.mxu0 0.0
    %1264 = vmatpush.msra.mxu0 0.0
    %1265 = vmatpush.msra.mxu0 %v235
    %1266 = vmatpush.msra.mxu0 %v234
    %1267 = vmatpush.msra.mxu0 %v233
    %1268 = vmatpush.msra.mxu0 %v232
    %1269 = vmatmul.f32.gmra.mxu0 %v1251
    %v1270 = vpop.f32.mrf.mxu0
    %v1271 = vadd.f32 %v250, %v1270
    %1272 = vdwg.mxu0
    %v1273 = vmax.f32 %v1271, 0.0
    %v1275 = vsel %vm190, %v1273, 0
    %1277 = vmatpush.msra.mxu0 0.0
    %1278 = vmatpush.msra.mxu0 0.0
    %1279 = vmatpush.msra.mxu0 0.0
    %1280 = vmatpush.msra.mxu0 0.0
    %1281 = vmatpush.msra.mxu0 0.0
    %1282 = vmatpush.msra.mxu0 0.0
    %1283 = vmatpush.msra.mxu0 0.0
    %1284 = vmatpush.msra.mxu0 0.0
    %1285 = vmatpush.msra.mxu0 %v243
    %1286 = vmatpush.msra.mxu0 %v242
    %1287 = vmatpush.msra.mxu0 %v241
    %1288 = vmatpush.msra.mxu0 %v240
    %1289 = vmatpush.msra.mxu0 %v239
    %1290 = vmatpush.msra.mxu0 %v238
    %1291 = vmatpush.msra.mxu0 %v237
    %1292 = vmatpush.msra.mxu0 %v236
    %1293 = vmatmul.f32.gmra.mxu0 %v1275
    %v1294 = vpop.f32.mrf.mxu0
    %v1295 = vadd.f32 %v254, %v1294
    %1296 = vdwg.mxu0
    %v1297 = vsel %vm392, %v1295, -inf
    %1298 = vmax.xlane.f32.xlu0 %v1297
    %v1299 = vpop.xlane.xlu0 %1298
    %v1300 = vsub.f32 %v1295, %v1299
    %v1301 = vmul.f32 %v1300, 1.442695
    %v1302 = vpow.pop %v1301
    %v1303 = vsel %vm392, %v1302, 0.0
    %1304 = vadd.xlane.f32.xlu0 %v1303
    %v1305 = vpop.xlane.xlu0 %1304
    %v1306 = vlog2.pop %v1305
    %v1307 = vmul.f32 %v1306, 0.6931472
    %v1308 = vadd.f32 %v1307, %v1299
    %v1309 = vsub.f32 %v1295, %v1308
    %v1310 = vrcp.pop %v1305
    %v1311 = vmul.f32 %v1305, %v1310
    %v1312 = vsub.f32 1.0, %v1311
    %v1313 = vmul.f32 %v1310, %v1312
    %v1314 = vadd.f32 %v1310, %v1313
    %vm1315 = vweird.f32 %v1305
    %vm1316 = vweird.f32 %v1310
    %vm1317 = vmor %vm1315, %vm1316
    %v1318 = vsel %vm1317, %v1310, %v1314
    %v1319 = vand.u32 2147483647, %v1305
    %vm1320 = vcmp.eq.f32.partialorder %v1319, 8.507059e+37
    %v1321 = vand.u32 %v1305, 2147483648
    %v1322 = vor.u32 1.1754944e-38, %v1321
    %v1323 = vsel %vm1320, %v1322, %v1318
    %v1324 = vmul.f32 %v1302, %v1323
    %v1325 = vmul.f32 %v1324, %v1309
    %v1326 = vsel %vm392, %v1325, 0.0
    %1327 = vadd.xlane.f32.xlu0 %v1326
    %v1328 = vpop.xlane.xlu0 %1327
    %v1329 = vsub.f32 0.0, %v1328
    %s1330 = scalar_lea.vmem [#allocation2], 16
    %v1331 = vld [vmem:[%s1330] sm:$0xf]
    %v1332 = vadd.f32 %v1295, %v1331
    %v1333 = vsel %vm392, %v1332, -inf
    %1334 = vmax.xlane.f32.xlu0 %v1333
    %v1335 = vpop.xlane.xlu0 %1334
    %vm1336 = vcmp.ge.f32.partialorder %v1332, %v1335
    %v1337 = vsel %vm1336, %v257, 15
    %v1338 = vsel %vm392, %v1337, 2147483647
    %v1339 = vand.u32 %v1338, 65535
    %v1340 = vshra.s32 %v1338, 16
    %v1341 = vcvt.s32.f32 %v1339
    %v1342 = vcvt.s32.f32 %v1340
    %1343 = vmin.xlane.f32.xlu0 %v1342
    %v1344 = vpop.xlane.xlu0 %1343
    %vm1345 = vcmp.eq.f32.partialorder %v1342, %v1344
    %v1346 = vsel %vm1345, %v1341, inf
    %1347 = vmin.xlane.f32.xlu0 %v1346
    %v1348 = vpop.xlane.xlu0 %1347
    %v1349 = vcvt.f32.s32 %v1348
    %v1350 = vcvt.f32.s32 %v1344
    %v1351 = vshll.u32 %v1350, 16
    %v1352 = vadd.s32 %v1351, %v1349
    %vm1353 = vcmp.eq.s32.totalorder %v257, %v1352
    %v1354 = vsel %vm1353, 1, 0
    %v1355 = vcvt.s32.f32 %v1354
    %v1356 = vmul.f32 %v1309, %v1355
    %v1357 = vsel %vm392, %v1356, 0.0
    %1358 = vadd.xlane.f32.xlu0 %v1357
    %v1359 = vpop.xlane.xlu0 %1358
    %vm1360 = vcmp.eq.s32.totalorder %v257, 4
    %v1361 = vsel %vm1360, %v1352, %v1135
    %v1362 = vsel %vm1360, %v1359, %v1136
    %v1363 = vsel %vm1360, %v1329, %v1137
    %v1365 = vsel %vm459, %v1355, 0
    %1367 = vmatpush.msra.mxu0 0.0
    %1368 = vmatpush.msra.mxu0 0.0
    %1369 = vmatpush.msra.mxu0 0.0
    %1370 = vmatpush.msra.mxu0 0.0
    %1371 = vmatpush.msra.mxu0 0.0
    %1372 = vmatpush.msra.mxu0 0.0
    %1373 = vmatpush.msra.mxu0 0.0
    %1374 = vmatpush.msra.mxu0 0.0
    %1375 = vmatpush.msra.mxu0 0.0
    %1376 = vmatpush.msra.mxu0 0.0
    %1377 = vmatpush.msra.mxu0 0.0
    %1378 = vmatpush.msra.mxu0 0.0
    %1379 = vmatpush.msra.mxu0 0.0
    %1380 = vmatpush.msra.mxu0 0.0
    %1381 = vmatpush.msra.mxu0 %v223
    %1382 = vmatpush.msra.mxu0 %v222
    %1383 = vmatmul.f32.gmra.mxu0 %v1365
    %v1384 = vpop.f32.mrf.mxu0
    %v1385 = vadd.f32 0.0, %v1384
    %1386 = vdwg.mxu0
    %1388 = vrot.lane.b32.xlu0 %v1246, 32
    %v1389 = vpop.permute.xlu0 %1388
    %v1390 = vsel %vm153, %v1389, 0
    %1392 = vmatpush.msra.mxu0 0.0
    %1393 = vmatpush.msra.mxu0 0.0
    %1394 = vmatpush.msra.mxu0 0.0
    %1395 = vmatpush.msra.mxu0 0.0
    %1396 = vmatpush.msra.mxu0 0.0
    %1397 = vmatpush.msra.mxu0 0.0
    %1398 = vmatpush.msra.mxu0 0.0
    %1399 = vmatpush.msra.mxu0 0.0
    %1400 = vmatpush.msra.mxu0 0.0
    %1401 = vmatpush.msra.mxu0 0.0
    %1402 = vmatpush.msra.mxu0 0.0
    %1403 = vmatpush.msra.mxu0 0.0
    %1404 = vmatpush.msra.mxu0 %v231
    %1405 = vmatpush.msra.mxu0 %v230
    %1406 = vmatpush.msra.mxu0 %v229
    %1407 = vmatpush.msra.mxu0 %v228
    %1408 = vmatmul.f32.gmra.mxu0 %v1390
    %v1409 = vpop.f32.mrf.mxu0
    %v1410 = vadd.f32 0.0, %v1409
    %1411 = vdwg.mxu0
    %v1413 = vsel %vm153, %v1385, 0
    %1415 = vmatpush.msra.mxu0 0.0
    %1416 = vmatpush.msra.mxu0 0.0
    %1417 = vmatpush.msra.mxu0 0.0
    %1418 = vmatpush.msra.mxu0 0.0
    %1419 = vmatpush.msra.mxu0 0.0
    %1420 = vmatpush.msra.mxu0 0.0
    %1421 = vmatpush.msra.mxu0 0.0
    %1422 = vmatpush.msra.mxu0 0.0
    %1423 = vmatpush.msra.mxu0 0.0
    %1424 = vmatpush.msra.mxu0 0.0
    %1425 = vmatpush.msra.mxu0 0.0
    %1426 = vmatpush.msra.mxu0 0.0
    %1427 = vmatpush.msra.mxu0 %v227
    %1428 = vmatpush.msra.mxu0 %v226
    %1429 = vmatpush.msra.mxu0 %v225
    %1430 = vmatpush.msra.mxu0 %v224
    %1431 = vmatmul.f32.gmra.mxu0 %v1413
    %v1432 = vpop.f32.mrf.mxu0
    %v1433 = vadd.f32 %v1410, %v1432
    %1434 = vdwg.mxu0
    %v1435 = vadd.f32 %v1433, %v246
    %v1436 = vxor.u32 %v1435, 2147483648
    %v1437 = vmul.f32 %v1436, 1.442695
    %v1438 = vpow.pop %v1437
    %v1439 = vadd.f32 %v1438, 1.0
    %v1440 = vrcp.pop %v1439
    %v1441 = vmul.f32 %v1439, %v1440
    %v1442 = vsub.f32 1.0, %v1441
    %v1443 = vmul.f32 %v1440, %v1442
    %v1444 = vadd.f32 %v1440, %v1443
    %vm1445 = vweird.f32 %v1439
    %vm1446 = vweird.f32 %v1440
    %vm1447 = vmor %vm1445, %vm1446
    %v1448 = vsel %vm1447, %v1440, %v1444
    %v1449 = vand.u32 2147483647, %v1439
    %vm1450 = vcmp.eq.f32.partialorder %v1449, 8.507059e+37
    %v1451 = vand.u32 %v1439, 2147483648
    %v1452 = vor.u32 1.1754944e-38, %v1451
    %v1453 = vsel %vm1450, %v1452, %v1448
    %v1454 = vmul.f32 1.0, %v1453
    %v1455 = vtanh.pop %v1435
    %v1456 = vmul.f32 %v1454, %v1240
    %1458 = vrot.lane.b32.xlu0 %v1455, 64
    %v1459 = vpop.permute.xlu0 %1458
    %v1461 = vmul.f32 %v1454, %v1459
    %1463 = vrot.lane.b32.xlu0 %v1461, 32
    %v1464 = vpop.permute.xlu0 %1463
    %v1466 = vadd.f32 %v1456, %v1464
    %v1467 = vtanh.pop %v1466
    %1469 = vrot.lane.b32.xlu0 %v1467, 64
    %v1470 = vpop.permute.xlu0 %1469
    %v1472 = vmul.f32 %v1454, %v1470
    %v1473 = vmax.f32 %v1472, 0.0
    %1475 = vrot.lane.b32.xlu0 %v1473, 32
    %v1476 = vpop.permute.xlu0 %1475
    %v1477 = vsel %vm153, %v1476, 0
    %1479 = vmatpush.msra.mxu0 0.0
    %1480 = vmatpush.msra.mxu0 0.0
    %1481 = vmatpush.msra.mxu0 0.0
    %1482 = vmatpush.msra.mxu0 0.0
    %1483 = vmatpush.msra.mxu0 0.0
    %1484 = vmatpush.msra.mxu0 0.0
    %1485 = vmatpush.msra.mxu0 0.0
    %1486 = vmatpush.msra.mxu0 0.0
    %1487 = vmatpush.msra.mxu0 0.0
    %1488 = vmatpush.msra.mxu0 0.0
    %1489 = vmatpush.msra.mxu0 0.0
    %1490 = vmatpush.msra.mxu0 0.0
    %1491 = vmatpush.msra.mxu0 %v235
    %1492 = vmatpush.msra.mxu0 %v234
    %1493 = vmatpush.msra.mxu0 %v233
    %1494 = vmatpush.msra.mxu0 %v232
    %1495 = vmatmul.f32.gmra.mxu0 %v1477
    %v1496 = vpop.f32.mrf.mxu0
    %v1497 = vadd.f32 %v250, %v1496
    %1498 = vdwg.mxu0
    %v1499 = vmax.f32 %v1497, 0.0
    %v1501 = vsel %vm190, %v1499, 0
    %1503 = vmatpush.msra.mxu0 0.0
    %1504 = vmatpush.msra.mxu0 0.0
    %1505 = vmatpush.msra.mxu0 0.0
    %1506 = vmatpush.msra.mxu0 0.0
    %1507 = vmatpush.msra.mxu0 0.0
    %1508 = vmatpush.msra.mxu0 0.0
    %1509 = vmatpush.msra.mxu0 0.0
    %1510 = vmatpush.msra.mxu0 0.0
    %1511 = vmatpush.msra.mxu0 %v243
    %1512 = vmatpush.msra.mxu0 %v242
    %1513 = vmatpush.msra.mxu0 %v241
    %1514 = vmatpush.msra.mxu0 %v240
    %1515 = vmatpush.msra.mxu0 %v239
    %1516 = vmatpush.msra.mxu0 %v238
    %1517 = vmatpush.msra.mxu0 %v237
    %1518 = vmatpush.msra.mxu0 %v236
    %1519 = vmatmul.f32.gmra.mxu0 %v1501
    %v1520 = vpop.f32.mrf.mxu0
    %v1521 = vadd.f32 %v254, %v1520
    %1522 = vdwg.mxu0
    %v1523 = vsel %vm392, %v1521, -inf
    %1524 = vmax.xlane.f32.xlu0 %v1523
    %v1525 = vpop.xlane.xlu0 %1524
    %v1526 = vsub.f32 %v1521, %v1525
    %v1527 = vmul.f32 %v1526, 1.442695
    %v1528 = vpow.pop %v1527
    %v1529 = vsel %vm392, %v1528, 0.0
    %1530 = vadd.xlane.f32.xlu0 %v1529
    %v1531 = vpop.xlane.xlu0 %1530
    %v1532 = vlog2.pop %v1531
    %v1533 = vmul.f32 %v1532, 0.6931472
    %v1534 = vadd.f32 %v1533, %v1525
    %v1535 = vsub.f32 %v1521, %v1534
    %v1536 = vrcp.pop %v1531
    %v1537 = vmul.f32 %v1531, %v1536
    %v1538 = vsub.f32 1.0, %v1537
    %v1539 = vmul.f32 %v1536, %v1538
    %v1540 = vadd.f32 %v1536, %v1539
    %vm1541 = vweird.f32 %v1531
    %vm1542 = vweird.f32 %v1536
    %vm1543 = vmor %vm1541, %vm1542
    %v1544 = vsel %vm1543, %v1536, %v1540
    %v1545 = vand.u32 2147483647, %v1531
    %vm1546 = vcmp.eq.f32.partialorder %v1545, 8.507059e+37
    %v1547 = vand.u32 %v1531, 2147483648
    %v1548 = vor.u32 1.1754944e-38, %v1547
    %v1549 = vsel %vm1546, %v1548, %v1544
    %v1550 = vmul.f32 %v1528, %v1549
    %v1551 = vmul.f32 %v1550, %v1535
    %v1552 = vsel %vm392, %v1551, 0.0
    %1553 = vadd.xlane.f32.xlu0 %v1552
    %v1554 = vpop.xlane.xlu0 %1553
    %v1555 = vsub.f32 0.0, %v1554
    %s1556 = scalar_lea.vmem [#allocation2], 20
    %v1557 = vld [vmem:[%s1556] sm:$0xf]
    %v1558 = vadd.f32 %v1521, %v1557
    %v1559 = vsel %vm392, %v1558, -inf
    %1560 = vmax.xlane.f32.xlu0 %v1559
    %v1561 = vpop.xlane.xlu0 %1560
    %vm1562 = vcmp.ge.f32.partialorder %v1558, %v1561
    %v1563 = vsel %vm1562, %v257, 15
    %v1564 = vsel %vm392, %v1563, 2147483647
    %v1565 = vand.u32 %v1564, 65535
    %v1566 = vshra.s32 %v1564, 16
    %v1567 = vcvt.s32.f32 %v1565
    %v1568 = vcvt.s32.f32 %v1566
    %1569 = vmin.xlane.f32.xlu0 %v1568
    %v1570 = vpop.xlane.xlu0 %1569
    %vm1571 = vcmp.eq.f32.partialorder %v1568, %v1570
    %v1572 = vsel %vm1571, %v1567, inf
    %1573 = vmin.xlane.f32.xlu0 %v1572
    %v1574 = vpop.xlane.xlu0 %1573
    %v1575 = vcvt.f32.s32 %v1574
    %v1576 = vcvt.f32.s32 %v1570
    %v1577 = vshll.u32 %v1576, 16
    %v1578 = vadd.s32 %v1577, %v1575
    %vm1579 = vcmp.eq.s32.totalorder %v257, %v1578
    %v1580 = vsel %vm1579, 1, 0
    %v1581 = vcvt.s32.f32 %v1580
    %v1582 = vmul.f32 %v1535, %v1581
    %v1583 = vsel %vm392, %v1582, 0.0
    %1584 = vadd.xlane.f32.xlu0 %v1583
    %v1585 = vpop.xlane.xlu0 %1584
    %vm1586 = vcmp.eq.s32.totalorder %v257, 5
    %v1587 = vsel %vm1586, %v1578, %v1361
    %v1588 = vsel %vm1586, %v1585, %v1362
    %v1589 = vsel %vm1586, %v1555, %v1363
    %v1591 = vsel %vm459, %v1581, 0
    %1593 = vmatpush.msra.mxu0 0.0
    %1594 = vmatpush.msra.mxu0 0.0
    %1595 = vmatpush.msra.mxu0 0.0
    %1596 = vmatpush.msra.mxu0 0.0
    %1597 = vmatpush.msra.mxu0 0.0
    %1598 = vmatpush.msra.mxu0 0.0
    %1599 = vmatpush.msra.mxu0 0.0
    %1600 = vmatpush.msra.mxu0 0.0
    %1601 = vmatpush.msra.mxu0 0.0
    %1602 = vmatpush.msra.mxu0 0.0
    %1603 = vmatpush.msra.mxu0 0.0
    %1604 = vmatpush.msra.mxu0 0.0
    %1605 = vmatpush.msra.mxu0 0.0
    %1606 = vmatpush.msra.mxu0 0.0
    %1607 = vmatpush.msra.mxu0 %v223
    %1608 = vmatpush.msra.mxu0 %v222
    %1609 = vmatmul.f32.gmra.mxu0 %v1591
    %v1610 = vpop.f32.mrf.mxu0
    %v1611 = vadd.f32 0.0, %v1610
    %1612 = vdwg.mxu0
    %1614 = vrot.lane.b32.xlu0 %v1472, 32
    %v1615 = vpop.permute.xlu0 %1614
    %v1616 = vsel %vm153, %v1615, 0
    %1618 = vmatpush.msra.mxu0 0.0
    %1619 = vmatpush.msra.mxu0 0.0
    %1620 = vmatpush.msra.mxu0 0.0
    %1621 = vmatpush.msra.mxu0 0.0
    %1622 = vmatpush.msra.mxu0 0.0
    %1623 = vmatpush.msra.mxu0 0.0
    %1624 = vmatpush.msra.mxu0 0.0
    %1625 = vmatpush.msra.mxu0 0.0
    %1626 = vmatpush.msra.mxu0 0.0
    %1627 = vmatpush.msra.mxu0 0.0
    %1628 = vmatpush.msra.mxu0 0.0
    %1629 = vmatpush.msra.mxu0 0.0
    %1630 = vmatpush.msra.mxu0 %v231
    %1631 = vmatpush.msra.mxu0 %v230
    %1632 = vmatpush.msra.mxu0 %v229
    %1633 = vmatpush.msra.mxu0 %v228
    %1634 = vmatmul.f32.gmra.mxu0 %v1616
    %v1635 = vpop.f32.mrf.mxu0
    %v1636 = vadd.f32 0.0, %v1635
    %1637 = vdwg.mxu0
    %v1639 = vsel %vm153, %v1611, 0
    %1641 = vmatpush.msra.mxu0 0.0
    %1642 = vmatpush.msra.mxu0 0.0
    %1643 = vmatpush.msra.mxu0 0.0
    %1644 = vmatpush.msra.mxu0 0.0
    %1645 = vmatpush.msra.mxu0 0.0
    %1646 = vmatpush.msra.mxu0 0.0
    %1647 = vmatpush.msra.mxu0 0.0
    %1648 = vmatpush.msra.mxu0 0.0
    %1649 = vmatpush.msra.mxu0 0.0
    %1650 = vmatpush.msra.mxu0 0.0
    %1651 = vmatpush.msra.mxu0 0.0
    %1652 = vmatpush.msra.mxu0 0.0
    %1653 = vmatpush.msra.mxu0 %v227
    %1654 = vmatpush.msra.mxu0 %v226
    %1655 = vmatpush.msra.mxu0 %v225
    %1656 = vmatpush.msra.mxu0 %v224
    %1657 = vmatmul.f32.gmra.mxu0 %v1639
    %v1658 = vpop.f32.mrf.mxu0
    %v1659 = vadd.f32 %v1636, %v1658
    %1660 = vdwg.mxu0
    %v1661 = vadd.f32 %v1659, %v246
    %v1662 = vxor.u32 %v1661, 2147483648
    %v1663 = vmul.f32 %v1662, 1.442695
    %v1664 = vpow.pop %v1663
    %v1665 = vadd.f32 %v1664, 1.0
    %v1666 = vrcp.pop %v1665
    %v1667 = vmul.f32 %v1665, %v1666
    %v1668 = vsub.f32 1.0, %v1667
    %v1669 = vmul.f32 %v1666, %v1668
    %v1670 = vadd.f32 %v1666, %v1669
    %vm1671 = vweird.f32 %v1665
    %vm1672 = vweird.f32 %v1666
    %vm1673 = vmor %vm1671, %vm1672
    %v1674 = vsel %vm1673, %v1666, %v1670
    %v1675 = vand.u32 2147483647, %v1665
    %vm1676 = vcmp.eq.f32.partialorder %v1675, 8.507059e+37
    %v1677 = vand.u32 %v1665, 2147483648
    %v1678 = vor.u32 1.1754944e-38, %v1677
    %v1679 = vsel %vm1676, %v1678, %v1674
    %v1680 = vmul.f32 1.0, %v1679
    %v1681 = vtanh.pop %v1661
    %v1682 = vmul.f32 %v1680, %v1466
    %1684 = vrot.lane.b32.xlu0 %v1681, 64
    %v1685 = vpop.permute.xlu0 %1684
    %v1687 = vmul.f32 %v1680, %v1685
    %1689 = vrot.lane.b32.xlu0 %v1687, 32
    %v1690 = vpop.permute.xlu0 %1689
    %v1692 = vadd.f32 %v1682, %v1690
    %v1693 = vtanh.pop %v1692
    %1695 = vrot.lane.b32.xlu0 %v1693, 64
    %v1696 = vpop.permute.xlu0 %1695
    %v1698 = vmul.f32 %v1680, %v1696
    %v1699 = vmax.f32 %v1698, 0.0
    %1701 = vrot.lane.b32.xlu0 %v1699, 32
    %v1702 = vpop.permute.xlu0 %1701
    %v1703 = vsel %vm153, %v1702, 0
    %1705 = vmatpush.msra.mxu0 0.0
    %1706 = vmatpush.msra.mxu0 0.0
    %1707 = vmatpush.msra.mxu0 0.0
    %1708 = vmatpush.msra.mxu0 0.0
    %1709 = vmatpush.msra.mxu0 0.0
    %1710 = vmatpush.msra.mxu0 0.0
    %1711 = vmatpush.msra.mxu0 0.0
    %1712 = vmatpush.msra.mxu0 0.0
    %1713 = vmatpush.msra.mxu0 0.0
    %1714 = vmatpush.msra.mxu0 0.0
    %1715 = vmatpush.msra.mxu0 0.0
    %1716 = vmatpush.msra.mxu0 0.0
    %1717 = vmatpush.msra.mxu0 %v235
    %1718 = vmatpush.msra.mxu0 %v234
    %1719 = vmatpush.msra.mxu0 %v233
    %1720 = vmatpush.msra.mxu0 %v232
    %1721 = vmatmul.f32.gmra.mxu0 %v1703
    %v1722 = vpop.f32.mrf.mxu0
    %v1723 = vadd.f32 %v250, %v1722
    %1724 = vdwg.mxu0
    %v1725 = vmax.f32 %v1723, 0.0
    %v1727 = vsel %vm190, %v1725, 0
    %1729 = vmatpush.msra.mxu0 0.0
    %1730 = vmatpush.msra.mxu0 0.0
    %1731 = vmatpush.msra.mxu0 0.0
    %1732 = vmatpush.msra.mxu0 0.0
    %1733 = vmatpush.msra.mxu0 0.0
    %1734 = vmatpush.msra.mxu0 0.0
    %1735 = vmatpush.msra.mxu0 0.0
    %1736 = vmatpush.msra.mxu0 0.0
    %1737 = vmatpush.msra.mxu0 %v243
    %1738 = vmatpush.msra.mxu0 %v242
    %1739 = vmatpush.msra.mxu0 %v241
    %1740 = vmatpush.msra.mxu0 %v240
    %1741 = vmatpush.msra.mxu0 %v239
    %1742 = vmatpush.msra.mxu0 %v238
    %1743 = vmatpush.msra.mxu0 %v237
    %1744 = vmatpush.msra.mxu0 %v236
    %1745 = vmatmul.f32.gmra.mxu0 %v1727
    %v1746 = vpop.f32.mrf.mxu0
    %v1747 = vadd.f32 %v254, %v1746
    %1748 = vdwg.mxu0
    %v1749 = vsel %vm392, %v1747, -inf
    %1750 = vmax.xlane.f32.xlu0 %v1749
    %v1751 = vpop.xlane.xlu0 %1750
    %v1752 = vsub.f32 %v1747, %v1751
    %v1753 = vmul.f32 %v1752, 1.442695
    %v1754 = vpow.pop %v1753
    %v1755 = vsel %vm392, %v1754, 0.0
    %1756 = vadd.xlane.f32.xlu0 %v1755
    %v1757 = vpop.xlane.xlu0 %1756
    %v1758 = vlog2.pop %v1757
    %v1759 = vmul.f32 %v1758, 0.6931472
    %v1760 = vadd.f32 %v1759, %v1751
    %v1761 = vsub.f32 %v1747, %v1760
    %v1762 = vrcp.pop %v1757
    %v1763 = vmul.f32 %v1757, %v1762
    %v1764 = vsub.f32 1.0, %v1763
    %v1765 = vmul.f32 %v1762, %v1764
    %v1766 = vadd.f32 %v1762, %v1765
    %vm1767 = vweird.f32 %v1757
    %vm1768 = vweird.f32 %v1762
    %vm1769 = vmor %vm1767, %vm1768
    %v1770 = vsel %vm1769, %v1762, %v1766
    %v1771 = vand.u32 2147483647, %v1757
    %vm1772 = vcmp.eq.f32.partialorder %v1771, 8.507059e+37
    %v1773 = vand.u32 %v1757, 2147483648
    %v1774 = vor.u32 1.1754944e-38, %v1773
    %v1775 = vsel %vm1772, %v1774, %v1770
    %v1776 = vmul.f32 %v1754, %v1775
    %v1777 = vmul.f32 %v1776, %v1761
    %v1778 = vsel %vm392, %v1777, 0.0
    %1779 = vadd.xlane.f32.xlu0 %v1778
    %v1780 = vpop.xlane.xlu0 %1779
    %v1781 = vsub.f32 0.0, %v1780
    %s1782 = scalar_lea.vmem [#allocation2], 24
    %v1783 = vld [vmem:[%s1782] sm:$0xf]
    %v1784 = vadd.f32 %v1747, %v1783
    %v1785 = vsel %vm392, %v1784, -inf
    %1786 = vmax.xlane.f32.xlu0 %v1785
    %v1787 = vpop.xlane.xlu0 %1786
    %vm1788 = vcmp.ge.f32.partialorder %v1784, %v1787
    %v1789 = vsel %vm1788, %v257, 15
    %v1790 = vsel %vm392, %v1789, 2147483647
    %v1791 = vand.u32 %v1790, 65535
    %v1792 = vshra.s32 %v1790, 16
    %v1793 = vcvt.s32.f32 %v1791
    %v1794 = vcvt.s32.f32 %v1792
    %1795 = vmin.xlane.f32.xlu0 %v1794
    %v1796 = vpop.xlane.xlu0 %1795
    %vm1797 = vcmp.eq.f32.partialorder %v1794, %v1796
    %v1798 = vsel %vm1797, %v1793, inf
    %1799 = vmin.xlane.f32.xlu0 %v1798
    %v1800 = vpop.xlane.xlu0 %1799
    %v1801 = vcvt.f32.s32 %v1800
    %v1802 = vcvt.f32.s32 %v1796
    %v1803 = vshll.u32 %v1802, 16
    %v1804 = vadd.s32 %v1803, %v1801
    %vm1805 = vcmp.eq.s32.totalorder %v257, %v1804
    %v1806 = vsel %vm1805, 1, 0
    %v1807 = vcvt.s32.f32 %v1806
    %v1808 = vmul.f32 %v1761, %v1807
    %v1809 = vsel %vm392, %v1808, 0.0
    %1810 = vadd.xlane.f32.xlu0 %v1809
    %v1811 = vpop.xlane.xlu0 %1810
    %vm1812 = vcmp.eq.s32.totalorder %v257, 6
    %v1813 = vsel %vm1812, %v1804, %v1587
    %v1814 = vsel %vm1812, %v1811, %v1588
    %v1815 = vsel %vm1812, %v1781, %v1589
    %v1817 = vsel %vm459, %v1807, 0
    %1819 = vmatpush.msra.mxu0 0.0
    %1820 = vmatpush.msra.mxu0 0.0
    %1821 = vmatpush.msra.mxu0 0.0
    %1822 = vmatpush.msra.mxu0 0.0
    %1823 = vmatpush.msra.mxu0 0.0
    %1824 = vmatpush.msra.mxu0 0.0
    %1825 = vmatpush.msra.mxu0 0.0
    %1826 = vmatpush.msra.mxu0 0.0
    %1827 = vmatpush.msra.mxu0 0.0
    %1828 = vmatpush.msra.mxu0 0.0
    %1829 = vmatpush.msra.mxu0 0.0
    %1830 = vmatpush.msra.mxu0 0.0
    %1831 = vmatpush.msra.mxu0 0.0
    %1832 = vmatpush.msra.mxu0 0.0
    %1833 = vmatpush.msra.mxu0 %v223
    %1834 = vmatpush.msra.mxu0 %v222
    %1835 = vmatmul.f32.gmra.mxu0 %v1817
    %v1836 = vpop.f32.mrf.mxu0
    %v1837 = vadd.f32 0.0, %v1836
    %1838 = vdwg.mxu0
    %1840 = vrot.lane.b32.xlu0 %v1698, 32
    %v1841 = vpop.permute.xlu0 %1840
    %v1842 = vsel %vm153, %v1841, 0
    %1844 = vmatpush.msra.mxu0 0.0
    %1845 = vmatpush.msra.mxu0 0.0
    %1846 = vmatpush.msra.mxu0 0.0
    %1847 = vmatpush.msra.mxu0 0.0
    %1848 = vmatpush.msra.mxu0 0.0
    %1849 = vmatpush.msra.mxu0 0.0
    %1850 = vmatpush.msra.mxu0 0.0
    %1851 = vmatpush.msra.mxu0 0.0
    %1852 = vmatpush.msra.mxu0 0.0
    %1853 = vmatpush.msra.mxu0 0.0
    %1854 = vmatpush.msra.mxu0 0.0
    %1855 = vmatpush.msra.mxu0 0.0
    %1856 = vmatpush.msra.mxu0 %v231
    %1857 = vmatpush.msra.mxu0 %v230
    %1858 = vmatpush.msra.mxu0 %v229
    %1859 = vmatpush.msra.mxu0 %v228
    %1860 = vmatmul.f32.gmra.mxu0 %v1842
    %v1861 = vpop.f32.mrf.mxu0
    %v1862 = vadd.f32 0.0, %v1861
    %1863 = vdwg.mxu0
    %v1865 = vsel %vm153, %v1837, 0
    %1867 = vmatpush.msra.mxu0 0.0
    %1868 = vmatpush.msra.mxu0 0.0
    %1869 = vmatpush.msra.mxu0 0.0
    %1870 = vmatpush.msra.mxu0 0.0
    %1871 = vmatpush.msra.mxu0 0.0
    %1872 = vmatpush.msra.mxu0 0.0
    %1873 = vmatpush.msra.mxu0 0.0
    %1874 = vmatpush.msra.mxu0 0.0
    %1875 = vmatpush.msra.mxu0 0.0
    %1876 = vmatpush.msra.mxu0 0.0
    %1877 = vmatpush.msra.mxu0 0.0
    %1878 = vmatpush.msra.mxu0 0.0
    %1879 = vmatpush.msra.mxu0 %v227
    %1880 = vmatpush.msra.mxu0 %v226
    %1881 = vmatpush.msra.mxu0 %v225
    %1882 = vmatpush.msra.mxu0 %v224
    %1883 = vmatmul.f32.gmra.mxu0 %v1865
    %v1884 = vpop.f32.mrf.mxu0
    %v1885 = vadd.f32 %v1862, %v1884
    %1886 = vdwg.mxu0
    %v1887 = vadd.f32 %v1885, %v246
    %v1888 = vxor.u32 %v1887, 2147483648
    %v1889 = vmul.f32 %v1888, 1.442695
    %v1890 = vpow.pop %v1889
    %v1891 = vadd.f32 %v1890, 1.0
    %v1892 = vrcp.pop %v1891
    %v1893 = vmul.f32 %v1891, %v1892
    %v1894 = vsub.f32 1.0, %v1893
    %v1895 = vmul.f32 %v1892, %v1894
    %v1896 = vadd.f32 %v1892, %v1895
    %vm1897 = vweird.f32 %v1891
    %vm1898 = vweird.f32 %v1892
    %vm1899 = vmor %vm1897, %vm1898
    %v1900 = vsel %vm1899, %v1892, %v1896
    %v1901 = vand.u32 2147483647, %v1891
    %vm1902 = vcmp.eq.f32.partialorder %v1901, 8.507059e+37
    %v1903 = vand.u32 %v1891, 2147483648
    %v1904 = vor.u32 1.1754944e-38, %v1903
    %v1905 = vsel %vm1902, %v1904, %v1900
    %v1906 = vmul.f32 1.0, %v1905
    %v1907 = vtanh.pop %v1887
    %v1908 = vmul.f32 %v1906, %v1692
    %1910 = vrot.lane.b32.xlu0 %v1907, 64
    %v1911 = vpop.permute.xlu0 %1910
    %v1913 = vmul.f32 %v1906, %v1911
    %1915 = vrot.lane.b32.xlu0 %v1913, 32
    %v1916 = vpop.permute.xlu0 %1915
    %v1918 = vadd.f32 %v1908, %v1916
    %v1919 = vtanh.pop %v1918
    %1921 = vrot.lane.b32.xlu0 %v1919, 64
    %v1922 = vpop.permute.xlu0 %1921
    %v1924 = vmul.f32 %v1906, %v1922
    %v1925 = vmax.f32 %v1924, 0.0
    %1927 = vrot.lane.b32.xlu0 %v1925, 32
    %v1928 = vpop.permute.xlu0 %1927
    %v1929 = vsel %vm153, %v1928, 0
    %1931 = vmatpush.msra.mxu0 0.0
    %1932 = vmatpush.msra.mxu0 0.0
    %1933 = vmatpush.msra.mxu0 0.0
    %1934 = vmatpush.msra.mxu0 0.0
    %1935 = vmatpush.msra.mxu0 0.0
    %1936 = vmatpush.msra.mxu0 0.0
    %1937 = vmatpush.msra.mxu0 0.0
    %1938 = vmatpush.msra.mxu0 0.0
    %1939 = vmatpush.msra.mxu0 0.0
    %1940 = vmatpush.msra.mxu0 0.0
    %1941 = vmatpush.msra.mxu0 0.0
    %1942 = vmatpush.msra.mxu0 0.0
    %1943 = vmatpush.msra.mxu0 %v235
    %1944 = vmatpush.msra.mxu0 %v234
    %1945 = vmatpush.msra.mxu0 %v233
    %1946 = vmatpush.msra.mxu0 %v232
    %1947 = vmatmul.f32.gmra.mxu0 %v1929
    %v1948 = vpop.f32.mrf.mxu0
    %v1949 = vadd.f32 %v250, %v1948
    %1950 = vdwg.mxu0
    %v1951 = vmax.f32 %v1949, 0.0
    %v1953 = vsel %vm190, %v1951, 0
    %1955 = vmatpush.msra.mxu0 0.0
    %1956 = vmatpush.msra.mxu0 0.0
    %1957 = vmatpush.msra.mxu0 0.0
    %1958 = vmatpush.msra.mxu0 0.0
    %1959 = vmatpush.msra.mxu0 0.0
    %1960 = vmatpush.msra.mxu0 0.0
    %1961 = vmatpush.msra.mxu0 0.0
    %1962 = vmatpush.msra.mxu0 0.0
    %1963 = vmatpush.msra.mxu0 %v243
    %1964 = vmatpush.msra.mxu0 %v242
    %1965 = vmatpush.msra.mxu0 %v241
    %1966 = vmatpush.msra.mxu0 %v240
    %1967 = vmatpush.msra.mxu0 %v239
    %1968 = vmatpush.msra.mxu0 %v238
    %1969 = vmatpush.msra.mxu0 %v237
    %1970 = vmatpush.msra.mxu0 %v236
    %1971 = vmatmul.f32.gmra.mxu0 %v1953
    %v1972 = vpop.f32.mrf.mxu0
    %v1973 = vadd.f32 %v254, %v1972
    %1974 = vdwg.mxu0
    %v1975 = vsel %vm392, %v1973, -inf
    %1976 = vmax.xlane.f32.xlu0 %v1975
    %v1977 = vpop.xlane.xlu0 %1976
    %v1978 = vsub.f32 %v1973, %v1977
    %v1979 = vmul.f32 %v1978, 1.442695
    %v1980 = vpow.pop %v1979
    %v1981 = vsel %vm392, %v1980, 0.0
    %1982 = vadd.xlane.f32.xlu0 %v1981
    %v1983 = vpop.xlane.xlu0 %1982
    %v1984 = vlog2.pop %v1983
    %v1985 = vmul.f32 %v1984, 0.6931472
    %v1986 = vadd.f32 %v1985, %v1977
    %v1987 = vsub.f32 %v1973, %v1986
    %v1988 = vrcp.pop %v1983
    %v1989 = vmul.f32 %v1983, %v1988
    %v1990 = vsub.f32 1.0, %v1989
    %v1991 = vmul.f32 %v1988, %v1990
    %v1992 = vadd.f32 %v1988, %v1991
    %vm1993 = vweird.f32 %v1983
    %vm1994 = vweird.f32 %v1988
    %vm1995 = vmor %vm1993, %vm1994
    %v1996 = vsel %vm1995, %v1988, %v1992
    %v1997 = vand.u32 2147483647, %v1983
    %vm1998 = vcmp.eq.f32.partialorder %v1997, 8.507059e+37
    %v1999 = vand.u32 %v1983, 2147483648
    %v2000 = vor.u32 1.1754944e-38, %v1999
    %v2001 = vsel %vm1998, %v2000, %v1996
    %v2002 = vmul.f32 %v1980, %v2001
    %v2003 = vmul.f32 %v2002, %v1987
    %v2004 = vsel %vm392, %v2003, 0.0
    %2005 = vadd.xlane.f32.xlu0 %v2004
    %v2006 = vpop.xlane.xlu0 %2005
    %v2007 = vsub.f32 0.0, %v2006
    %s2008 = scalar_lea.vmem [#allocation2], 28
    %v2009 = vld [vmem:[%s2008] sm:$0xf]
    %v2010 = vadd.f32 %v1973, %v2009
    %v2011 = vsel %vm392, %v2010, -inf
    %2012 = vmax.xlane.f32.xlu0 %v2011
    %v2013 = vpop.xlane.xlu0 %2012
    %vm2014 = vcmp.ge.f32.partialorder %v2010, %v2013
    %v2015 = vsel %vm2014, %v257, 15
    %v2016 = vsel %vm392, %v2015, 2147483647
    %v2017 = vand.u32 %v2016, 65535
    %v2018 = vshra.s32 %v2016, 16
    %v2019 = vcvt.s32.f32 %v2017
    %v2020 = vcvt.s32.f32 %v2018
    %2021 = vmin.xlane.f32.xlu0 %v2020
    %v2022 = vpop.xlane.xlu0 %2021
    %vm2023 = vcmp.eq.f32.partialorder %v2020, %v2022
    %v2024 = vsel %vm2023, %v2019, inf
    %2025 = vmin.xlane.f32.xlu0 %v2024
    %v2026 = vpop.xlane.xlu0 %2025
    %v2027 = vcvt.f32.s32 %v2026
    %v2028 = vcvt.f32.s32 %v2022
    %v2029 = vshll.u32 %v2028, 16
    %v2030 = vadd.s32 %v2029, %v2027
    %vm2031 = vcmp.eq.s32.totalorder %v257, %v2030
    %v2032 = vsel %vm2031, 1, 0
    %v2033 = vcvt.s32.f32 %v2032
    %v2034 = vmul.f32 %v1987, %v2033
    %v2035 = vsel %vm392, %v2034, 0.0
    %2036 = vadd.xlane.f32.xlu0 %v2035
    %v2037 = vpop.xlane.xlu0 %2036
    %vm2038 = vcmp.eq.s32.totalorder %v257, 7
    %v2039 = vsel %vm2038, %v2030, %v1813
    %v2040 = vsel %vm2038, %v2037, %v1814
    %v2041 = vsel %vm2038, %v2007, %v1815
    %vm2042 = vcmask 60416
    %2043 = vst.msk [vmem:[#allocation13] sm:$0xf] %vm2042, %v2039
    %2044 = vst.msk [vmem:[#allocation14] sm:$0xf] %vm2042, %v2040
    %2045 = vst.msk [vmem:[#allocation16] sm:$0xf] %vm2042, %v2041
    // Predicated region
    $region82: #{tpu_custom_call.1} parent=1 // pred_check
      _
    $region83: #{tpu_custom_call.1} parent=1 // pred_check_branch
      %2047 = sbr.rel (0) target = $region85
    $region84: #{tpu_custom_call.1} parent=1 // pred_region
      %2049 = vsyncadd [#allocation4], 0
      %s2051 = sshll.u32 [#allocation13], 4
      %s2052 = int_to_ptr.vmem [resolvable:$true] %s2051
      %s2053 = sshll.u32 %s14, 4
      %s2054 = int_to_ptr.hbm [resolvable:$true] %s2053
      %2056 = dma.vmem_to_hbm [thread:$0]  %s2052, 64, %s2054, [#allocation4]
    $region85: #{tpu_custom_call.1} parent=1 // pred_fallthru
      _
    // Predicated region
    $region86: #{tpu_custom_call.1} parent=1 // pred_check
      _
    $region87: #{tpu_custom_call.1} parent=1 // pred_check_branch
      %2058 = sbr.rel (0) target = $region89
    $region88: #{tpu_custom_call.1} parent=1 // pred_region
      %2060 = vsyncadd [#allocation15], 0
      %s2062 = sshll.u32 [#allocation14], 4
      %s2063 = int_to_ptr.vmem [resolvable:$true] %s2062
      %s2064 = sshll.u32 %s15, 4
      %s2065 = int_to_ptr.hbm [resolvable:$true] %s2064
      %2067 = dma.vmem_to_hbm [thread:$0]  %s2063, 64, %s2065, [#allocation15]
    $region89: #{tpu_custom_call.1} parent=1 // pred_fallthru
      _
    // Predicated region
    $region90: #{tpu_custom_call.1} parent=1 // pred_check
      _
    $region91: #{tpu_custom_call.1} parent=1 // pred_check_branch
      %2069 = sbr.rel (0) target = $region93
    $region92: #{tpu_custom_call.1} parent=1 // pred_region
      %2071 = vsyncadd [#allocation15], 0
      %s2073 = sshll.u32 [#allocation16], 4
      %s2074 = int_to_ptr.vmem [resolvable:$true] %s2073
      %s2075 = sshll.u32 %s16, 4
      %s2076 = int_to_ptr.hbm [resolvable:$true] %s2075
      %2078 = dma.vmem_to_hbm [thread:$0]  %s2074, 64, %s2076, [#allocation15]
    $region93: #{tpu_custom_call.1} parent=1 // pred_fallthru
      _
    // Predicated region
    $region94: #{tpu_custom_call.1} parent=1 // pred_check
      _
    $region95: #{tpu_custom_call.1} parent=1 // pred_check_branch
      %2080 = sbr.rel (0) target = $region97
    $region96: #{tpu_custom_call.1} parent=1 // pred_region
      %2082 = dma.done [#allocation4], 64
    $region97: #{tpu_custom_call.1} parent=1 // pred_fallthru
      _
    // Predicated region
    $region98: #{tpu_custom_call.1} parent=1 // pred_check
      _
    $region99: #{tpu_custom_call.1} parent=1 // pred_check_branch
      %2084 = sbr.rel (0) target = $region101
    $region100: #{tpu_custom_call.1} parent=1 // pred_region
      %2086 = dma.done [#allocation15], 64
    $region101: #{tpu_custom_call.1} parent=1 // pred_fallthru
      _
    // Predicated region
    $region102: #{tpu_custom_call.1} parent=1 // pred_check
      _
    $region103: #{tpu_custom_call.1} parent=1 // pred_check_branch
      %2088 = sbr.rel (0) target = $region105
    $region104: #{tpu_custom_call.1} parent=1 // pred_region
      %2090 = dma.done [#allocation15], 64
    $region105: #{tpu_custom_call.1} parent=1 // pred_fallthru
      _
    %2091 = vsyncpa [#allocation3], 1
    %2092 = vsyncpa [#allocation6], 1
    %2093 = vsyncpa [#allocation9], 1
    %2094 = vsyncpa [#allocation12], 1
    %2095 = vsyncpa [#allocation4], 1
    %2096 = vsyncpa [#allocation15], 1

</llo_original>
